<compile_context>
chip_gen: v7x
topology: tpu7x:2x2x1
jax: 0.10.0
libtpu: 0.0.40
codegen_flags: <defaults>
</compile_context>

<pallas_src>
import math

import jax
import jax.numpy as jnp
from jax.experimental import pallas as pl
from jax.experimental.pallas import tpu as pltpu

# ---------------- model config (small, consistent with the module) -------------
IMAGE_SIZE = 8
PATCH = 4
CHANNELS = 3
NUM_CLASSES = 10
D_MODEL = 32
HIDDEN_DIM = 64
KERNEL_SIZE = 3
FEATURE_DIM = 4
NUM_HEADS = 4
NUM_KV_HEADS = 4                      # kept equal to NUM_HEADS (Based broadcast)
N_LAYERS = 2
HEAD_DIM = D_MODEL // NUM_KV_HEADS    # 8
EPS_BASED = 1e-12
LN_EPS = 1e-5                         # nn.LayerNorm default

NUM_PATCHES = (IMAGE_SIZE // PATCH) ** 2              # 16
SEQ_LEN = NUM_PATCHES + 1                             # 17 (cls appended last)
PATCH_DIM = PATCH * PATCH * 5 * CHANNELS              # 240 (SPT: 5 shifted copies)
QKV_DIM = 2 * NUM_HEADS * FEATURE_DIM + NUM_KV_HEADS * HEAD_DIM   # 16+16+32 = 64


# ============================ in-kernel helpers =================================

def _ln(x, g, b):
    """LayerNorm over the last axis (f32)."""
    mu = jnp.mean(x, axis=-1, keepdims=True)
    xc = x - mu
    var = jnp.mean(xc * xc, axis=-1, keepdims=True)
    return xc * jax.lax.rsqrt(var + LN_EPS) * g + b


def _mm(x, w_bf16):
    """MXU matmul: bf16 operands, f32 accumulation."""
    return jnp.dot(x.astype(jnp.bfloat16), w_bf16,
                   preferred_element_type=jnp.float32)


def _erf(x):
    # Abramowitz & Stegun 7.1.26 rational approximation (max abs err ~1.5e-7),
    # built from exp + VPU ops so it lowers on every TPU generation.
    # TODO(synk): switch to lax.erf if a native Mosaic erf lowering is confirmed.
    a1, a2, a3, a4, a5 = 0.254829592, -0.284496736, 1.421413741, -1.453152027, 1.061405429
    p = 0.3275911
    ax = jnp.abs(x)
    t = 1.0 / (1.0 + p * ax)
    poly = ((((a5 * t + a4) * t + a3) * t + a2) * t + a1) * t
    y = 1.0 - poly * jnp.exp(-(ax * ax))
    return jnp.where(x < 0, -y, y)


def _gelu_exact(x):
    """Exact (erf-based) GELU, matching nn.GELU()'s default."""
    return 0.5 * x * (1.0 + _erf(x * (1.0 / math.sqrt(2.0))))


# ============================ the fused kernel ==================================

def _vibased_kernel(tok_ref, spt_g_ref, spt_b_ref, spt_w_ref, spt_bias_ref,
                    cls_ref, pos_ref,
                    ln_g_ref, ln_b_ref, conv_w_ref, conv_b_ref,
                    proj_w_ref, proj_b_ref, wqkv_ref, wo_ref,
                    ff1_w_ref, ff1_b_ref, ff2_w_ref, ff2_b_ref,
                    hln_g_ref, hln_b_ref, head_w_ref, head_b_ref,
                    out_ref):
    L = SEQ_LEN
    D = D_MODEL
    H = NUM_HEADS
    Fd = FEATURE_DIM
    Dv = HEAD_DIM
    K = KERNEL_SIZE
    inv_sqrt_fd = 1.0 / math.sqrt(Fd)
    k_off = H * Fd
    v_off = 2 * H * Fd

    # ---- shifted-patch embedding: LN over patch_dim, then linear ----
    tok = tok_ref[0]                                              # (n, patch_dim)
    xe = _ln(tok, spt_g_ref[...], spt_b_ref[...])
    xe = _mm(xe, spt_w_ref[...]) + spt_bias_ref[...]              # (n, D)

    # cls token appended LAST (as in the module), then positional embedding
    x = jnp.concatenate([xe, cls_ref[...]], axis=0) + pos_ref[...]   # (L, D)

    # ---- transformer blocks (statically unrolled) ----
    for layer in range(N_LAYERS):
        y = _ln(x, ln_g_ref[layer], ln_b_ref[layer])

        # BaseConv: u_conv * u_proj + u  (depthwise causal short conv + gate).
        # One zero-padded copy, then K static row slices (tap j multiplies
        # torch weight[:, 0, j], i.e. input shifted by K-1-j).
        u = y
        cw = conv_w_ref[layer]                                    # (K, D)
        cb = conv_b_ref[layer]                                    # (1, D)
        up = jnp.concatenate(
            [jnp.zeros((K - 1, D), jnp.float32), u], axis=0)      # (L+K-1, D)
        u_conv = cb + up[0:L, :] * cw[0:1, :]
        for j in range(1, K):
            u_conv = u_conv + up[j:j + L, :] * cw[j:j + 1, :]
        u_proj = _mm(u, proj_w_ref[layer]) + proj_b_ref[layer]
        y = u_conv * u_proj + u

        # Based linear attention (taylor_exp feature map, causal=False):
        # phi(q).phi(k) = 1 + a + a^2/2 with a = (q.k)/sqrt(feature_dim), so the
        # explicit feature expansion folds exactly into w = 1 + a + a^2/2.
        qkv = _mm(y, wqkv_ref[layer])                             # (L, 2*H*Fd + H*Dv)
        wo = wo_ref[layer]                                        # (H*Dv, D) bf16
        y_att = jnp.zeros((L, D), jnp.float32)
        for h in range(H):                                        # static lane slices
            qh = qkv[:, h * Fd:(h + 1) * Fd]                      # (L, Fd)
            kh = qkv[:, k_off + h * Fd:k_off + (h + 1) * Fd]      # (L, Fd)
            vh = qkv[:, v_off + h * Dv:v_off + (h + 1) * Dv]      # (L, Dv)
            a = jax.lax.dot_general(qh, kh, (((1,), (1,)), ((), ())),
                                    preferred_element_type=jnp.float32) * inv_sqrt_fd
            w = 1.0 + a + 0.5 * a * a                             # (L, L), >= 0.5
            num = jnp.dot(w, vh, preferred_element_type=jnp.float32)   # (L, Dv)
            den = jnp.sum(w, axis=-1, keepdims=True) + EPS_BASED
            oh = num / den
            # fold the 'b h l d -> b l (h d)' concat straight into proj_o
            y_att = y_att + _mm(oh, wo[h * Dv:(h + 1) * Dv, :])
        y = y_att

        # FeedForward with exact (erf) GELU on the EUP
        hdn = _mm(y, ff1_w_ref[layer]) + ff1_b_ref[layer]
        hdn = _gelu_exact(hdn)
        y = _mm(hdn, ff2_w_ref[layer]) + ff2_b_ref[layer]

        x = x + y                                                 # single block residual

    # ---- cls pooling (last token), final LN, classifier head ----
    xc = x[L - 1:L, :]                                            # (1, D)
    xc = _ln(xc, hln_g_ref[...], hln_b_ref[...])
    logits = _mm(xc, head_w_ref[...]) + head_b_ref[...]           # (1, num_classes)
    out_ref[0] = logits


# ================================ plain-JAX glue ================================

def spt_shift_concat(img):
    """SPT shifted-patch tokenization (shift/pad/concat/rearrange glue)."""
    B, C, H, W = img.shape
    shift_w_right = jnp.pad(img, ((0, 0), (0, 0), (0, 0), (1, 0)))[..., :W]
    shift_w_left = jnp.pad(img, ((0, 0), (0, 0), (0, 0), (0, 1)))[..., 1:]
    shift_h_down = jnp.pad(img, ((0, 0), (0, 0), (1, 0), (0, 0)))[..., :H, :]
    shift_h_up = jnp.pad(img, ((0, 0), (0, 0), (0, 1), (0, 0)))[..., 1:, :]
    xc = jnp.concatenate([img, shift_w_right, shift_w_left, shift_h_down, shift_h_up],
                         axis=1)                                  # (B, 5C, H, W)
    C5 = xc.shape[1]
    hh, ww = H // PATCH, W // PATCH
    # 'b c (h p1) (w p2) -> b (h w) (p1 p2 c)'
    x = xc.reshape(B, C5, hh, PATCH, ww, PATCH)
    x = x.transpose(0, 2, 4, 3, 5, 1)
    return x.reshape(B, hh * ww, PATCH * PATCH * C5)


def vibased_forward(img, params):
    B = img.shape[0]
    tok = spt_shift_concat(img).astype(jnp.float32)               # (B, n, patch_dim)

    blk = params['blocks']
    f32, bf16 = jnp.float32, jnp.bfloat16

    def row(v):                                                   # (N,) -> (1, N)
        return v.reshape(1, -1).astype(f32)

    def rows(name):                                               # -> (NL, 1, N)
        return jnp.stack([blk[i][name].reshape(1, -1) for i in range(N_LAYERS)],
                         axis=0).astype(f32)

    def mats(name, dtype=bf16):                                   # -> (NL, X, Y)
        return jnp.stack([blk[i][name] for i in range(N_LAYERS)], axis=0).astype(dtype)

    # merged q/k/v projection: one (D, 2*H*Fd + H*Dv) matmul per layer
    wqkv = jnp.stack(
        [jnp.concatenate([blk[i]['wq'], blk[i]['wk'], blk[i]['wv']], axis=1)
         for i in range(N_LAYERS)], axis=0).astype(bf16)

    operands = [
        tok,
        row(params['spt_ln_g']), row(params['spt_ln_b']),
        params['spt_w'].astype(bf16), row(params['spt_b']),
        params['cls'].reshape(1, D_MODEL).astype(f32),
        params['pos_emb'].reshape(-1, D_MODEL)[:SEQ_LEN].astype(f32),
        rows('ln_g'), rows('ln_b'),
        mats('conv_w', f32), rows('conv_b'),
        mats('proj_w'), rows('proj_b'),
        wqkv, mats('wo'),
        mats('ff1_w'), rows('ff1_b'),
        mats('ff2_w'), rows('ff2_b'),
        row(params['head_ln_g']), row(params['head_ln_b']),
        params['head_w'].astype(bf16), row(params['head_b']),
    ]

    def const_spec(shape):
        # whole-array block, same block for every grid step -> weights stay
        # resident in VMEM across the (tiny) batch grid.
        nd = len(shape)
        return pl.BlockSpec(shape, lambda b, nd=nd: (0,) * nd)

    in_specs = [pl.BlockSpec((1, NUM_PATCHES, PATCH_DIM), lambda b: (b, 0, 0))]
    in_specs += [const_spec(op.shape) for op in operands[1:]]

    out = pl.pallas_call(
        _vibased_kernel,
        grid=(B,),
        out_shape=jax.ShapeDtypeStruct((B, 1, NUM_CLASSES), jnp.float32),
        in_specs=in_specs,
        out_specs=pl.BlockSpec((1, 1, NUM_CLASSES), lambda b: (b, 0, 0)),
        compiler_params=pltpu.CompilerParams(
            dimension_semantics=("parallel",)),   # v7x: one batch element per TC
    )(*operands)
    return out.reshape(B, NUM_CLASSES)


# ================================ deterministic params =========================

def init_params(key):
    keys = jax.random.split(key, 8 + 16 * N_LAYERS)
    ki = iter(keys)

    def nrm(shape, scale=0.02):
        return jax.random.normal(next(ki), shape, jnp.float32) * scale

    patch_dim = PATCH_DIM
    num_patches = NUM_PATCHES

    p = {
        'spt_ln_g': jnp.ones((patch_dim,), jnp.float32),
        'spt_ln_b': jnp.zeros((patch_dim,), jnp.float32),
        'spt_w': nrm((patch_dim, D_MODEL)),
        'spt_b': jnp.zeros((D_MODEL,), jnp.float32),
        'pos_emb': nrm((1, num_patches + 1, D_MODEL), 1.0),
        'cls': nrm((1, 1, D_MODEL), 1.0),
        'head_ln_g': jnp.ones((D_MODEL,), jnp.float32),
        'head_ln_b': jnp.zeros((D_MODEL,), jnp.float32),
        'head_w': nrm((D_MODEL, NUM_CLASSES)),
        'head_b': jnp.zeros((NUM_CLASSES,), jnp.float32),
        'blocks': [],
    }
    for _ in range(N_LAYERS):
        p['blocks'].append({
            'ln_g': jnp.ones((D_MODEL,), jnp.float32),
            'ln_b': jnp.zeros((D_MODEL,), jnp.float32),
            'proj_w': nrm((D_MODEL, D_MODEL)),
            'proj_b': jnp.zeros((D_MODEL,), jnp.float32),
            'conv_w': nrm((KERNEL_SIZE, D_MODEL), 0.3),   # torch (D,1,K) transposed -> (K, D)
            'conv_b': jnp.zeros((D_MODEL,), jnp.float32),
            'wq': nrm((D_MODEL, NUM_HEADS * FEATURE_DIM)),
            'wk': nrm((D_MODEL, NUM_KV_HEADS * FEATURE_DIM)),
            'wv': nrm((D_MODEL, NUM_KV_HEADS * HEAD_DIM)),
            'wo': nrm((NUM_HEADS * HEAD_DIM, D_MODEL)),
            'ff1_w': nrm((D_MODEL, HIDDEN_DIM)),
            'ff1_b': jnp.zeros((HIDDEN_DIM,), jnp.float32),
            'ff2_w': nrm((HIDDEN_DIM, D_MODEL)),
            'ff2_b': jnp.zeros((D_MODEL,), jnp.float32),
        })
    return p


if __name__ == "__main__":
    key = jax.random.PRNGKey(0)
    pkey, ikey = jax.random.split(key)
    params = init_params(pkey)
    img = jax.random.normal(ikey, (2, CHANNELS, IMAGE_SIZE, IMAGE_SIZE), jnp.float32)

    out = jax.jit(vibased_forward)(img, params)
    out = jax.block_until_ready(out)
    assert out.shape == (2, NUM_CLASSES) and out.dtype == jnp.float32
    print("KERNEL_OK")
</pallas_src>

<mosaic_0001>
module attributes {stable_mosaic.version = 11 : i64} {
  func.func @_vibased_kernel(%arg0: i32, %arg1: memref<1x4x240xf32, #tpu.memory_space<vmem>>, %arg2: memref<1x240xf32, #tpu.memory_space<vmem>>, %arg3: memref<1x240xf32, #tpu.memory_space<vmem>>, %arg4: memref<240x32xbf16, #tpu.memory_space<vmem>>, %arg5: memref<1x32xf32, #tpu.memory_space<vmem>>, %arg6: memref<1x32xf32, #tpu.memory_space<vmem>>, %arg7: memref<5x32xf32, #tpu.memory_space<vmem>>, %arg8: memref<2x1x32xf32, #tpu.memory_space<vmem>>, %arg9: memref<2x1x32xf32, #tpu.memory_space<vmem>>, %arg10: memref<2x3x32xf32, #tpu.memory_space<vmem>>, %arg11: memref<2x1x32xf32, #tpu.memory_space<vmem>>, %arg12: memref<2x32x32xbf16, #tpu.memory_space<vmem>>, %arg13: memref<2x1x32xf32, #tpu.memory_space<vmem>>, %arg14: memref<2x32x64xbf16, #tpu.memory_space<vmem>>, %arg15: memref<2x32x32xbf16, #tpu.memory_space<vmem>>, %arg16: memref<2x32x64xbf16, #tpu.memory_space<vmem>>, %arg17: memref<2x1x64xf32, #tpu.memory_space<vmem>>, %arg18: memref<2x64x32xbf16, #tpu.memory_space<vmem>>, %arg19: memref<2x1x32xf32, #tpu.memory_space<vmem>>, %arg20: memref<1x32xf32, #tpu.memory_space<vmem>>, %arg21: memref<1x32xf32, #tpu.memory_space<vmem>>, %arg22: memref<32x10xbf16, #tpu.memory_space<vmem>>, %arg23: memref<1x10xf32, #tpu.memory_space<vmem>>, %arg24: memref<1x1x10xf32, #tpu.memory_space<vmem>>) attributes {dimension_semantics = [#tpu.dimension_semantics<parallel>], iteration_bounds = array<i64: 2>, scalar_prefetch = 0 : i64, scratch_operands = 0 : i64, tpu.core_type = #tpu.core_type<tc>, window_params = [{transform_indices = @transform_0, window_bounds = array<i64: 1, 4, 240>}, {pipeline_mode = #tpu.pipeline_mode<synchronous>, transform_indices = @transform_1, window_bounds = array<i64: 1, 240>}, {pipeline_mode = #tpu.pipeline_mode<synchronous>, transform_indices = @transform_2, window_bounds = array<i64: 1, 240>}, {pipeline_mode = #tpu.pipeline_mode<synchronous>, transform_indices = @transform_3, window_bounds = array<i64: 240, 32>}, {pipeline_mode = #tpu.pipeline_mode<synchronous>, transform_indices = @transform_4, window_bounds = array<i64: 1, 32>}, {pipeline_mode = #tpu.pipeline_mode<synchronous>, transform_indices = @transform_5, window_bounds = array<i64: 1, 32>}, {pipeline_mode = #tpu.pipeline_mode<synchronous>, transform_indices = @transform_6, window_bounds = array<i64: 5, 32>}, {pipeline_mode = #tpu.pipeline_mode<synchronous>, transform_indices = @transform_7, window_bounds = array<i64: 2, 1, 32>}, {pipeline_mode = #tpu.pipeline_mode<synchronous>, transform_indices = @transform_8, window_bounds = array<i64: 2, 1, 32>}, {pipeline_mode = #tpu.pipeline_mode<synchronous>, transform_indices = @transform_9, window_bounds = array<i64: 2, 3, 32>}, {pipeline_mode = #tpu.pipeline_mode<synchronous>, transform_indices = @transform_10, window_bounds = array<i64: 2, 1, 32>}, {pipeline_mode = #tpu.pipeline_mode<synchronous>, transform_indices = @transform_11, window_bounds = array<i64: 2, 32, 32>}, {pipeline_mode = #tpu.pipeline_mode<synchronous>, transform_indices = @transform_12, window_bounds = array<i64: 2, 1, 32>}, {pipeline_mode = #tpu.pipeline_mode<synchronous>, transform_indices = @transform_13, window_bounds = array<i64: 2, 32, 64>}, {pipeline_mode = #tpu.pipeline_mode<synchronous>, transform_indices = @transform_14, window_bounds = array<i64: 2, 32, 32>}, {pipeline_mode = #tpu.pipeline_mode<synchronous>, transform_indices = @transform_15, window_bounds = array<i64: 2, 32, 64>}, {pipeline_mode = #tpu.pipeline_mode<synchronous>, transform_indices = @transform_16, window_bounds = array<i64: 2, 1, 64>}, {pipeline_mode = #tpu.pipeline_mode<synchronous>, transform_indices = @transform_17, window_bounds = array<i64: 2, 64, 32>}, {pipeline_mode = #tpu.pipeline_mode<synchronous>, transform_indices = @transform_18, window_bounds = array<i64: 2, 1, 32>}, {pipeline_mode = #tpu.pipeline_mode<synchronous>, transform_indices = @transform_19, window_bounds = array<i64: 1, 32>}, {pipeline_mode = #tpu.pipeline_mode<synchronous>, transform_indices = @transform_20, window_bounds = array<i64: 1, 32>}, {pipeline_mode = #tpu.pipeline_mode<synchronous>, transform_indices = @transform_21, window_bounds = array<i64: 32, 10>}, {pipeline_mode = #tpu.pipeline_mode<synchronous>, transform_indices = @transform_22, window_bounds = array<i64: 1, 10>}, {transform_indices = @transform_23, window_bounds = array<i64: 1, 1, 10>}]} {
    %c0 = arith.constant 0 : index
    %c0_0 = arith.constant 0 : index
    %c0_1 = arith.constant 0 : index
    %0 = vector.load %arg1[%c0, %c0_0, %c0_1] : memref<1x4x240xf32, #tpu.memory_space<vmem>>, vector<1x4x240xf32>
    %1 = vector.shape_cast %0 : vector<1x4x240xf32> to vector<4x240xf32>
    %c0_2 = arith.constant 0 : index
    %c0_3 = arith.constant 0 : index
    %2 = vector.load %arg2[%c0_2, %c0_3] : memref<1x240xf32, #tpu.memory_space<vmem>>, vector<1x240xf32>
    %c0_4 = arith.constant 0 : index
    %c0_5 = arith.constant 0 : index
    %3 = vector.load %arg3[%c0_4, %c0_5] : memref<1x240xf32, #tpu.memory_space<vmem>>, vector<1x240xf32>
    %cst = arith.constant dense<0.000000e+00> : vector<4xf32>
    %4 = vector.multi_reduction <add>, %1, %cst [1] : vector<4x240xf32> to vector<4xf32>
    %5 = vector.shape_cast %4 : vector<4xf32> to vector<4x1xf32>
    %cst_6 = arith.constant 2.400000e+02 : f32
    %6 = vector.broadcast %cst_6 : f32 to vector<4x1xf32>
    %7 = arith.divf %5, %6 : vector<4x1xf32>
    %8 = vector.broadcast %7 : vector<4x1xf32> to vector<4x240xf32>
    %9 = arith.subf %1, %8 : vector<4x240xf32>
    %10 = arith.mulf %9, %9 : vector<4x240xf32>
    %cst_7 = arith.constant dense<0.000000e+00> : vector<4xf32>
    %11 = vector.multi_reduction <add>, %10, %cst_7 [1] : vector<4x240xf32> to vector<4xf32>
    %12 = vector.shape_cast %11 : vector<4xf32> to vector<4x1xf32>
    %cst_8 = arith.constant 2.400000e+02 : f32
    %13 = vector.broadcast %cst_8 : f32 to vector<4x1xf32>
    %14 = arith.divf %12, %13 : vector<4x1xf32>
    %cst_9 = arith.constant 9.99999974E-6 : f32
    %15 = vector.broadcast %cst_9 : f32 to vector<4x1xf32>
    %16 = arith.addf %14, %15 : vector<4x1xf32>
    %17 = math.rsqrt %16 : vector<4x1xf32>
    %18 = vector.broadcast %17 : vector<4x1xf32> to vector<4x240xf32>
    %19 = arith.mulf %9, %18 : vector<4x240xf32>
    %20 = vector.broadcast %2 : vector<1x240xf32> to vector<4x240xf32>
    %21 = arith.mulf %19, %20 : vector<4x240xf32>
    %22 = vector.broadcast %3 : vector<1x240xf32> to vector<4x240xf32>
    %23 = arith.addf %21, %22 : vector<4x240xf32>
    %c0_10 = arith.constant 0 : index
    %c0_11 = arith.constant 0 : index
    %24 = vector.load %arg4[%c0_10, %c0_11] : memref<240x32xbf16, #tpu.memory_space<vmem>>, vector<240x32xbf16>
    %25 = arith.truncf %23 : vector<4x240xf32> to vector<4x240xbf16>
    %cst_12 = arith.constant dense<0.000000e+00> : vector<4x32xf32>
    %26 = tpu.matmul %25, %24, %cst_12 {dimension_numbers = #tpu.dot_dimension_numbers<[1], [0], [0], [1], [0, 0, 1, 1], [], []>} : vector<4x240xbf16>, vector<240x32xbf16>, vector<4x32xf32> -> vector<4x32xf32>
    %c0_13 = arith.constant 0 : index
    %c0_14 = arith.constant 0 : index
    %27 = vector.load %arg5[%c0_13, %c0_14] : memref<1x32xf32, #tpu.memory_space<vmem>>, vector<1x32xf32>
    %28 = vector.broadcast %27 : vector<1x32xf32> to vector<4x32xf32>
    %29 = arith.addf %26, %28 : vector<4x32xf32>
    %c0_15 = arith.constant 0 : index
    %c0_16 = arith.constant 0 : index
    %30 = vector.load %arg6[%c0_15, %c0_16] : memref<1x32xf32, #tpu.memory_space<vmem>>, vector<1x32xf32>
    %31 = tpu.concatenate %29, %30 in 0 : vector<4x32xf32>, vector<1x32xf32> -> vector<5x32xf32>
    %c0_17 = arith.constant 0 : index
    %c0_18 = arith.constant 0 : index
    %32 = vector.load %arg7[%c0_17, %c0_18] : memref<5x32xf32, #tpu.memory_space<vmem>>, vector<5x32xf32>
    %33 = arith.addf %31, %32 : vector<5x32xf32>
    %c0_19 = arith.constant 0 : index
    %c0_20 = arith.constant 0 : index
    %c0_21 = arith.constant 0 : index
    %34 = vector.load %arg8[%c0_19, %c0_20, %c0_21] : memref<2x1x32xf32, #tpu.memory_space<vmem>>, vector<1x1x32xf32>
    %35 = vector.shape_cast %34 : vector<1x1x32xf32> to vector<1x32xf32>
    %c0_22 = arith.constant 0 : index
    %c0_23 = arith.constant 0 : index
    %c0_24 = arith.constant 0 : index
    %36 = vector.load %arg9[%c0_22, %c0_23, %c0_24] : memref<2x1x32xf32, #tpu.memory_space<vmem>>, vector<1x1x32xf32>
    %37 = vector.shape_cast %36 : vector<1x1x32xf32> to vector<1x32xf32>
    %cst_25 = arith.constant dense<0.000000e+00> : vector<5xf32>
    %38 = vector.multi_reduction <add>, %33, %cst_25 [1] : vector<5x32xf32> to vector<5xf32>
    %39 = vector.shape_cast %38 : vector<5xf32> to vector<5x1xf32>
    %cst_26 = arith.constant 3.200000e+01 : f32
    %40 = vector.broadcast %cst_26 : f32 to vector<5x1xf32>
    %41 = arith.divf %39, %40 : vector<5x1xf32>
    %42 = vector.broadcast %41 : vector<5x1xf32> to vector<5x32xf32>
    %43 = arith.subf %33, %42 : vector<5x32xf32>
    %44 = arith.mulf %43, %43 : vector<5x32xf32>
    %cst_27 = arith.constant dense<0.000000e+00> : vector<5xf32>
    %45 = vector.multi_reduction <add>, %44, %cst_27 [1] : vector<5x32xf32> to vector<5xf32>
    %46 = vector.shape_cast %45 : vector<5xf32> to vector<5x1xf32>
    %cst_28 = arith.constant 3.200000e+01 : f32
    %47 = vector.broadcast %cst_28 : f32 to vector<5x1xf32>
    %48 = arith.divf %46, %47 : vector<5x1xf32>
    %cst_29 = arith.constant 9.99999974E-6 : f32
    %49 = vector.broadcast %cst_29 : f32 to vector<5x1xf32>
    %50 = arith.addf %48, %49 : vector<5x1xf32>
    %51 = math.rsqrt %50 : vector<5x1xf32>
    %52 = vector.broadcast %51 : vector<5x1xf32> to vector<5x32xf32>
    %53 = arith.mulf %43, %52 : vector<5x32xf32>
    %54 = vector.broadcast %35 : vector<1x32xf32> to vector<5x32xf32>
    %55 = arith.mulf %53, %54 : vector<5x32xf32>
    %56 = vector.broadcast %37 : vector<1x32xf32> to vector<5x32xf32>
    %57 = arith.addf %55, %56 : vector<5x32xf32>
    %c0_30 = arith.constant 0 : index
    %c0_31 = arith.constant 0 : index
    %c0_32 = arith.constant 0 : index
    %58 = vector.load %arg10[%c0_30, %c0_31, %c0_32] : memref<2x3x32xf32, #tpu.memory_space<vmem>>, vector<1x3x32xf32>
    %59 = vector.shape_cast %58 : vector<1x3x32xf32> to vector<3x32xf32>
    %c0_33 = arith.constant 0 : index
    %c0_34 = arith.constant 0 : index
    %c0_35 = arith.constant 0 : index
    %60 = vector.load %arg11[%c0_33, %c0_34, %c0_35] : memref<2x1x32xf32, #tpu.memory_space<vmem>>, vector<1x1x32xf32>
    %61 = vector.shape_cast %60 : vector<1x1x32xf32> to vector<1x32xf32>
    %cst_36 = arith.constant 0.000000e+00 : f32
    %62 = vector.broadcast %cst_36 : f32 to vector<2x32xf32>
    %63 = tpu.concatenate %62, %57 in 0 : vector<2x32xf32>, vector<5x32xf32> -> vector<7x32xf32>
    %64 = vector.extract_strided_slice %63 {offsets = [0, 0], sizes = [5, 32], strides = [1, 1]} : vector<7x32xf32> to vector<5x32xf32>
    %65 = vector.extract_strided_slice %59 {offsets = [0, 0], sizes = [1, 32], strides = [1, 1]} : vector<3x32xf32> to vector<1x32xf32>
    %66 = vector.broadcast %65 : vector<1x32xf32> to vector<5x32xf32>
    %67 = arith.mulf %64, %66 : vector<5x32xf32>
    %68 = vector.broadcast %61 : vector<1x32xf32> to vector<5x32xf32>
    %69 = arith.addf %68, %67 : vector<5x32xf32>
    %70 = vector.extract_strided_slice %63 {offsets = [1, 0], sizes = [5, 32], strides = [1, 1]} : vector<7x32xf32> to vector<5x32xf32>
    %71 = vector.extract_strided_slice %59 {offsets = [1, 0], sizes = [1, 32], strides = [1, 1]} : vector<3x32xf32> to vector<1x32xf32>
    %72 = vector.broadcast %71 : vector<1x32xf32> to vector<5x32xf32>
    %73 = arith.mulf %70, %72 : vector<5x32xf32>
    %74 = arith.addf %69, %73 : vector<5x32xf32>
    %75 = vector.extract_strided_slice %63 {offsets = [2, 0], sizes = [5, 32], strides = [1, 1]} : vector<7x32xf32> to vector<5x32xf32>
    %76 = vector.extract_strided_slice %59 {offsets = [2, 0], sizes = [1, 32], strides = [1, 1]} : vector<3x32xf32> to vector<1x32xf32>
    %77 = vector.broadcast %76 : vector<1x32xf32> to vector<5x32xf32>
    %78 = arith.mulf %75, %77 : vector<5x32xf32>
    %79 = arith.addf %74, %78 : vector<5x32xf32>
    %c0_37 = arith.constant 0 : index
    %c0_38 = arith.constant 0 : index
    %c0_39 = arith.constant 0 : index
    %80 = vector.load %arg12[%c0_37, %c0_38, %c0_39] : memref<2x32x32xbf16, #tpu.memory_space<vmem>>, vector<1x32x32xbf16>
    %81 = vector.shape_cast %80 : vector<1x32x32xbf16> to vector<32x32xbf16>
    %82 = arith.truncf %57 : vector<5x32xf32> to vector<5x32xbf16>
    %cst_40 = arith.constant dense<0.000000e+00> : vector<5x32xf32>
    %83 = tpu.matmul %82, %81, %cst_40 {dimension_numbers = #tpu.dot_dimension_numbers<[1], [0], [0], [1], [0, 0, 1, 1], [], []>} : vector<5x32xbf16>, vector<32x32xbf16>, vector<5x32xf32> -> vector<5x32xf32>
    %c0_41 = arith.constant 0 : index
    %c0_42 = arith.constant 0 : index
    %c0_43 = arith.constant 0 : index
    %84 = vector.load %arg13[%c0_41, %c0_42, %c0_43] : memref<2x1x32xf32, #tpu.memory_space<vmem>>, vector<1x1x32xf32>
    %85 = vector.shape_cast %84 : vector<1x1x32xf32> to vector<1x32xf32>
    %86 = vector.broadcast %85 : vector<1x32xf32> to vector<5x32xf32>
    %87 = arith.addf %83, %86 : vector<5x32xf32>
    %88 = arith.mulf %79, %87 : vector<5x32xf32>
    %89 = arith.addf %88, %57 : vector<5x32xf32>
    %c0_44 = arith.constant 0 : index
    %c0_45 = arith.constant 0 : index
    %c0_46 = arith.constant 0 : index
    %90 = vector.load %arg14[%c0_44, %c0_45, %c0_46] : memref<2x32x64xbf16, #tpu.memory_space<vmem>>, vector<1x32x64xbf16>
    %91 = vector.shape_cast %90 : vector<1x32x64xbf16> to vector<32x64xbf16>
    %92 = arith.truncf %89 : vector<5x32xf32> to vector<5x32xbf16>
    %cst_47 = arith.constant dense<0.000000e+00> : vector<5x64xf32>
    %93 = tpu.matmul %92, %91, %cst_47 {dimension_numbers = #tpu.dot_dimension_numbers<[1], [0], [0], [1], [0, 0, 1, 1], [], []>} : vector<5x32xbf16>, vector<32x64xbf16>, vector<5x64xf32> -> vector<5x64xf32>
    %c0_48 = arith.constant 0 : index
    %c0_49 = arith.constant 0 : index
    %c0_50 = arith.constant 0 : index
    %94 = vector.load %arg15[%c0_48, %c0_49, %c0_50] : memref<2x32x32xbf16, #tpu.memory_space<vmem>>, vector<1x32x32xbf16>
    %95 = vector.shape_cast %94 : vector<1x32x32xbf16> to vector<32x32xbf16>
    %cst_51 = arith.constant 0.000000e+00 : f32
    %96 = vector.broadcast %cst_51 : f32 to vector<5x32xf32>
    %97 = vector.extract_strided_slice %93 {offsets = [0, 0], sizes = [5, 4], strides = [1, 1]} : vector<5x64xf32> to vector<5x4xf32>
    %98 = vector.extract_strided_slice %93 {offsets = [0, 16], sizes = [5, 4], strides = [1, 1]} : vector<5x64xf32> to vector<5x4xf32>
    %99 = vector.extract_strided_slice %93 {offsets = [0, 32], sizes = [5, 8], strides = [1, 1]} : vector<5x64xf32> to vector<5x8xf32>
    %cst_52 = arith.constant dense<0.000000e+00> : vector<5x5xf32>
    %100 = tpu.matmul %97, %98, %cst_52 {dimension_numbers = #tpu.dot_dimension_numbers<[1], [1], [0], [0], [0, 0, 1, 0], [], []>} : vector<5x4xf32>, vector<5x4xf32>, vector<5x5xf32> -> vector<5x5xf32>
    %cst_53 = arith.constant 5.000000e-01 : f32
    %101 = vector.broadcast %cst_53 : f32 to vector<5x5xf32>
    %102 = arith.mulf %100, %101 : vector<5x5xf32>
    %cst_54 = arith.constant 1.000000e+00 : f32
    %103 = vector.broadcast %cst_54 : f32 to vector<5x5xf32>
    %104 = arith.addf %103, %102 : vector<5x5xf32>
    %cst_55 = arith.constant 5.000000e-01 : f32
    %105 = vector.broadcast %cst_55 : f32 to vector<5x5xf32>
    %106 = arith.mulf %105, %102 : vector<5x5xf32>
    %107 = arith.mulf %106, %102 : vector<5x5xf32>
    %108 = arith.addf %104, %107 : vector<5x5xf32>
    %cst_56 = arith.constant dense<0.000000e+00> : vector<5x8xf32>
    %109 = tpu.matmul %108, %99, %cst_56 {dimension_numbers = #tpu.dot_dimension_numbers<[1], [0], [0], [1], [0, 0, 1, 1], [], []>} : vector<5x5xf32>, vector<5x8xf32>, vector<5x8xf32> -> vector<5x8xf32>
    %cst_57 = arith.constant dense<0.000000e+00> : vector<5xf32>
    %110 = vector.multi_reduction <add>, %108, %cst_57 [1] : vector<5x5xf32> to vector<5xf32>
    %111 = vector.shape_cast %110 : vector<5xf32> to vector<5x1xf32>
    %cst_58 = arith.constant 9.99999996E-13 : f32
    %112 = vector.broadcast %cst_58 : f32 to vector<5x1xf32>
    %113 = arith.addf %111, %112 : vector<5x1xf32>
    %114 = vector.broadcast %113 : vector<5x1xf32> to vector<5x8xf32>
    %115 = arith.divf %109, %114 : vector<5x8xf32>
    %116 = vector.extract_strided_slice %95 {offsets = [0, 0], sizes = [8, 32], strides = [1, 1]} : vector<32x32xbf16> to vector<8x32xbf16>
    %117 = arith.truncf %115 : vector<5x8xf32> to vector<5x8xbf16>
    %cst_59 = arith.constant dense<0.000000e+00> : vector<5x32xf32>
    %118 = tpu.matmul %117, %116, %cst_59 {dimension_numbers = #tpu.dot_dimension_numbers<[1], [0], [0], [1], [0, 0, 1, 1], [], []>} : vector<5x8xbf16>, vector<8x32xbf16>, vector<5x32xf32> -> vector<5x32xf32>
    %119 = arith.addf %96, %118 : vector<5x32xf32>
    %120 = vector.extract_strided_slice %93 {offsets = [0, 4], sizes = [5, 4], strides = [1, 1]} : vector<5x64xf32> to vector<5x4xf32>
    %121 = vector.extract_strided_slice %93 {offsets = [0, 20], sizes = [5, 4], strides = [1, 1]} : vector<5x64xf32> to vector<5x4xf32>
    %122 = vector.extract_strided_slice %93 {offsets = [0, 40], sizes = [5, 8], strides = [1, 1]} : vector<5x64xf32> to vector<5x8xf32>
    %cst_60 = arith.constant dense<0.000000e+00> : vector<5x5xf32>
    %123 = tpu.matmul %120, %121, %cst_60 {dimension_numbers = #tpu.dot_dimension_numbers<[1], [1], [0], [0], [0, 0, 1, 0], [], []>} : vector<5x4xf32>, vector<5x4xf32>, vector<5x5xf32> -> vector<5x5xf32>
    %cst_61 = arith.constant 5.000000e-01 : f32
    %124 = vector.broadcast %cst_61 : f32 to vector<5x5xf32>
    %125 = arith.mulf %123, %124 : vector<5x5xf32>
    %cst_62 = arith.constant 1.000000e+00 : f32
    %126 = vector.broadcast %cst_62 : f32 to vector<5x5xf32>
    %127 = arith.addf %126, %125 : vector<5x5xf32>
    %cst_63 = arith.constant 5.000000e-01 : f32
    %128 = vector.broadcast %cst_63 : f32 to vector<5x5xf32>
    %129 = arith.mulf %128, %125 : vector<5x5xf32>
    %130 = arith.mulf %129, %125 : vector<5x5xf32>
    %131 = arith.addf %127, %130 : vector<5x5xf32>
    %cst_64 = arith.constant dense<0.000000e+00> : vector<5x8xf32>
    %132 = tpu.matmul %131, %122, %cst_64 {dimension_numbers = #tpu.dot_dimension_numbers<[1], [0], [0], [1], [0, 0, 1, 1], [], []>} : vector<5x5xf32>, vector<5x8xf32>, vector<5x8xf32> -> vector<5x8xf32>
    %cst_65 = arith.constant dense<0.000000e+00> : vector<5xf32>
    %133 = vector.multi_reduction <add>, %131, %cst_65 [1] : vector<5x5xf32> to vector<5xf32>
    %134 = vector.shape_cast %133 : vector<5xf32> to vector<5x1xf32>
    %cst_66 = arith.constant 9.99999996E-13 : f32
    %135 = vector.broadcast %cst_66 : f32 to vector<5x1xf32>
    %136 = arith.addf %134, %135 : vector<5x1xf32>
    %137 = vector.broadcast %136 : vector<5x1xf32> to vector<5x8xf32>
    %138 = arith.divf %132, %137 : vector<5x8xf32>
    %139 = vector.extract_strided_slice %95 {offsets = [8, 0], sizes = [8, 32], strides = [1, 1]} : vector<32x32xbf16> to vector<8x32xbf16>
    %140 = arith.truncf %138 : vector<5x8xf32> to vector<5x8xbf16>
    %cst_67 = arith.constant dense<0.000000e+00> : vector<5x32xf32>
    %141 = tpu.matmul %140, %139, %cst_67 {dimension_numbers = #tpu.dot_dimension_numbers<[1], [0], [0], [1], [0, 0, 1, 1], [], []>} : vector<5x8xbf16>, vector<8x32xbf16>, vector<5x32xf32> -> vector<5x32xf32>
    %142 = arith.addf %119, %141 : vector<5x32xf32>
    %143 = vector.extract_strided_slice %93 {offsets = [0, 8], sizes = [5, 4], strides = [1, 1]} : vector<5x64xf32> to vector<5x4xf32>
    %144 = vector.extract_strided_slice %93 {offsets = [0, 24], sizes = [5, 4], strides = [1, 1]} : vector<5x64xf32> to vector<5x4xf32>
    %145 = vector.extract_strided_slice %93 {offsets = [0, 48], sizes = [5, 8], strides = [1, 1]} : vector<5x64xf32> to vector<5x8xf32>
    %cst_68 = arith.constant dense<0.000000e+00> : vector<5x5xf32>
    %146 = tpu.matmul %143, %144, %cst_68 {dimension_numbers = #tpu.dot_dimension_numbers<[1], [1], [0], [0], [0, 0, 1, 0], [], []>} : vector<5x4xf32>, vector<5x4xf32>, vector<5x5xf32> -> vector<5x5xf32>
    %cst_69 = arith.constant 5.000000e-01 : f32
    %147 = vector.broadcast %cst_69 : f32 to vector<5x5xf32>
    %148 = arith.mulf %146, %147 : vector<5x5xf32>
    %cst_70 = arith.constant 1.000000e+00 : f32
    %149 = vector.broadcast %cst_70 : f32 to vector<5x5xf32>
    %150 = arith.addf %149, %148 : vector<5x5xf32>
    %cst_71 = arith.constant 5.000000e-01 : f32
    %151 = vector.broadcast %cst_71 : f32 to vector<5x5xf32>
    %152 = arith.mulf %151, %148 : vector<5x5xf32>
    %153 = arith.mulf %152, %148 : vector<5x5xf32>
    %154 = arith.addf %150, %153 : vector<5x5xf32>
    %cst_72 = arith.constant dense<0.000000e+00> : vector<5x8xf32>
    %155 = tpu.matmul %154, %145, %cst_72 {dimension_numbers = #tpu.dot_dimension_numbers<[1], [0], [0], [1], [0, 0, 1, 1], [], []>} : vector<5x5xf32>, vector<5x8xf32>, vector<5x8xf32> -> vector<5x8xf32>
    %cst_73 = arith.constant dense<0.000000e+00> : vector<5xf32>
    %156 = vector.multi_reduction <add>, %154, %cst_73 [1] : vector<5x5xf32> to vector<5xf32>
    %157 = vector.shape_cast %156 : vector<5xf32> to vector<5x1xf32>
    %cst_74 = arith.constant 9.99999996E-13 : f32
    %158 = vector.broadcast %cst_74 : f32 to vector<5x1xf32>
    %159 = arith.addf %157, %158 : vector<5x1xf32>
    %160 = vector.broadcast %159 : vector<5x1xf32> to vector<5x8xf32>
    %161 = arith.divf %155, %160 : vector<5x8xf32>
    %162 = vector.extract_strided_slice %95 {offsets = [16, 0], sizes = [8, 32], strides = [1, 1]} : vector<32x32xbf16> to vector<8x32xbf16>
    %163 = arith.truncf %161 : vector<5x8xf32> to vector<5x8xbf16>
    %cst_75 = arith.constant dense<0.000000e+00> : vector<5x32xf32>
    %164 = tpu.matmul %163, %162, %cst_75 {dimension_numbers = #tpu.dot_dimension_numbers<[1], [0], [0], [1], [0, 0, 1, 1], [], []>} : vector<5x8xbf16>, vector<8x32xbf16>, vector<5x32xf32> -> vector<5x32xf32>
    %165 = arith.addf %142, %164 : vector<5x32xf32>
    %166 = vector.extract_strided_slice %93 {offsets = [0, 12], sizes = [5, 4], strides = [1, 1]} : vector<5x64xf32> to vector<5x4xf32>
    %167 = vector.extract_strided_slice %93 {offsets = [0, 28], sizes = [5, 4], strides = [1, 1]} : vector<5x64xf32> to vector<5x4xf32>
    %168 = vector.extract_strided_slice %93 {offsets = [0, 56], sizes = [5, 8], strides = [1, 1]} : vector<5x64xf32> to vector<5x8xf32>
    %cst_76 = arith.constant dense<0.000000e+00> : vector<5x5xf32>
    %169 = tpu.matmul %166, %167, %cst_76 {dimension_numbers = #tpu.dot_dimension_numbers<[1], [1], [0], [0], [0, 0, 1, 0], [], []>} : vector<5x4xf32>, vector<5x4xf32>, vector<5x5xf32> -> vector<5x5xf32>
    %cst_77 = arith.constant 5.000000e-01 : f32
    %170 = vector.broadcast %cst_77 : f32 to vector<5x5xf32>
    %171 = arith.mulf %169, %170 : vector<5x5xf32>
    %cst_78 = arith.constant 1.000000e+00 : f32
    %172 = vector.broadcast %cst_78 : f32 to vector<5x5xf32>
    %173 = arith.addf %172, %171 : vector<5x5xf32>
    %cst_79 = arith.constant 5.000000e-01 : f32
    %174 = vector.broadcast %cst_79 : f32 to vector<5x5xf32>
    %175 = arith.mulf %174, %171 : vector<5x5xf32>
    %176 = arith.mulf %175, %171 : vector<5x5xf32>
    %177 = arith.addf %173, %176 : vector<5x5xf32>
    %cst_80 = arith.constant dense<0.000000e+00> : vector<5x8xf32>
    %178 = tpu.matmul %177, %168, %cst_80 {dimension_numbers = #tpu.dot_dimension_numbers<[1], [0], [0], [1], [0, 0, 1, 1], [], []>} : vector<5x5xf32>, vector<5x8xf32>, vector<5x8xf32> -> vector<5x8xf32>
    %cst_81 = arith.constant dense<0.000000e+00> : vector<5xf32>
    %179 = vector.multi_reduction <add>, %177, %cst_81 [1] : vector<5x5xf32> to vector<5xf32>
    %180 = vector.shape_cast %179 : vector<5xf32> to vector<5x1xf32>
    %cst_82 = arith.constant 9.99999996E-13 : f32
    %181 = vector.broadcast %cst_82 : f32 to vector<5x1xf32>
    %182 = arith.addf %180, %181 : vector<5x1xf32>
    %183 = vector.broadcast %182 : vector<5x1xf32> to vector<5x8xf32>
    %184 = arith.divf %178, %183 : vector<5x8xf32>
    %185 = vector.extract_strided_slice %95 {offsets = [24, 0], sizes = [8, 32], strides = [1, 1]} : vector<32x32xbf16> to vector<8x32xbf16>
    %186 = arith.truncf %184 : vector<5x8xf32> to vector<5x8xbf16>
    %cst_83 = arith.constant dense<0.000000e+00> : vector<5x32xf32>
    %187 = tpu.matmul %186, %185, %cst_83 {dimension_numbers = #tpu.dot_dimension_numbers<[1], [0], [0], [1], [0, 0, 1, 1], [], []>} : vector<5x8xbf16>, vector<8x32xbf16>, vector<5x32xf32> -> vector<5x32xf32>
    %188 = arith.addf %165, %187 : vector<5x32xf32>
    %c0_84 = arith.constant 0 : index
    %c0_85 = arith.constant 0 : index
    %c0_86 = arith.constant 0 : index
    %189 = vector.load %arg16[%c0_84, %c0_85, %c0_86] : memref<2x32x64xbf16, #tpu.memory_space<vmem>>, vector<1x32x64xbf16>
    %190 = vector.shape_cast %189 : vector<1x32x64xbf16> to vector<32x64xbf16>
    %191 = arith.truncf %188 : vector<5x32xf32> to vector<5x32xbf16>
    %cst_87 = arith.constant dense<0.000000e+00> : vector<5x64xf32>
    %192 = tpu.matmul %191, %190, %cst_87 {dimension_numbers = #tpu.dot_dimension_numbers<[1], [0], [0], [1], [0, 0, 1, 1], [], []>} : vector<5x32xbf16>, vector<32x64xbf16>, vector<5x64xf32> -> vector<5x64xf32>
    %c0_88 = arith.constant 0 : index
    %c0_89 = arith.constant 0 : index
    %c0_90 = arith.constant 0 : index
    %193 = vector.load %arg17[%c0_88, %c0_89, %c0_90] : memref<2x1x64xf32, #tpu.memory_space<vmem>>, vector<1x1x64xf32>
    %194 = vector.shape_cast %193 : vector<1x1x64xf32> to vector<1x64xf32>
    %195 = vector.broadcast %194 : vector<1x64xf32> to vector<5x64xf32>
    %196 = arith.addf %192, %195 : vector<5x64xf32>
    %cst_91 = arith.constant 5.000000e-01 : f32
    %197 = vector.broadcast %cst_91 : f32 to vector<5x64xf32>
    %198 = arith.mulf %197, %196 : vector<5x64xf32>
    %cst_92 = arith.constant 0.707106769 : f32
    %199 = vector.broadcast %cst_92 : f32 to vector<5x64xf32>
    %200 = arith.mulf %196, %199 : vector<5x64xf32>
    %201 = math.absf %200 : vector<5x64xf32>
    %cst_93 = arith.constant 0.327591091 : f32
    %202 = vector.broadcast %cst_93 : f32 to vector<5x64xf32>
    %203 = arith.mulf %202, %201 : vector<5x64xf32>
    %cst_94 = arith.constant 1.000000e+00 : f32
    %204 = vector.broadcast %cst_94 : f32 to vector<5x64xf32>
    %205 = arith.addf %204, %203 : vector<5x64xf32>
    %cst_95 = arith.constant 1.000000e+00 : f32
    %206 = vector.broadcast %cst_95 : f32 to vector<5x64xf32>
    %207 = arith.divf %206, %205 : vector<5x64xf32>
    %cst_96 = arith.constant 1.06140542 : f32
    %208 = vector.broadcast %cst_96 : f32 to vector<5x64xf32>
    %209 = arith.mulf %208, %207 : vector<5x64xf32>
    %cst_97 = arith.constant -1.45315206 : f32
    %210 = vector.broadcast %cst_97 : f32 to vector<5x64xf32>
    %211 = arith.addf %209, %210 : vector<5x64xf32>
    %212 = arith.mulf %211, %207 : vector<5x64xf32>
    %cst_98 = arith.constant 1.42141378 : f32
    %213 = vector.broadcast %cst_98 : f32 to vector<5x64xf32>
    %214 = arith.addf %212, %213 : vector<5x64xf32>
    %215 = arith.mulf %214, %207 : vector<5x64xf32>
    %cst_99 = arith.constant -0.284496725 : f32
    %216 = vector.broadcast %cst_99 : f32 to vector<5x64xf32>
    %217 = arith.addf %215, %216 : vector<5x64xf32>
    %218 = arith.mulf %217, %207 : vector<5x64xf32>
    %cst_100 = arith.constant 0.254829586 : f32
    %219 = vector.broadcast %cst_100 : f32 to vector<5x64xf32>
    %220 = arith.addf %218, %219 : vector<5x64xf32>
    %221 = arith.mulf %220, %207 : vector<5x64xf32>
    %222 = arith.mulf %201, %201 : vector<5x64xf32>
    %cst_101 = arith.constant 0.000000e+00 : f32
    %223 = vector.broadcast %cst_101 : f32 to vector<5x64xf32>
    %224 = arith.subf %223, %222 : vector<5x64xf32>
    %225 = math.exp %224 : vector<5x64xf32>
    %226 = arith.mulf %221, %225 : vector<5x64xf32>
    %cst_102 = arith.constant 1.000000e+00 : f32
    %227 = vector.broadcast %cst_102 : f32 to vector<5x64xf32>
    %228 = arith.subf %227, %226 : vector<5x64xf32>
    %cst_103 = arith.constant 0.000000e+00 : f32
    %229 = vector.broadcast %cst_103 : f32 to vector<5x64xf32>
    %230 = arith.cmpf olt, %200, %229 : vector<5x64xf32>
    %cst_104 = arith.constant 0.000000e+00 : f32
    %231 = vector.broadcast %cst_104 : f32 to vector<5x64xf32>
    %232 = arith.subf %231, %228 : vector<5x64xf32>
    %233 = arith.select %230, %232, %228 : vector<5x64xi1>, vector<5x64xf32>
    %cst_105 = arith.constant 1.000000e+00 : f32
    %234 = vector.broadcast %cst_105 : f32 to vector<5x64xf32>
    %235 = arith.addf %234, %233 : vector<5x64xf32>
    %236 = arith.mulf %198, %235 : vector<5x64xf32>
    %c0_106 = arith.constant 0 : index
    %c0_107 = arith.constant 0 : index
    %c0_108 = arith.constant 0 : index
    %237 = vector.load %arg18[%c0_106, %c0_107, %c0_108] : memref<2x64x32xbf16, #tpu.memory_space<vmem>>, vector<1x64x32xbf16>
    %238 = vector.shape_cast %237 : vector<1x64x32xbf16> to vector<64x32xbf16>
    %239 = arith.truncf %236 : vector<5x64xf32> to vector<5x64xbf16>
    %cst_109 = arith.constant dense<0.000000e+00> : vector<5x32xf32>
    %240 = tpu.matmul %239, %238, %cst_109 {dimension_numbers = #tpu.dot_dimension_numbers<[1], [0], [0], [1], [0, 0, 1, 1], [], []>} : vector<5x64xbf16>, vector<64x32xbf16>, vector<5x32xf32> -> vector<5x32xf32>
    %c0_110 = arith.constant 0 : index
    %c0_111 = arith.constant 0 : index
    %c0_112 = arith.constant 0 : index
    %241 = vector.load %arg19[%c0_110, %c0_111, %c0_112] : memref<2x1x32xf32, #tpu.memory_space<vmem>>, vector<1x1x32xf32>
    %242 = vector.shape_cast %241 : vector<1x1x32xf32> to vector<1x32xf32>
    %243 = vector.broadcast %242 : vector<1x32xf32> to vector<5x32xf32>
    %244 = arith.addf %240, %243 : vector<5x32xf32>
    %245 = arith.addf %33, %244 : vector<5x32xf32>
    %c1 = arith.constant 1 : index
    %c0_113 = arith.constant 0 : index
    %c0_114 = arith.constant 0 : index
    %246 = vector.load %arg8[%c1, %c0_113, %c0_114] : memref<2x1x32xf32, #tpu.memory_space<vmem>>, vector<1x1x32xf32>
    %247 = vector.shape_cast %246 : vector<1x1x32xf32> to vector<1x32xf32>
    %c1_115 = arith.constant 1 : index
    %c0_116 = arith.constant 0 : index
    %c0_117 = arith.constant 0 : index
    %248 = vector.load %arg9[%c1_115, %c0_116, %c0_117] : memref<2x1x32xf32, #tpu.memory_space<vmem>>, vector<1x1x32xf32>
    %249 = vector.shape_cast %248 : vector<1x1x32xf32> to vector<1x32xf32>
    %cst_118 = arith.constant dense<0.000000e+00> : vector<5xf32>
    %250 = vector.multi_reduction <add>, %245, %cst_118 [1] : vector<5x32xf32> to vector<5xf32>
    %251 = vector.shape_cast %250 : vector<5xf32> to vector<5x1xf32>
    %cst_119 = arith.constant 3.200000e+01 : f32
    %252 = vector.broadcast %cst_119 : f32 to vector<5x1xf32>
    %253 = arith.divf %251, %252 : vector<5x1xf32>
    %254 = vector.broadcast %253 : vector<5x1xf32> to vector<5x32xf32>
    %255 = arith.subf %245, %254 : vector<5x32xf32>
    %256 = arith.mulf %255, %255 : vector<5x32xf32>
    %cst_120 = arith.constant dense<0.000000e+00> : vector<5xf32>
    %257 = vector.multi_reduction <add>, %256, %cst_120 [1] : vector<5x32xf32> to vector<5xf32>
    %258 = vector.shape_cast %257 : vector<5xf32> to vector<5x1xf32>
    %cst_121 = arith.constant 3.200000e+01 : f32
    %259 = vector.broadcast %cst_121 : f32 to vector<5x1xf32>
    %260 = arith.divf %258, %259 : vector<5x1xf32>
    %cst_122 = arith.constant 9.99999974E-6 : f32
    %261 = vector.broadcast %cst_122 : f32 to vector<5x1xf32>
    %262 = arith.addf %260, %261 : vector<5x1xf32>
    %263 = math.rsqrt %262 : vector<5x1xf32>
    %264 = vector.broadcast %263 : vector<5x1xf32> to vector<5x32xf32>
    %265 = arith.mulf %255, %264 : vector<5x32xf32>
    %266 = vector.broadcast %247 : vector<1x32xf32> to vector<5x32xf32>
    %267 = arith.mulf %265, %266 : vector<5x32xf32>
    %268 = vector.broadcast %249 : vector<1x32xf32> to vector<5x32xf32>
    %269 = arith.addf %267, %268 : vector<5x32xf32>
    %c1_123 = arith.constant 1 : index
    %c0_124 = arith.constant 0 : index
    %c0_125 = arith.constant 0 : index
    %270 = vector.load %arg10[%c1_123, %c0_124, %c0_125] : memref<2x3x32xf32, #tpu.memory_space<vmem>>, vector<1x3x32xf32>
    %271 = vector.shape_cast %270 : vector<1x3x32xf32> to vector<3x32xf32>
    %c1_126 = arith.constant 1 : index
    %c0_127 = arith.constant 0 : index
    %c0_128 = arith.constant 0 : index
    %272 = vector.load %arg11[%c1_126, %c0_127, %c0_128] : memref<2x1x32xf32, #tpu.memory_space<vmem>>, vector<1x1x32xf32>
    %273 = vector.shape_cast %272 : vector<1x1x32xf32> to vector<1x32xf32>
    %cst_129 = arith.constant 0.000000e+00 : f32
    %274 = vector.broadcast %cst_129 : f32 to vector<2x32xf32>
    %275 = tpu.concatenate %274, %269 in 0 : vector<2x32xf32>, vector<5x32xf32> -> vector<7x32xf32>
    %276 = vector.extract_strided_slice %275 {offsets = [0, 0], sizes = [5, 32], strides = [1, 1]} : vector<7x32xf32> to vector<5x32xf32>
    %277 = vector.extract_strided_slice %271 {offsets = [0, 0], sizes = [1, 32], strides = [1, 1]} : vector<3x32xf32> to vector<1x32xf32>
    %278 = vector.broadcast %277 : vector<1x32xf32> to vector<5x32xf32>
    %279 = arith.mulf %276, %278 : vector<5x32xf32>
    %280 = vector.broadcast %273 : vector<1x32xf32> to vector<5x32xf32>
    %281 = arith.addf %280, %279 : vector<5x32xf32>
    %282 = vector.extract_strided_slice %275 {offsets = [1, 0], sizes = [5, 32], strides = [1, 1]} : vector<7x32xf32> to vector<5x32xf32>
    %283 = vector.extract_strided_slice %271 {offsets = [1, 0], sizes = [1, 32], strides = [1, 1]} : vector<3x32xf32> to vector<1x32xf32>
    %284 = vector.broadcast %283 : vector<1x32xf32> to vector<5x32xf32>
    %285 = arith.mulf %282, %284 : vector<5x32xf32>
    %286 = arith.addf %281, %285 : vector<5x32xf32>
    %287 = vector.extract_strided_slice %275 {offsets = [2, 0], sizes = [5, 32], strides = [1, 1]} : vector<7x32xf32> to vector<5x32xf32>
    %288 = vector.extract_strided_slice %271 {offsets = [2, 0], sizes = [1, 32], strides = [1, 1]} : vector<3x32xf32> to vector<1x32xf32>
    %289 = vector.broadcast %288 : vector<1x32xf32> to vector<5x32xf32>
    %290 = arith.mulf %287, %289 : vector<5x32xf32>
    %291 = arith.addf %286, %290 : vector<5x32xf32>
    %c1_130 = arith.constant 1 : index
    %c0_131 = arith.constant 0 : index
    %c0_132 = arith.constant 0 : index
    %292 = vector.load %arg12[%c1_130, %c0_131, %c0_132] : memref<2x32x32xbf16, #tpu.memory_space<vmem>>, vector<1x32x32xbf16>
    %293 = vector.shape_cast %292 : vector<1x32x32xbf16> to vector<32x32xbf16>
    %294 = arith.truncf %269 : vector<5x32xf32> to vector<5x32xbf16>
    %cst_133 = arith.constant dense<0.000000e+00> : vector<5x32xf32>
    %295 = tpu.matmul %294, %293, %cst_133 {dimension_numbers = #tpu.dot_dimension_numbers<[1], [0], [0], [1], [0, 0, 1, 1], [], []>} : vector<5x32xbf16>, vector<32x32xbf16>, vector<5x32xf32> -> vector<5x32xf32>
    %c1_134 = arith.constant 1 : index
    %c0_135 = arith.constant 0 : index
    %c0_136 = arith.constant 0 : index
    %296 = vector.load %arg13[%c1_134, %c0_135, %c0_136] : memref<2x1x32xf32, #tpu.memory_space<vmem>>, vector<1x1x32xf32>
    %297 = vector.shape_cast %296 : vector<1x1x32xf32> to vector<1x32xf32>
    %298 = vector.broadcast %297 : vector<1x32xf32> to vector<5x32xf32>
    %299 = arith.addf %295, %298 : vector<5x32xf32>
    %300 = arith.mulf %291, %299 : vector<5x32xf32>
    %301 = arith.addf %300, %269 : vector<5x32xf32>
    %c1_137 = arith.constant 1 : index
    %c0_138 = arith.constant 0 : index
    %c0_139 = arith.constant 0 : index
    %302 = vector.load %arg14[%c1_137, %c0_138, %c0_139] : memref<2x32x64xbf16, #tpu.memory_space<vmem>>, vector<1x32x64xbf16>
    %303 = vector.shape_cast %302 : vector<1x32x64xbf16> to vector<32x64xbf16>
    %304 = arith.truncf %301 : vector<5x32xf32> to vector<5x32xbf16>
    %cst_140 = arith.constant dense<0.000000e+00> : vector<5x64xf32>
    %305 = tpu.matmul %304, %303, %cst_140 {dimension_numbers = #tpu.dot_dimension_numbers<[1], [0], [0], [1], [0, 0, 1, 1], [], []>} : vector<5x32xbf16>, vector<32x64xbf16>, vector<5x64xf32> -> vector<5x64xf32>
    %c1_141 = arith.constant 1 : index
    %c0_142 = arith.constant 0 : index
    %c0_143 = arith.constant 0 : index
    %306 = vector.load %arg15[%c1_141, %c0_142, %c0_143] : memref<2x32x32xbf16, #tpu.memory_space<vmem>>, vector<1x32x32xbf16>
    %307 = vector.shape_cast %306 : vector<1x32x32xbf16> to vector<32x32xbf16>
    %cst_144 = arith.constant 0.000000e+00 : f32
    %308 = vector.broadcast %cst_144 : f32 to vector<5x32xf32>
    %309 = vector.extract_strided_slice %305 {offsets = [0, 0], sizes = [5, 4], strides = [1, 1]} : vector<5x64xf32> to vector<5x4xf32>
    %310 = vector.extract_strided_slice %305 {offsets = [0, 16], sizes = [5, 4], strides = [1, 1]} : vector<5x64xf32> to vector<5x4xf32>
    %311 = vector.extract_strided_slice %305 {offsets = [0, 32], sizes = [5, 8], strides = [1, 1]} : vector<5x64xf32> to vector<5x8xf32>
    %cst_145 = arith.constant dense<0.000000e+00> : vector<5x5xf32>
    %312 = tpu.matmul %309, %310, %cst_145 {dimension_numbers = #tpu.dot_dimension_numbers<[1], [1], [0], [0], [0, 0, 1, 0], [], []>} : vector<5x4xf32>, vector<5x4xf32>, vector<5x5xf32> -> vector<5x5xf32>
    %cst_146 = arith.constant 5.000000e-01 : f32
    %313 = vector.broadcast %cst_146 : f32 to vector<5x5xf32>
    %314 = arith.mulf %312, %313 : vector<5x5xf32>
    %cst_147 = arith.constant 1.000000e+00 : f32
    %315 = vector.broadcast %cst_147 : f32 to vector<5x5xf32>
    %316 = arith.addf %315, %314 : vector<5x5xf32>
    %cst_148 = arith.constant 5.000000e-01 : f32
    %317 = vector.broadcast %cst_148 : f32 to vector<5x5xf32>
    %318 = arith.mulf %317, %314 : vector<5x5xf32>
    %319 = arith.mulf %318, %314 : vector<5x5xf32>
    %320 = arith.addf %316, %319 : vector<5x5xf32>
    %cst_149 = arith.constant dense<0.000000e+00> : vector<5x8xf32>
    %321 = tpu.matmul %320, %311, %cst_149 {dimension_numbers = #tpu.dot_dimension_numbers<[1], [0], [0], [1], [0, 0, 1, 1], [], []>} : vector<5x5xf32>, vector<5x8xf32>, vector<5x8xf32> -> vector<5x8xf32>
    %cst_150 = arith.constant dense<0.000000e+00> : vector<5xf32>
    %322 = vector.multi_reduction <add>, %320, %cst_150 [1] : vector<5x5xf32> to vector<5xf32>
    %323 = vector.shape_cast %322 : vector<5xf32> to vector<5x1xf32>
    %cst_151 = arith.constant 9.99999996E-13 : f32
    %324 = vector.broadcast %cst_151 : f32 to vector<5x1xf32>
    %325 = arith.addf %323, %324 : vector<5x1xf32>
    %326 = vector.broadcast %325 : vector<5x1xf32> to vector<5x8xf32>
    %327 = arith.divf %321, %326 : vector<5x8xf32>
    %328 = vector.extract_strided_slice %307 {offsets = [0, 0], sizes = [8, 32], strides = [1, 1]} : vector<32x32xbf16> to vector<8x32xbf16>
    %329 = arith.truncf %327 : vector<5x8xf32> to vector<5x8xbf16>
    %cst_152 = arith.constant dense<0.000000e+00> : vector<5x32xf32>
    %330 = tpu.matmul %329, %328, %cst_152 {dimension_numbers = #tpu.dot_dimension_numbers<[1], [0], [0], [1], [0, 0, 1, 1], [], []>} : vector<5x8xbf16>, vector<8x32xbf16>, vector<5x32xf32> -> vector<5x32xf32>
    %331 = arith.addf %308, %330 : vector<5x32xf32>
    %332 = vector.extract_strided_slice %305 {offsets = [0, 4], sizes = [5, 4], strides = [1, 1]} : vector<5x64xf32> to vector<5x4xf32>
    %333 = vector.extract_strided_slice %305 {offsets = [0, 20], sizes = [5, 4], strides = [1, 1]} : vector<5x64xf32> to vector<5x4xf32>
    %334 = vector.extract_strided_slice %305 {offsets = [0, 40], sizes = [5, 8], strides = [1, 1]} : vector<5x64xf32> to vector<5x8xf32>
    %cst_153 = arith.constant dense<0.000000e+00> : vector<5x5xf32>
    %335 = tpu.matmul %332, %333, %cst_153 {dimension_numbers = #tpu.dot_dimension_numbers<[1], [1], [0], [0], [0, 0, 1, 0], [], []>} : vector<5x4xf32>, vector<5x4xf32>, vector<5x5xf32> -> vector<5x5xf32>
    %cst_154 = arith.constant 5.000000e-01 : f32
    %336 = vector.broadcast %cst_154 : f32 to vector<5x5xf32>
    %337 = arith.mulf %335, %336 : vector<5x5xf32>
    %cst_155 = arith.constant 1.000000e+00 : f32
    %338 = vector.broadcast %cst_155 : f32 to vector<5x5xf32>
    %339 = arith.addf %338, %337 : vector<5x5xf32>
    %cst_156 = arith.constant 5.000000e-01 : f32
    %340 = vector.broadcast %cst_156 : f32 to vector<5x5xf32>
    %341 = arith.mulf %340, %337 : vector<5x5xf32>
    %342 = arith.mulf %341, %337 : vector<5x5xf32>
    %343 = arith.addf %339, %342 : vector<5x5xf32>
    %cst_157 = arith.constant dense<0.000000e+00> : vector<5x8xf32>
    %344 = tpu.matmul %343, %334, %cst_157 {dimension_numbers = #tpu.dot_dimension_numbers<[1], [0], [0], [1], [0, 0, 1, 1], [], []>} : vector<5x5xf32>, vector<5x8xf32>, vector<5x8xf32> -> vector<5x8xf32>
    %cst_158 = arith.constant dense<0.000000e+00> : vector<5xf32>
    %345 = vector.multi_reduction <add>, %343, %cst_158 [1] : vector<5x5xf32> to vector<5xf32>
    %346 = vector.shape_cast %345 : vector<5xf32> to vector<5x1xf32>
    %cst_159 = arith.constant 9.99999996E-13 : f32
    %347 = vector.broadcast %cst_159 : f32 to vector<5x1xf32>
    %348 = arith.addf %346, %347 : vector<5x1xf32>
    %349 = vector.broadcast %348 : vector<5x1xf32> to vector<5x8xf32>
    %350 = arith.divf %344, %349 : vector<5x8xf32>
    %351 = vector.extract_strided_slice %307 {offsets = [8, 0], sizes = [8, 32], strides = [1, 1]} : vector<32x32xbf16> to vector<8x32xbf16>
    %352 = arith.truncf %350 : vector<5x8xf32> to vector<5x8xbf16>
    %cst_160 = arith.constant dense<0.000000e+00> : vector<5x32xf32>
    %353 = tpu.matmul %352, %351, %cst_160 {dimension_numbers = #tpu.dot_dimension_numbers<[1], [0], [0], [1], [0, 0, 1, 1], [], []>} : vector<5x8xbf16>, vector<8x32xbf16>, vector<5x32xf32> -> vector<5x32xf32>
    %354 = arith.addf %331, %353 : vector<5x32xf32>
    %355 = vector.extract_strided_slice %305 {offsets = [0, 8], sizes = [5, 4], strides = [1, 1]} : vector<5x64xf32> to vector<5x4xf32>
    %356 = vector.extract_strided_slice %305 {offsets = [0, 24], sizes = [5, 4], strides = [1, 1]} : vector<5x64xf32> to vector<5x4xf32>
    %357 = vector.extract_strided_slice %305 {offsets = [0, 48], sizes = [5, 8], strides = [1, 1]} : vector<5x64xf32> to vector<5x8xf32>
    %cst_161 = arith.constant dense<0.000000e+00> : vector<5x5xf32>
    %358 = tpu.matmul %355, %356, %cst_161 {dimension_numbers = #tpu.dot_dimension_numbers<[1], [1], [0], [0], [0, 0, 1, 0], [], []>} : vector<5x4xf32>, vector<5x4xf32>, vector<5x5xf32> -> vector<5x5xf32>
    %cst_162 = arith.constant 5.000000e-01 : f32
    %359 = vector.broadcast %cst_162 : f32 to vector<5x5xf32>
    %360 = arith.mulf %358, %359 : vector<5x5xf32>
    %cst_163 = arith.constant 1.000000e+00 : f32
    %361 = vector.broadcast %cst_163 : f32 to vector<5x5xf32>
    %362 = arith.addf %361, %360 : vector<5x5xf32>
    %cst_164 = arith.constant 5.000000e-01 : f32
    %363 = vector.broadcast %cst_164 : f32 to vector<5x5xf32>
    %364 = arith.mulf %363, %360 : vector<5x5xf32>
    %365 = arith.mulf %364, %360 : vector<5x5xf32>
    %366 = arith.addf %362, %365 : vector<5x5xf32>
    %cst_165 = arith.constant dense<0.000000e+00> : vector<5x8xf32>
    %367 = tpu.matmul %366, %357, %cst_165 {dimension_numbers = #tpu.dot_dimension_numbers<[1], [0], [0], [1], [0, 0, 1, 1], [], []>} : vector<5x5xf32>, vector<5x8xf32>, vector<5x8xf32> -> vector<5x8xf32>
    %cst_166 = arith.constant dense<0.000000e+00> : vector<5xf32>
    %368 = vector.multi_reduction <add>, %366, %cst_166 [1] : vector<5x5xf32> to vector<5xf32>
    %369 = vector.shape_cast %368 : vector<5xf32> to vector<5x1xf32>
    %cst_167 = arith.constant 9.99999996E-13 : f32
    %370 = vector.broadcast %cst_167 : f32 to vector<5x1xf32>
    %371 = arith.addf %369, %370 : vector<5x1xf32>
    %372 = vector.broadcast %371 : vector<5x1xf32> to vector<5x8xf32>
    %373 = arith.divf %367, %372 : vector<5x8xf32>
    %374 = vector.extract_strided_slice %307 {offsets = [16, 0], sizes = [8, 32], strides = [1, 1]} : vector<32x32xbf16> to vector<8x32xbf16>
    %375 = arith.truncf %373 : vector<5x8xf32> to vector<5x8xbf16>
    %cst_168 = arith.constant dense<0.000000e+00> : vector<5x32xf32>
    %376 = tpu.matmul %375, %374, %cst_168 {dimension_numbers = #tpu.dot_dimension_numbers<[1], [0], [0], [1], [0, 0, 1, 1], [], []>} : vector<5x8xbf16>, vector<8x32xbf16>, vector<5x32xf32> -> vector<5x32xf32>
    %377 = arith.addf %354, %376 : vector<5x32xf32>
    %378 = vector.extract_strided_slice %305 {offsets = [0, 12], sizes = [5, 4], strides = [1, 1]} : vector<5x64xf32> to vector<5x4xf32>
    %379 = vector.extract_strided_slice %305 {offsets = [0, 28], sizes = [5, 4], strides = [1, 1]} : vector<5x64xf32> to vector<5x4xf32>
    %380 = vector.extract_strided_slice %305 {offsets = [0, 56], sizes = [5, 8], strides = [1, 1]} : vector<5x64xf32> to vector<5x8xf32>
    %cst_169 = arith.constant dense<0.000000e+00> : vector<5x5xf32>
    %381 = tpu.matmul %378, %379, %cst_169 {dimension_numbers = #tpu.dot_dimension_numbers<[1], [1], [0], [0], [0, 0, 1, 0], [], []>} : vector<5x4xf32>, vector<5x4xf32>, vector<5x5xf32> -> vector<5x5xf32>
    %cst_170 = arith.constant 5.000000e-01 : f32
    %382 = vector.broadcast %cst_170 : f32 to vector<5x5xf32>
    %383 = arith.mulf %381, %382 : vector<5x5xf32>
    %cst_171 = arith.constant 1.000000e+00 : f32
    %384 = vector.broadcast %cst_171 : f32 to vector<5x5xf32>
    %385 = arith.addf %384, %383 : vector<5x5xf32>
    %cst_172 = arith.constant 5.000000e-01 : f32
    %386 = vector.broadcast %cst_172 : f32 to vector<5x5xf32>
    %387 = arith.mulf %386, %383 : vector<5x5xf32>
    %388 = arith.mulf %387, %383 : vector<5x5xf32>
    %389 = arith.addf %385, %388 : vector<5x5xf32>
    %cst_173 = arith.constant dense<0.000000e+00> : vector<5x8xf32>
    %390 = tpu.matmul %389, %380, %cst_173 {dimension_numbers = #tpu.dot_dimension_numbers<[1], [0], [0], [1], [0, 0, 1, 1], [], []>} : vector<5x5xf32>, vector<5x8xf32>, vector<5x8xf32> -> vector<5x8xf32>
    %cst_174 = arith.constant dense<0.000000e+00> : vector<5xf32>
    %391 = vector.multi_reduction <add>, %389, %cst_174 [1] : vector<5x5xf32> to vector<5xf32>
    %392 = vector.shape_cast %391 : vector<5xf32> to vector<5x1xf32>
    %cst_175 = arith.constant 9.99999996E-13 : f32
    %393 = vector.broadcast %cst_175 : f32 to vector<5x1xf32>
    %394 = arith.addf %392, %393 : vector<5x1xf32>
    %395 = vector.broadcast %394 : vector<5x1xf32> to vector<5x8xf32>
    %396 = arith.divf %390, %395 : vector<5x8xf32>
    %397 = vector.extract_strided_slice %307 {offsets = [24, 0], sizes = [8, 32], strides = [1, 1]} : vector<32x32xbf16> to vector<8x32xbf16>
    %398 = arith.truncf %396 : vector<5x8xf32> to vector<5x8xbf16>
    %cst_176 = arith.constant dense<0.000000e+00> : vector<5x32xf32>
    %399 = tpu.matmul %398, %397, %cst_176 {dimension_numbers = #tpu.dot_dimension_numbers<[1], [0], [0], [1], [0, 0, 1, 1], [], []>} : vector<5x8xbf16>, vector<8x32xbf16>, vector<5x32xf32> -> vector<5x32xf32>
    %400 = arith.addf %377, %399 : vector<5x32xf32>
    %c1_177 = arith.constant 1 : index
    %c0_178 = arith.constant 0 : index
    %c0_179 = arith.constant 0 : index
    %401 = vector.load %arg16[%c1_177, %c0_178, %c0_179] : memref<2x32x64xbf16, #tpu.memory_space<vmem>>, vector<1x32x64xbf16>
    %402 = vector.shape_cast %401 : vector<1x32x64xbf16> to vector<32x64xbf16>
    %403 = arith.truncf %400 : vector<5x32xf32> to vector<5x32xbf16>
    %cst_180 = arith.constant dense<0.000000e+00> : vector<5x64xf32>
    %404 = tpu.matmul %403, %402, %cst_180 {dimension_numbers = #tpu.dot_dimension_numbers<[1], [0], [0], [1], [0, 0, 1, 1], [], []>} : vector<5x32xbf16>, vector<32x64xbf16>, vector<5x64xf32> -> vector<5x64xf32>
    %c1_181 = arith.constant 1 : index
    %c0_182 = arith.constant 0 : index
    %c0_183 = arith.constant 0 : index
    %405 = vector.load %arg17[%c1_181, %c0_182, %c0_183] : memref<2x1x64xf32, #tpu.memory_space<vmem>>, vector<1x1x64xf32>
    %406 = vector.shape_cast %405 : vector<1x1x64xf32> to vector<1x64xf32>
    %407 = vector.broadcast %406 : vector<1x64xf32> to vector<5x64xf32>
    %408 = arith.addf %404, %407 : vector<5x64xf32>
    %cst_184 = arith.constant 5.000000e-01 : f32
    %409 = vector.broadcast %cst_184 : f32 to vector<5x64xf32>
    %410 = arith.mulf %409, %408 : vector<5x64xf32>
    %cst_185 = arith.constant 0.707106769 : f32
    %411 = vector.broadcast %cst_185 : f32 to vector<5x64xf32>
    %412 = arith.mulf %408, %411 : vector<5x64xf32>
    %413 = math.absf %412 : vector<5x64xf32>
    %cst_186 = arith.constant 0.327591091 : f32
    %414 = vector.broadcast %cst_186 : f32 to vector<5x64xf32>
    %415 = arith.mulf %414, %413 : vector<5x64xf32>
    %cst_187 = arith.constant 1.000000e+00 : f32
    %416 = vector.broadcast %cst_187 : f32 to vector<5x64xf32>
    %417 = arith.addf %416, %415 : vector<5x64xf32>
    %cst_188 = arith.constant 1.000000e+00 : f32
    %418 = vector.broadcast %cst_188 : f32 to vector<5x64xf32>
    %419 = arith.divf %418, %417 : vector<5x64xf32>
    %cst_189 = arith.constant 1.06140542 : f32
    %420 = vector.broadcast %cst_189 : f32 to vector<5x64xf32>
    %421 = arith.mulf %420, %419 : vector<5x64xf32>
    %cst_190 = arith.constant -1.45315206 : f32
    %422 = vector.broadcast %cst_190 : f32 to vector<5x64xf32>
    %423 = arith.addf %421, %422 : vector<5x64xf32>
    %424 = arith.mulf %423, %419 : vector<5x64xf32>
    %cst_191 = arith.constant 1.42141378 : f32
    %425 = vector.broadcast %cst_191 : f32 to vector<5x64xf32>
    %426 = arith.addf %424, %425 : vector<5x64xf32>
    %427 = arith.mulf %426, %419 : vector<5x64xf32>
    %cst_192 = arith.constant -0.284496725 : f32
    %428 = vector.broadcast %cst_192 : f32 to vector<5x64xf32>
    %429 = arith.addf %427, %428 : vector<5x64xf32>
    %430 = arith.mulf %429, %419 : vector<5x64xf32>
    %cst_193 = arith.constant 0.254829586 : f32
    %431 = vector.broadcast %cst_193 : f32 to vector<5x64xf32>
    %432 = arith.addf %430, %431 : vector<5x64xf32>
    %433 = arith.mulf %432, %419 : vector<5x64xf32>
    %434 = arith.mulf %413, %413 : vector<5x64xf32>
    %cst_194 = arith.constant 0.000000e+00 : f32
    %435 = vector.broadcast %cst_194 : f32 to vector<5x64xf32>
    %436 = arith.subf %435, %434 : vector<5x64xf32>
    %437 = math.exp %436 : vector<5x64xf32>
    %438 = arith.mulf %433, %437 : vector<5x64xf32>
    %cst_195 = arith.constant 1.000000e+00 : f32
    %439 = vector.broadcast %cst_195 : f32 to vector<5x64xf32>
    %440 = arith.subf %439, %438 : vector<5x64xf32>
    %cst_196 = arith.constant 0.000000e+00 : f32
    %441 = vector.broadcast %cst_196 : f32 to vector<5x64xf32>
    %442 = arith.cmpf olt, %412, %441 : vector<5x64xf32>
    %cst_197 = arith.constant 0.000000e+00 : f32
    %443 = vector.broadcast %cst_197 : f32 to vector<5x64xf32>
    %444 = arith.subf %443, %440 : vector<5x64xf32>
    %445 = arith.select %442, %444, %440 : vector<5x64xi1>, vector<5x64xf32>
    %cst_198 = arith.constant 1.000000e+00 : f32
    %446 = vector.broadcast %cst_198 : f32 to vector<5x64xf32>
    %447 = arith.addf %446, %445 : vector<5x64xf32>
    %448 = arith.mulf %410, %447 : vector<5x64xf32>
    %c1_199 = arith.constant 1 : index
    %c0_200 = arith.constant 0 : index
    %c0_201 = arith.constant 0 : index
    %449 = vector.load %arg18[%c1_199, %c0_200, %c0_201] : memref<2x64x32xbf16, #tpu.memory_space<vmem>>, vector<1x64x32xbf16>
    %450 = vector.shape_cast %449 : vector<1x64x32xbf16> to vector<64x32xbf16>
    %451 = arith.truncf %448 : vector<5x64xf32> to vector<5x64xbf16>
    %cst_202 = arith.constant dense<0.000000e+00> : vector<5x32xf32>
    %452 = tpu.matmul %451, %450, %cst_202 {dimension_numbers = #tpu.dot_dimension_numbers<[1], [0], [0], [1], [0, 0, 1, 1], [], []>} : vector<5x64xbf16>, vector<64x32xbf16>, vector<5x32xf32> -> vector<5x32xf32>
    %c1_203 = arith.constant 1 : index
    %c0_204 = arith.constant 0 : index
    %c0_205 = arith.constant 0 : index
    %453 = vector.load %arg19[%c1_203, %c0_204, %c0_205] : memref<2x1x32xf32, #tpu.memory_space<vmem>>, vector<1x1x32xf32>
    %454 = vector.shape_cast %453 : vector<1x1x32xf32> to vector<1x32xf32>
    %455 = vector.broadcast %454 : vector<1x32xf32> to vector<5x32xf32>
    %456 = arith.addf %452, %455 : vector<5x32xf32>
    %457 = arith.addf %245, %456 : vector<5x32xf32>
    %458 = vector.extract_strided_slice %457 {offsets = [4, 0], sizes = [1, 32], strides = [1, 1]} : vector<5x32xf32> to vector<1x32xf32>
    %c0_206 = arith.constant 0 : index
    %c0_207 = arith.constant 0 : index
    %459 = vector.load %arg20[%c0_206, %c0_207] : memref<1x32xf32, #tpu.memory_space<vmem>>, vector<1x32xf32>
    %c0_208 = arith.constant 0 : index
    %c0_209 = arith.constant 0 : index
    %460 = vector.load %arg21[%c0_208, %c0_209] : memref<1x32xf32, #tpu.memory_space<vmem>>, vector<1x32xf32>
    %cst_210 = arith.constant dense<0.000000e+00> : vector<1xf32>
    %461 = vector.multi_reduction <add>, %458, %cst_210 [1] : vector<1x32xf32> to vector<1xf32>
    %462 = vector.shape_cast %461 : vector<1xf32> to vector<1x1xf32>
    %cst_211 = arith.constant 3.200000e+01 : f32
    %463 = vector.broadcast %cst_211 : f32 to vector<1x1xf32>
    %464 = arith.divf %462, %463 : vector<1x1xf32>
    %465 = vector.broadcast %464 : vector<1x1xf32> to vector<1x32xf32>
    %466 = arith.subf %458, %465 : vector<1x32xf32>
    %467 = arith.mulf %466, %466 : vector<1x32xf32>
    %cst_212 = arith.constant dense<0.000000e+00> : vector<1xf32>
    %468 = vector.multi_reduction <add>, %467, %cst_212 [1] : vector<1x32xf32> to vector<1xf32>
    %469 = vector.shape_cast %468 : vector<1xf32> to vector<1x1xf32>
    %cst_213 = arith.constant 3.200000e+01 : f32
    %470 = vector.broadcast %cst_213 : f32 to vector<1x1xf32>
    %471 = arith.divf %469, %470 : vector<1x1xf32>
    %cst_214 = arith.constant 9.99999974E-6 : f32
    %472 = vector.broadcast %cst_214 : f32 to vector<1x1xf32>
    %473 = arith.addf %471, %472 : vector<1x1xf32>
    %474 = math.rsqrt %473 : vector<1x1xf32>
    %475 = vector.broadcast %474 : vector<1x1xf32> to vector<1x32xf32>
    %476 = arith.mulf %466, %475 : vector<1x32xf32>
    %477 = arith.mulf %476, %459 : vector<1x32xf32>
    %478 = arith.addf %477, %460 : vector<1x32xf32>
    %c0_215 = arith.constant 0 : index
    %c0_216 = arith.constant 0 : index
    %479 = vector.load %arg22[%c0_215, %c0_216] : memref<32x10xbf16, #tpu.memory_space<vmem>>, vector<32x10xbf16>
    %480 = arith.truncf %478 : vector<1x32xf32> to vector<1x32xbf16>
    %cst_217 = arith.constant dense<0.000000e+00> : vector<1x10xf32>
    %481 = tpu.matmul %480, %479, %cst_217 {dimension_numbers = #tpu.dot_dimension_numbers<[1], [0], [0], [1], [0, 0, 1, 1], [], []>} : vector<1x32xbf16>, vector<32x10xbf16>, vector<1x10xf32> -> vector<1x10xf32>
    %c0_218 = arith.constant 0 : index
    %c0_219 = arith.constant 0 : index
    %482 = vector.load %arg23[%c0_218, %c0_219] : memref<1x10xf32, #tpu.memory_space<vmem>>, vector<1x10xf32>
    %483 = arith.addf %481, %482 : vector<1x10xf32>
    %c0_220 = arith.constant 0 : index
    %c0_221 = arith.constant 0 : index
    %c0_222 = arith.constant 0 : index
    %484 = vector.load %arg24[%c0_220, %c0_221, %c0_222] : memref<1x1x10xf32, #tpu.memory_space<vmem>>, vector<1x1x10xf32>
    %485 = vector.shape_cast %484 : vector<1x1x10xf32> to vector<1x10xf32>
    %486 = vector.shape_cast %483 : vector<1x10xf32> to vector<1x1x10xf32>
    tpu.vector_store %arg24[%c0_220, %c0_221, %c0_222], %486 {strides = array<i32>} : memref<1x1x10xf32, #tpu.memory_space<vmem>>, vector<1x1x10xf32>,
    return
  }
  func.func @transform_0(%arg0: i32) -> (i32, i32, i32) {
    %c0_i32 = arith.constant 0 : i32
    %c0_i32_0 = arith.constant 0 : i32
    %c0_i32_1 = arith.constant 0 : i32
    return %arg0, %c0_i32, %c0_i32_0 : i32, i32, i32
  }
  func.func @transform_1(%arg0: i32) -> (i32, i32) {
    %c0_i32 = arith.constant 0 : i32
    %c0_i32_0 = arith.constant 0 : i32
    %c0_i32_1 = arith.constant 0 : i32
    return %c0_i32, %c0_i32_0 : i32, i32
  }
  func.func @transform_2(%arg0: i32) -> (i32, i32) {
    %c0_i32 = arith.constant 0 : i32
    %c0_i32_0 = arith.constant 0 : i32
    %c0_i32_1 = arith.constant 0 : i32
    return %c0_i32, %c0_i32_0 : i32, i32
  }
  func.func @transform_3(%arg0: i32) -> (i32, i32) {
    %c0_i32 = arith.constant 0 : i32
    %c0_i32_0 = arith.constant 0 : i32
    %c0_i32_1 = arith.constant 0 : i32
    return %c0_i32, %c0_i32_0 : i32, i32
  }
  func.func @transform_4(%arg0: i32) -> (i32, i32) {
    %c0_i32 = arith.constant 0 : i32
    %c0_i32_0 = arith.constant 0 : i32
    %c0_i32_1 = arith.constant 0 : i32
    return %c0_i32, %c0_i32_0 : i32, i32
  }
  func.func @transform_5(%arg0: i32) -> (i32, i32) {
    %c0_i32 = arith.constant 0 : i32
    %c0_i32_0 = arith.constant 0 : i32
    %c0_i32_1 = arith.constant 0 : i32
    return %c0_i32, %c0_i32_0 : i32, i32
  }
  func.func @transform_6(%arg0: i32) -> (i32, i32) {
    %c0_i32 = arith.constant 0 : i32
    %c0_i32_0 = arith.constant 0 : i32
    %c0_i32_1 = arith.constant 0 : i32
    return %c0_i32, %c0_i32_0 : i32, i32
  }
  func.func @transform_7(%arg0: i32) -> (i32, i32, i32) {
    %c0_i32 = arith.constant 0 : i32
    %c0_i32_0 = arith.constant 0 : i32
    %c0_i32_1 = arith.constant 0 : i32
    %c0_i32_2 = arith.constant 0 : i32
    return %c0_i32, %c0_i32_0, %c0_i32_1 : i32, i32, i32
  }
  func.func @transform_8(%arg0: i32) -> (i32, i32, i32) {
    %c0_i32 = arith.constant 0 : i32
    %c0_i32_0 = arith.constant 0 : i32
    %c0_i32_1 = arith.constant 0 : i32
    %c0_i32_2 = arith.constant 0 : i32
    return %c0_i32, %c0_i32_0, %c0_i32_1 : i32, i32, i32
  }
  func.func @transform_9(%arg0: i32) -> (i32, i32, i32) {
    %c0_i32 = arith.constant 0 : i32
    %c0_i32_0 = arith.constant 0 : i32
    %c0_i32_1 = arith.constant 0 : i32
    %c0_i32_2 = arith.constant 0 : i32
    return %c0_i32, %c0_i32_0, %c0_i32_1 : i32, i32, i32
  }
  func.func @transform_10(%arg0: i32) -> (i32, i32, i32) {
    %c0_i32 = arith.constant 0 : i32
    %c0_i32_0 = arith.constant 0 : i32
    %c0_i32_1 = arith.constant 0 : i32
    %c0_i32_2 = arith.constant 0 : i32
    return %c0_i32, %c0_i32_0, %c0_i32_1 : i32, i32, i32
  }
  func.func @transform_11(%arg0: i32) -> (i32, i32, i32) {
    %c0_i32 = arith.constant 0 : i32
    %c0_i32_0 = arith.constant 0 : i32
    %c0_i32_1 = arith.constant 0 : i32
    %c0_i32_2 = arith.constant 0 : i32
    return %c0_i32, %c0_i32_0, %c0_i32_1 : i32, i32, i32
  }
  func.func @transform_12(%arg0: i32) -> (i32, i32, i32) {
    %c0_i32 = arith.constant 0 : i32
    %c0_i32_0 = arith.constant 0 : i32
    %c0_i32_1 = arith.constant 0 : i32
    %c0_i32_2 = arith.constant 0 : i32
    return %c0_i32, %c0_i32_0, %c0_i32_1 : i32, i32, i32
  }
  func.func @transform_13(%arg0: i32) -> (i32, i32, i32) {
    %c0_i32 = arith.constant 0 : i32
    %c0_i32_0 = arith.constant 0 : i32
    %c0_i32_1 = arith.constant 0 : i32
    %c0_i32_2 = arith.constant 0 : i32
    return %c0_i32, %c0_i32_0, %c0_i32_1 : i32, i32, i32
  }
  func.func @transform_14(%arg0: i32) -> (i32, i32, i32) {
    %c0_i32 = arith.constant 0 : i32
    %c0_i32_0 = arith.constant 0 : i32
    %c0_i32_1 = arith.constant 0 : i32
    %c0_i32_2 = arith.constant 0 : i32
    return %c0_i32, %c0_i32_0, %c0_i32_1 : i32, i32, i32
  }
  func.func @transform_15(%arg0: i32) -> (i32, i32, i32) {
    %c0_i32 = arith.constant 0 : i32
    %c0_i32_0 = arith.constant 0 : i32
    %c0_i32_1 = arith.constant 0 : i32
    %c0_i32_2 = arith.constant 0 : i32
    return %c0_i32, %c0_i32_0, %c0_i32_1 : i32, i32, i32
  }
  func.func @transform_16(%arg0: i32) -> (i32, i32, i32) {
    %c0_i32 = arith.constant 0 : i32
    %c0_i32_0 = arith.constant 0 : i32
    %c0_i32_1 = arith.constant 0 : i32
    %c0_i32_2 = arith.constant 0 : i32
    return %c0_i32, %c0_i32_0, %c0_i32_1 : i32, i32, i32
  }
  func.func @transform_17(%arg0: i32) -> (i32, i32, i32) {
    %c0_i32 = arith.constant 0 : i32
    %c0_i32_0 = arith.constant 0 : i32
    %c0_i32_1 = arith.constant 0 : i32
    %c0_i32_2 = arith.constant 0 : i32
    return %c0_i32, %c0_i32_0, %c0_i32_1 : i32, i32, i32
  }
  func.func @transform_18(%arg0: i32) -> (i32, i32, i32) {
    %c0_i32 = arith.constant 0 : i32
    %c0_i32_0 = arith.constant 0 : i32
    %c0_i32_1 = arith.constant 0 : i32
    %c0_i32_2 = arith.constant 0 : i32
    return %c0_i32, %c0_i32_0, %c0_i32_1 : i32, i32, i32
  }
  func.func @transform_19(%arg0: i32) -> (i32, i32) {
    %c0_i32 = arith.constant 0 : i32
    %c0_i32_0 = arith.constant 0 : i32
    %c0_i32_1 = arith.constant 0 : i32
    return %c0_i32, %c0_i32_0 : i32, i32
  }
  func.func @transform_20(%arg0: i32) -> (i32, i32) {
    %c0_i32 = arith.constant 0 : i32
    %c0_i32_0 = arith.constant 0 : i32
    %c0_i32_1 = arith.constant 0 : i32
    return %c0_i32, %c0_i32_0 : i32, i32
  }
  func.func @transform_21(%arg0: i32) -> (i32, i32) {
    %c0_i32 = arith.constant 0 : i32
    %c0_i32_0 = arith.constant 0 : i32
    %c0_i32_1 = arith.constant 0 : i32
    return %c0_i32, %c0_i32_0 : i32, i32
  }
  func.func @transform_22(%arg0: i32) -> (i32, i32) {
    %c0_i32 = arith.constant 0 : i32
    %c0_i32_0 = arith.constant 0 : i32
    %c0_i32_1 = arith.constant 0 : i32
    return %c0_i32, %c0_i32_0 : i32, i32
  }
  func.func @transform_23(%arg0: i32) -> (i32, i32, i32) {
    %c0_i32 = arith.constant 0 : i32
    %c0_i32_0 = arith.constant 0 : i32
    %c0_i32_1 = arith.constant 0 : i32
    return %arg0, %c0_i32, %c0_i32_0 : i32, i32, i32
  }
}

</mosaic_0001>

<llo_original>
// kernel: vibased_forward.1
$region0: #{vibased_forward.1}
  #allocation0 [shape = 'u32[]', space=smem, size = 0x4, offset = 0x4, fixed_abs, tag = 'smem constant byte address 0x4 - core index']
  #allocation1 [shape = 'u32[144,128]{1,0:T(1,128)}', space=vmem, size = 0x12000, scoped, tag = 'internal scratch']
  %s0 = inlined_call_operand.vmem [shape: f32[2,4,240], index: 0, kind: input, shape index: {}]
  %s1 = inlined_call_operand.vmem [shape: f32[1,240], index: 1, kind: input, shape index: {}]
  %s2 = inlined_call_operand.vmem [shape: f32[1,240], index: 2, kind: input, shape index: {}]
  %s3 = inlined_call_operand.vmem [shape: bf16[240,32], index: 3, kind: input, shape index: {}]
  %s4 = inlined_call_operand.vmem [shape: f32[1,32], index: 4, kind: input, shape index: {}]
  %s5 = inlined_call_operand.vmem [shape: f32[1,32], index: 5, kind: input, shape index: {}]
  %s6 = inlined_call_operand.vmem [shape: f32[5,32], index: 6, kind: input, shape index: {}]
  %s7 = inlined_call_operand.vmem [shape: f32[2,1,32], index: 7, kind: input, shape index: {}]
  %s8 = inlined_call_operand.vmem [shape: f32[2,1,32], index: 8, kind: input, shape index: {}]
  %s9 = inlined_call_operand.vmem [shape: f32[2,3,32], index: 9, kind: input, shape index: {}]
  %s10 = inlined_call_operand.vmem [shape: f32[2,1,32], index: 10, kind: input, shape index: {}]
  %s11 = inlined_call_operand.vmem [shape: bf16[2,32,32], index: 11, kind: input, shape index: {}]
  %s12 = inlined_call_operand.vmem [shape: f32[2,1,32], index: 12, kind: input, shape index: {}]
  %s13 = inlined_call_operand.vmem [shape: bf16[2,32,64], index: 13, kind: input, shape index: {}]
  %s14 = inlined_call_operand.vmem [shape: bf16[2,32,32], index: 14, kind: input, shape index: {}]
  %s15 = inlined_call_operand.vmem [shape: bf16[2,32,64], index: 15, kind: input, shape index: {}]
  %s16 = inlined_call_operand.vmem [shape: f32[2,1,64], index: 16, kind: input, shape index: {}]
  %s17 = inlined_call_operand.vmem [shape: bf16[2,64,32], index: 17, kind: input, shape index: {}]
  %s18 = inlined_call_operand.vmem [shape: f32[2,1,32], index: 18, kind: input, shape index: {}]
  %s19 = inlined_call_operand.vmem [shape: f32[1,32], index: 19, kind: input, shape index: {}]
  %s20 = inlined_call_operand.vmem [shape: f32[1,32], index: 20, kind: input, shape index: {}]
  %s21 = inlined_call_operand.vmem [shape: bf16[32,10], index: 21, kind: input, shape index: {}]
  %s22 = inlined_call_operand.vmem [shape: f32[1,10], index: 22, kind: input, shape index: {}]
  %s23 = inlined_call_operand.hbm [shape: f32[2,1,10], index: 23, kind: output, shape index: {}]
  %s24 = sld [smem:[#allocation0]]
  $region125: #{vibased_forward.1} parent=0
    _
  %s26 = ssub.s32 1, %s24
  %s27 = scalar_select 0, %s26, %s24
  $region1: #{vibased_forward.1} parent=0
    #allocation2 [shape = 'u8[1024]{0}', space=vmem, size = 0x400, scoped, tag = 'output window, operand 0']
    #allocation3 [shape = 's32[2]{0}', space=sflag, size = 0x8, scoped, tag = 'scoped memory for vibased_forward.1']
    %28 = vsyncpa [#allocation3], 0
    %s29 = scalar_lea.sflag [#allocation3], 1
    %30 = vsyncpa %s29, 0
    loop: start=0, step=1, limit=4
    $region2: #{vibased_forward.1} parent=1 // loop_pre_header
      _
    $region3: #{vibased_forward.1} parent=1 // loop_header
      %s32 = sphi 0, %s36
      %p33 = scmp.ge.s32.totalorder %s32, 4
      %s42 = sphi 0, %s44
      %s45 = sphi 0, %s42
      %s46 = sphi 0, %s45
      %s62 = sphi 0, %s46
      %s66 = sphi 0, %s66
      %s68 = sphi 0, %s66
      %s69 = sphi 0, %s68
      %s83 = sphi 0, %s69
      %s87 = sphi 0, %s87
      %s89 = sphi 0, %s87
      %s90 = sphi 0, %s89
      %s104 = sphi 0, %s90
      %s108 = sphi 0, %s108
      %s110 = sphi 0, %s108
      %s111 = sphi 0, %s110
      %s125 = sphi 0, %s111
      %s129 = sphi 0, %s129
      %s131 = sphi 0, %s129
      %s132 = sphi 0, %s131
      %s146 = sphi 0, %s132
      %s150 = sphi 0, %s150
      %s152 = sphi 0, %s150
      %s153 = sphi 0, %s152
      %s167 = sphi 0, %s153
      %s171 = sphi 0, %s171
      %s173 = sphi 0, %s171
      %s174 = sphi 0, %s173
      %s188 = sphi 0, %s174
      %s192 = sphi 0, %s192
      %s194 = sphi 0, %s192
      %s195 = sphi 0, %s194
      %s209 = sphi 0, %s195
      %s213 = sphi 0, %s213
      %s215 = sphi 0, %s213
      %s216 = sphi 0, %s215
      %s230 = sphi 0, %s216
      %s234 = sphi 0, %s234
      %s236 = sphi 0, %s234
      %s237 = sphi 0, %s236
      %s251 = sphi 0, %s237
      %s255 = sphi 0, %s255
      %s257 = sphi 0, %s255
      %s258 = sphi 0, %s257
      %s272 = sphi 0, %s258
      %s276 = sphi 0, %s276
      %s278 = sphi 0, %s276
      %s279 = sphi 0, %s278
      %s293 = sphi 0, %s279
      %s297 = sphi 0, %s297
      %s299 = sphi 0, %s297
      %s300 = sphi 0, %s299
      %s314 = sphi 0, %s300
      %s318 = sphi 0, %s318
      %s320 = sphi 0, %s318
      %s321 = sphi 0, %s320
      %s335 = sphi 0, %s321
      %s339 = sphi 0, %s339
      %s341 = sphi 0, %s339
      %s342 = sphi 0, %s341
      %s356 = sphi 0, %s342
      %s360 = sphi 0, %s360
      %s362 = sphi 0, %s360
      %s363 = sphi 0, %s362
      %s377 = sphi 0, %s363
      %s381 = sphi 0, %s381
      %s383 = sphi 0, %s381
      %s384 = sphi 0, %s383
      %s398 = sphi 0, %s384
      %s402 = sphi 0, %s402
      %s404 = sphi 0, %s402
      %s405 = sphi 0, %s404
      %s419 = sphi 0, %s405
      %s423 = sphi 0, %s423
      %s425 = sphi 0, %s423
      %s426 = sphi 0, %s425
      %s440 = sphi 0, %s426
      %s444 = sphi 0, %s444
      %s446 = sphi 0, %s444
      %s447 = sphi 0, %s446
      %s461 = sphi 0, %s447
      %s465 = sphi 0, %s465
      %s467 = sphi 0, %s465
      %s468 = sphi 0, %s467
      %s482 = sphi 0, %s468
      %s486 = sphi 0, %s486
      %s488 = sphi 0, %s486
      %s489 = sphi 0, %s488
      %s503 = sphi 0, %s489
      %s507 = sphi 0, %s507
      %s509 = sphi 0, %s507
      %s510 = sphi 0, %s509
      %s524 = sphi 0, %s510
      %s530 = sphi 0, %s532
      %s533 = sphi 0, %s530
      %s534 = sphi 0, %s533
      %s550 = sphi 0, %s534
    $region4: #{vibased_forward.1} parent=1 // loop_header_branch
      %35 = sbr.rel (%p33) target = $region8
    $region5: #{vibased_forward.1} parent=1 // loop_body
      %s37 = ssub.s32 %s32, 1
      %s38 = ssub.s32 %s32, 2
      %s39 = sadd.s32 %s32, 1
      %s40 = ssub.s32 %s32, %s39
      %p41 = scmp.eq.s32.totalorder %s40, 0
      %s43 = sadd.s32 %s42, 1
      %s44 = scalar_select %p41, %s42, %s43
      %p47 = pneg %p41
      %p48 = scmp.eq.s32.totalorder %s32, 1
      %p49 = por %p47, %p48
      %p50 = scmp.ne.s32.totalorder %s42, %s45
      %p51 = scmp.eq.s32.totalorder %s32, 0
      %p52 = por %p50, %p51
      %p53 = scmp.ne.s32.totalorder %s42, %s45
      %p54 = scmp.eq.s32.totalorder %s37, 1
      %p55 = por %p53, %p54
      %p56 = scmp.ne.s32.totalorder %s45, %s46
      %p57 = scmp.eq.s32.totalorder %s37, 0
      %p58 = por %p56, %p57
      %p59 = scmp.ne.s32.totalorder %s45, %s46
      %p60 = scmp.eq.s32.totalorder %s38, 1
      %p61 = por %p59, %p60
      %p63 = scmp.ne.s32.totalorder %s46, %s62
      %p64 = scmp.eq.s32.totalorder %s38, 0
      %p65 = por %p63, %p64
      %s67 = sadd.s32 %s66, 1
      %p70 = scmp.eq.s32.totalorder %s32, 1
      %p71 = scmp.ne.s32.totalorder %s66, %s68
      %p72 = scmp.eq.s32.totalorder %s32, 0
      %p73 = por %p71, %p72
      %p74 = scmp.ne.s32.totalorder %s66, %s68
      %p75 = scmp.eq.s32.totalorder %s37, 1
      %p76 = por %p74, %p75
      %p77 = scmp.ne.s32.totalorder %s68, %s69
      %p78 = scmp.eq.s32.totalorder %s37, 0
      %p79 = por %p77, %p78
      %p80 = scmp.ne.s32.totalorder %s68, %s69
      %p81 = scmp.eq.s32.totalorder %s38, 1
      %p82 = por %p80, %p81
      %p84 = scmp.ne.s32.totalorder %s69, %s83
      %p85 = scmp.eq.s32.totalorder %s38, 0
      %p86 = por %p84, %p85
      %s88 = sadd.s32 %s87, 1
      %p91 = scmp.eq.s32.totalorder %s32, 1
      %p92 = scmp.ne.s32.totalorder %s87, %s89
      %p93 = scmp.eq.s32.totalorder %s32, 0
      %p94 = por %p92, %p93
      %p95 = scmp.ne.s32.totalorder %s87, %s89
      %p96 = scmp.eq.s32.totalorder %s37, 1
      %p97 = por %p95, %p96
      %p98 = scmp.ne.s32.totalorder %s89, %s90
      %p99 = scmp.eq.s32.totalorder %s37, 0
      %p100 = por %p98, %p99
      %p101 = scmp.ne.s32.totalorder %s89, %s90
      %p102 = scmp.eq.s32.totalorder %s38, 1
      %p103 = por %p101, %p102
      %p105 = scmp.ne.s32.totalorder %s90, %s104
      %p106 = scmp.eq.s32.totalorder %s38, 0
      %p107 = por %p105, %p106
      %s109 = sadd.s32 %s108, 1
      %p112 = scmp.eq.s32.totalorder %s32, 1
      %p113 = scmp.ne.s32.totalorder %s108, %s110
      %p114 = scmp.eq.s32.totalorder %s32, 0
      %p115 = por %p113, %p114
      %p116 = scmp.ne.s32.totalorder %s108, %s110
      %p117 = scmp.eq.s32.totalorder %s37, 1
      %p118 = por %p116, %p117
      %p119 = scmp.ne.s32.totalorder %s110, %s111
      %p120 = scmp.eq.s32.totalorder %s37, 0
      %p121 = por %p119, %p120
      %p122 = scmp.ne.s32.totalorder %s110, %s111
      %p123 = scmp.eq.s32.totalorder %s38, 1
      %p124 = por %p122, %p123
      %p126 = scmp.ne.s32.totalorder %s111, %s125
      %p127 = scmp.eq.s32.totalorder %s38, 0
      %p128 = por %p126, %p127
      %s130 = sadd.s32 %s129, 1
      %p133 = scmp.eq.s32.totalorder %s32, 1
      %p134 = scmp.ne.s32.totalorder %s129, %s131
      %p135 = scmp.eq.s32.totalorder %s32, 0
      %p136 = por %p134, %p135
      %p137 = scmp.ne.s32.totalorder %s129, %s131
      %p138 = scmp.eq.s32.totalorder %s37, 1
      %p139 = por %p137, %p138
      %p140 = scmp.ne.s32.totalorder %s131, %s132
      %p141 = scmp.eq.s32.totalorder %s37, 0
      %p142 = por %p140, %p141
      %p143 = scmp.ne.s32.totalorder %s131, %s132
      %p144 = scmp.eq.s32.totalorder %s38, 1
      %p145 = por %p143, %p144
      %p147 = scmp.ne.s32.totalorder %s132, %s146
      %p148 = scmp.eq.s32.totalorder %s38, 0
      %p149 = por %p147, %p148
      %s151 = sadd.s32 %s150, 1
      %p154 = scmp.eq.s32.totalorder %s32, 1
      %p155 = scmp.ne.s32.totalorder %s150, %s152
      %p156 = scmp.eq.s32.totalorder %s32, 0
      %p157 = por %p155, %p156
      %p158 = scmp.ne.s32.totalorder %s150, %s152
      %p159 = scmp.eq.s32.totalorder %s37, 1
      %p160 = por %p158, %p159
      %p161 = scmp.ne.s32.totalorder %s152, %s153
      %p162 = scmp.eq.s32.totalorder %s37, 0
      %p163 = por %p161, %p162
      %p164 = scmp.ne.s32.totalorder %s152, %s153
      %p165 = scmp.eq.s32.totalorder %s38, 1
      %p166 = por %p164, %p165
      %p168 = scmp.ne.s32.totalorder %s153, %s167
      %p169 = scmp.eq.s32.totalorder %s38, 0
      %p170 = por %p168, %p169
      %s172 = sadd.s32 %s171, 1
      %p175 = scmp.eq.s32.totalorder %s32, 1
      %p176 = scmp.ne.s32.totalorder %s171, %s173
      %p177 = scmp.eq.s32.totalorder %s32, 0
      %p178 = por %p176, %p177
      %p179 = scmp.ne.s32.totalorder %s171, %s173
      %p180 = scmp.eq.s32.totalorder %s37, 1
      %p181 = por %p179, %p180
      %p182 = scmp.ne.s32.totalorder %s173, %s174
      %p183 = scmp.eq.s32.totalorder %s37, 0
      %p184 = por %p182, %p183
      %p185 = scmp.ne.s32.totalorder %s173, %s174
      %p186 = scmp.eq.s32.totalorder %s38, 1
      %p187 = por %p185, %p186
      %p189 = scmp.ne.s32.totalorder %s174, %s188
      %p190 = scmp.eq.s32.totalorder %s38, 0
      %p191 = por %p189, %p190
      %s193 = sadd.s32 %s192, 1
      %p196 = scmp.eq.s32.totalorder %s32, 1
      %p197 = scmp.ne.s32.totalorder %s192, %s194
      %p198 = scmp.eq.s32.totalorder %s32, 0
      %p199 = por %p197, %p198
      %p200 = scmp.ne.s32.totalorder %s192, %s194
      %p201 = scmp.eq.s32.totalorder %s37, 1
      %p202 = por %p200, %p201
      %p203 = scmp.ne.s32.totalorder %s194, %s195
      %p204 = scmp.eq.s32.totalorder %s37, 0
      %p205 = por %p203, %p204
      %p206 = scmp.ne.s32.totalorder %s194, %s195
      %p207 = scmp.eq.s32.totalorder %s38, 1
      %p208 = por %p206, %p207
      %p210 = scmp.ne.s32.totalorder %s195, %s209
      %p211 = scmp.eq.s32.totalorder %s38, 0
      %p212 = por %p210, %p211
      %s214 = sadd.s32 %s213, 1
      %p217 = scmp.eq.s32.totalorder %s32, 1
      %p218 = scmp.ne.s32.totalorder %s213, %s215
      %p219 = scmp.eq.s32.totalorder %s32, 0
      %p220 = por %p218, %p219
      %p221 = scmp.ne.s32.totalorder %s213, %s215
      %p222 = scmp.eq.s32.totalorder %s37, 1
      %p223 = por %p221, %p222
      %p224 = scmp.ne.s32.totalorder %s215, %s216
      %p225 = scmp.eq.s32.totalorder %s37, 0
      %p226 = por %p224, %p225
      %p227 = scmp.ne.s32.totalorder %s215, %s216
      %p228 = scmp.eq.s32.totalorder %s38, 1
      %p229 = por %p227, %p228
      %p231 = scmp.ne.s32.totalorder %s216, %s230
      %p232 = scmp.eq.s32.totalorder %s38, 0
      %p233 = por %p231, %p232
      %s235 = sadd.s32 %s234, 1
      %p238 = scmp.eq.s32.totalorder %s32, 1
      %p239 = scmp.ne.s32.totalorder %s234, %s236
      %p240 = scmp.eq.s32.totalorder %s32, 0
      %p241 = por %p239, %p240
      %p242 = scmp.ne.s32.totalorder %s234, %s236
      %p243 = scmp.eq.s32.totalorder %s37, 1
      %p244 = por %p242, %p243
      %p245 = scmp.ne.s32.totalorder %s236, %s237
      %p246 = scmp.eq.s32.totalorder %s37, 0
      %p247 = por %p245, %p246
      %p248 = scmp.ne.s32.totalorder %s236, %s237
      %p249 = scmp.eq.s32.totalorder %s38, 1
      %p250 = por %p248, %p249
      %p252 = scmp.ne.s32.totalorder %s237, %s251
      %p253 = scmp.eq.s32.totalorder %s38, 0
      %p254 = por %p252, %p253
      %s256 = sadd.s32 %s255, 1
      %p259 = scmp.eq.s32.totalorder %s32, 1
      %p260 = scmp.ne.s32.totalorder %s255, %s257
      %p261 = scmp.eq.s32.totalorder %s32, 0
      %p262 = por %p260, %p261
      %p263 = scmp.ne.s32.totalorder %s255, %s257
      %p264 = scmp.eq.s32.totalorder %s37, 1
      %p265 = por %p263, %p264
      %p266 = scmp.ne.s32.totalorder %s257, %s258
      %p267 = scmp.eq.s32.totalorder %s37, 0
      %p268 = por %p266, %p267
      %p269 = scmp.ne.s32.totalorder %s257, %s258
      %p270 = scmp.eq.s32.totalorder %s38, 1
      %p271 = por %p269, %p270
      %p273 = scmp.ne.s32.totalorder %s258, %s272
      %p274 = scmp.eq.s32.totalorder %s38, 0
      %p275 = por %p273, %p274
      %s277 = sadd.s32 %s276, 1
      %p280 = scmp.eq.s32.totalorder %s32, 1
      %p281 = scmp.ne.s32.totalorder %s276, %s278
      %p282 = scmp.eq.s32.totalorder %s32, 0
      %p283 = por %p281, %p282
      %p284 = scmp.ne.s32.totalorder %s276, %s278
      %p285 = scmp.eq.s32.totalorder %s37, 1
      %p286 = por %p284, %p285
      %p287 = scmp.ne.s32.totalorder %s278, %s279
      %p288 = scmp.eq.s32.totalorder %s37, 0
      %p289 = por %p287, %p288
      %p290 = scmp.ne.s32.totalorder %s278, %s279
      %p291 = scmp.eq.s32.totalorder %s38, 1
      %p292 = por %p290, %p291
      %p294 = scmp.ne.s32.totalorder %s279, %s293
      %p295 = scmp.eq.s32.totalorder %s38, 0
      %p296 = por %p294, %p295
      %s298 = sadd.s32 %s297, 1
      %p301 = scmp.eq.s32.totalorder %s32, 1
      %p302 = scmp.ne.s32.totalorder %s297, %s299
      %p303 = scmp.eq.s32.totalorder %s32, 0
      %p304 = por %p302, %p303
      %p305 = scmp.ne.s32.totalorder %s297, %s299
      %p306 = scmp.eq.s32.totalorder %s37, 1
      %p307 = por %p305, %p306
      %p308 = scmp.ne.s32.totalorder %s299, %s300
      %p309 = scmp.eq.s32.totalorder %s37, 0
      %p310 = por %p308, %p309
      %p311 = scmp.ne.s32.totalorder %s299, %s300
      %p312 = scmp.eq.s32.totalorder %s38, 1
      %p313 = por %p311, %p312
      %p315 = scmp.ne.s32.totalorder %s300, %s314
      %p316 = scmp.eq.s32.totalorder %s38, 0
      %p317 = por %p315, %p316
      %s319 = sadd.s32 %s318, 1
      %p322 = scmp.eq.s32.totalorder %s32, 1
      %p323 = scmp.ne.s32.totalorder %s318, %s320
      %p324 = scmp.eq.s32.totalorder %s32, 0
      %p325 = por %p323, %p324
      %p326 = scmp.ne.s32.totalorder %s318, %s320
      %p327 = scmp.eq.s32.totalorder %s37, 1
      %p328 = por %p326, %p327
      %p329 = scmp.ne.s32.totalorder %s320, %s321
      %p330 = scmp.eq.s32.totalorder %s37, 0
      %p331 = por %p329, %p330
      %p332 = scmp.ne.s32.totalorder %s320, %s321
      %p333 = scmp.eq.s32.totalorder %s38, 1
      %p334 = por %p332, %p333
      %p336 = scmp.ne.s32.totalorder %s321, %s335
      %p337 = scmp.eq.s32.totalorder %s38, 0
      %p338 = por %p336, %p337
      %s340 = sadd.s32 %s339, 1
      %p343 = scmp.eq.s32.totalorder %s32, 1
      %p344 = scmp.ne.s32.totalorder %s339, %s341
      %p345 = scmp.eq.s32.totalorder %s32, 0
      %p346 = por %p344, %p345
      %p347 = scmp.ne.s32.totalorder %s339, %s341
      %p348 = scmp.eq.s32.totalorder %s37, 1
      %p349 = por %p347, %p348
      %p350 = scmp.ne.s32.totalorder %s341, %s342
      %p351 = scmp.eq.s32.totalorder %s37, 0
      %p352 = por %p350, %p351
      %p353 = scmp.ne.s32.totalorder %s341, %s342
      %p354 = scmp.eq.s32.totalorder %s38, 1
      %p355 = por %p353, %p354
      %p357 = scmp.ne.s32.totalorder %s342, %s356
      %p358 = scmp.eq.s32.totalorder %s38, 0
      %p359 = por %p357, %p358
      %s361 = sadd.s32 %s360, 1
      %p364 = scmp.eq.s32.totalorder %s32, 1
      %p365 = scmp.ne.s32.totalorder %s360, %s362
      %p366 = scmp.eq.s32.totalorder %s32, 0
      %p367 = por %p365, %p366
      %p368 = scmp.ne.s32.totalorder %s360, %s362
      %p369 = scmp.eq.s32.totalorder %s37, 1
      %p370 = por %p368, %p369
      %p371 = scmp.ne.s32.totalorder %s362, %s363
      %p372 = scmp.eq.s32.totalorder %s37, 0
      %p373 = por %p371, %p372
      %p374 = scmp.ne.s32.totalorder %s362, %s363
      %p375 = scmp.eq.s32.totalorder %s38, 1
      %p376 = por %p374, %p375
      %p378 = scmp.ne.s32.totalorder %s363, %s377
      %p379 = scmp.eq.s32.totalorder %s38, 0
      %p380 = por %p378, %p379
      %s382 = sadd.s32 %s381, 1
      %p385 = scmp.eq.s32.totalorder %s32, 1
      %p386 = scmp.ne.s32.totalorder %s381, %s383
      %p387 = scmp.eq.s32.totalorder %s32, 0
      %p388 = por %p386, %p387
      %p389 = scmp.ne.s32.totalorder %s381, %s383
      %p390 = scmp.eq.s32.totalorder %s37, 1
      %p391 = por %p389, %p390
      %p392 = scmp.ne.s32.totalorder %s383, %s384
      %p393 = scmp.eq.s32.totalorder %s37, 0
      %p394 = por %p392, %p393
      %p395 = scmp.ne.s32.totalorder %s383, %s384
      %p396 = scmp.eq.s32.totalorder %s38, 1
      %p397 = por %p395, %p396
      %p399 = scmp.ne.s32.totalorder %s384, %s398
      %p400 = scmp.eq.s32.totalorder %s38, 0
      %p401 = por %p399, %p400
      %s403 = sadd.s32 %s402, 1
      %p406 = scmp.eq.s32.totalorder %s32, 1
      %p407 = scmp.ne.s32.totalorder %s402, %s404
      %p408 = scmp.eq.s32.totalorder %s32, 0
      %p409 = por %p407, %p408
      %p410 = scmp.ne.s32.totalorder %s402, %s404
      %p411 = scmp.eq.s32.totalorder %s37, 1
      %p412 = por %p410, %p411
      %p413 = scmp.ne.s32.totalorder %s404, %s405
      %p414 = scmp.eq.s32.totalorder %s37, 0
      %p415 = por %p413, %p414
      %p416 = scmp.ne.s32.totalorder %s404, %s405
      %p417 = scmp.eq.s32.totalorder %s38, 1
      %p418 = por %p416, %p417
      %p420 = scmp.ne.s32.totalorder %s405, %s419
      %p421 = scmp.eq.s32.totalorder %s38, 0
      %p422 = por %p420, %p421
      %s424 = sadd.s32 %s423, 1
      %p427 = scmp.eq.s32.totalorder %s32, 1
      %p428 = scmp.ne.s32.totalorder %s423, %s425
      %p429 = scmp.eq.s32.totalorder %s32, 0
      %p430 = por %p428, %p429
      %p431 = scmp.ne.s32.totalorder %s423, %s425
      %p432 = scmp.eq.s32.totalorder %s37, 1
      %p433 = por %p431, %p432
      %p434 = scmp.ne.s32.totalorder %s425, %s426
      %p435 = scmp.eq.s32.totalorder %s37, 0
      %p436 = por %p434, %p435
      %p437 = scmp.ne.s32.totalorder %s425, %s426
      %p438 = scmp.eq.s32.totalorder %s38, 1
      %p439 = por %p437, %p438
      %p441 = scmp.ne.s32.totalorder %s426, %s440
      %p442 = scmp.eq.s32.totalorder %s38, 0
      %p443 = por %p441, %p442
      %s445 = sadd.s32 %s444, 1
      %p448 = scmp.eq.s32.totalorder %s32, 1
      %p449 = scmp.ne.s32.totalorder %s444, %s446
      %p450 = scmp.eq.s32.totalorder %s32, 0
      %p451 = por %p449, %p450
      %p452 = scmp.ne.s32.totalorder %s444, %s446
      %p453 = scmp.eq.s32.totalorder %s37, 1
      %p454 = por %p452, %p453
      %p455 = scmp.ne.s32.totalorder %s446, %s447
      %p456 = scmp.eq.s32.totalorder %s37, 0
      %p457 = por %p455, %p456
      %p458 = scmp.ne.s32.totalorder %s446, %s447
      %p459 = scmp.eq.s32.totalorder %s38, 1
      %p460 = por %p458, %p459
      %p462 = scmp.ne.s32.totalorder %s447, %s461
      %p463 = scmp.eq.s32.totalorder %s38, 0
      %p464 = por %p462, %p463
      %s466 = sadd.s32 %s465, 1
      %p469 = scmp.eq.s32.totalorder %s32, 1
      %p470 = scmp.ne.s32.totalorder %s465, %s467
      %p471 = scmp.eq.s32.totalorder %s32, 0
      %p472 = por %p470, %p471
      %p473 = scmp.ne.s32.totalorder %s465, %s467
      %p474 = scmp.eq.s32.totalorder %s37, 1
      %p475 = por %p473, %p474
      %p476 = scmp.ne.s32.totalorder %s467, %s468
      %p477 = scmp.eq.s32.totalorder %s37, 0
      %p478 = por %p476, %p477
      %p479 = scmp.ne.s32.totalorder %s467, %s468
      %p480 = scmp.eq.s32.totalorder %s38, 1
      %p481 = por %p479, %p480
      %p483 = scmp.ne.s32.totalorder %s468, %s482
      %p484 = scmp.eq.s32.totalorder %s38, 0
      %p485 = por %p483, %p484
      %s487 = sadd.s32 %s486, 1
      %p490 = scmp.eq.s32.totalorder %s32, 1
      %p491 = scmp.ne.s32.totalorder %s486, %s488
      %p492 = scmp.eq.s32.totalorder %s32, 0
      %p493 = por %p491, %p492
      %p494 = scmp.ne.s32.totalorder %s486, %s488
      %p495 = scmp.eq.s32.totalorder %s37, 1
      %p496 = por %p494, %p495
      %p497 = scmp.ne.s32.totalorder %s488, %s489
      %p498 = scmp.eq.s32.totalorder %s37, 0
      %p499 = por %p497, %p498
      %p500 = scmp.ne.s32.totalorder %s488, %s489
      %p501 = scmp.eq.s32.totalorder %s38, 1
      %p502 = por %p500, %p501
      %p504 = scmp.ne.s32.totalorder %s489, %s503
      %p505 = scmp.eq.s32.totalorder %s38, 0
      %p506 = por %p504, %p505
      %s508 = sadd.s32 %s507, 1
      %p511 = scmp.eq.s32.totalorder %s32, 1
      %p512 = scmp.ne.s32.totalorder %s507, %s509
      %p513 = scmp.eq.s32.totalorder %s32, 0
      %p514 = por %p512, %p513
      %p515 = scmp.ne.s32.totalorder %s507, %s509
      %p516 = scmp.eq.s32.totalorder %s37, 1
      %p517 = por %p515, %p516
      %p518 = scmp.ne.s32.totalorder %s509, %s510
      %p519 = scmp.eq.s32.totalorder %s37, 0
      %p520 = por %p518, %p519
      %p521 = scmp.ne.s32.totalorder %s509, %s510
      %p522 = scmp.eq.s32.totalorder %s38, 1
      %p523 = por %p521, %p522
      %p525 = scmp.ne.s32.totalorder %s510, %s524
      %p526 = scmp.eq.s32.totalorder %s38, 0
      %p527 = por %p525, %p526
      %s528 = ssub.s32 %s32, %s39
      %p529 = scmp.eq.s32.totalorder %s528, 0
      %s531 = sadd.s32 %s530, 1
      %s532 = scalar_select %p529, %s530, %s531
      %p535 = pneg %p529
      %p536 = scmp.eq.s32.totalorder %s32, 1
      %p537 = por %p535, %p536
      %p538 = scmp.ne.s32.totalorder %s530, %s533
      %p539 = scmp.eq.s32.totalorder %s32, 0
      %p540 = por %p538, %p539
      %p541 = scmp.ne.s32.totalorder %s530, %s533
      %p542 = scmp.eq.s32.totalorder %s37, 1
      %p543 = por %p541, %p542
      %p544 = scmp.ne.s32.totalorder %s533, %s534
      %p545 = scmp.eq.s32.totalorder %s37, 0
      %p546 = por %p544, %p545
      %p547 = scmp.ne.s32.totalorder %s533, %s534
      %p548 = scmp.eq.s32.totalorder %s38, 1
      %p549 = por %p547, %p548
      %p551 = scmp.ne.s32.totalorder %s534, %s550
      %p552 = scmp.eq.s32.totalorder %s38, 0
      %p553 = por %p551, %p552
      %p554 = scmp.le.s32.totalorder 1, %s32
      %p555 = scmp.lt.s32.totalorder %s32, 3
      %p556 = pnand %p554, %p555
      %p557 = pneg %p556
      // Predicated region
      $region9: #{vibased_forward.1} parent=5 // pred_check
        _
      $region10: #{vibased_forward.1} parent=5 // pred_check_branch
        %559 = sbr.rel (%p556) target = $region12
      $region11: #{vibased_forward.1} parent=5 // pred_region
        %s560 = ssub.s32 %s32, 1
        // Predicated region
        $region13: #{vibased_forward.1} parent=11 // pred_check
          %p561 = pneg %p79
        $region14: #{vibased_forward.1} parent=11 // pred_check_branch
          %563 = sbr.rel (%p561) target = $region16
        $region15: #{vibased_forward.1} parent=11 // pred_region
          _
        $region16: #{vibased_forward.1} parent=11 // pred_fallthru
          _
        // Predicated region
        $region17: #{vibased_forward.1} parent=11 // pred_check
          %p564 = pneg %p100
        $region18: #{vibased_forward.1} parent=11 // pred_check_branch
          %566 = sbr.rel (%p564) target = $region20
        $region19: #{vibased_forward.1} parent=11 // pred_region
          _
        $region20: #{vibased_forward.1} parent=11 // pred_fallthru
          _
        // Predicated region
        $region21: #{vibased_forward.1} parent=11 // pred_check
          %p567 = pneg %p121
        $region22: #{vibased_forward.1} parent=11 // pred_check_branch
          %569 = sbr.rel (%p567) target = $region24
        $region23: #{vibased_forward.1} parent=11 // pred_region
          _
        $region24: #{vibased_forward.1} parent=11 // pred_fallthru
          _
        // Predicated region
        $region25: #{vibased_forward.1} parent=11 // pred_check
          %p570 = pneg %p142
        $region26: #{vibased_forward.1} parent=11 // pred_check_branch
          %572 = sbr.rel (%p570) target = $region28
        $region27: #{vibased_forward.1} parent=11 // pred_region
          _
        $region28: #{vibased_forward.1} parent=11 // pred_fallthru
          _
        // Predicated region
        $region29: #{vibased_forward.1} parent=11 // pred_check
          %p573 = pneg %p163
        $region30: #{vibased_forward.1} parent=11 // pred_check_branch
          %575 = sbr.rel (%p573) target = $region32
        $region31: #{vibased_forward.1} parent=11 // pred_region
          _
        $region32: #{vibased_forward.1} parent=11 // pred_fallthru
          _
        // Predicated region
        $region33: #{vibased_forward.1} parent=11 // pred_check
          %p576 = pneg %p184
        $region34: #{vibased_forward.1} parent=11 // pred_check_branch
          %578 = sbr.rel (%p576) target = $region36
        $region35: #{vibased_forward.1} parent=11 // pred_region
          _
        $region36: #{vibased_forward.1} parent=11 // pred_fallthru
          _
        // Predicated region
        $region37: #{vibased_forward.1} parent=11 // pred_check
          %p579 = pneg %p205
        $region38: #{vibased_forward.1} parent=11 // pred_check_branch
          %581 = sbr.rel (%p579) target = $region40
        $region39: #{vibased_forward.1} parent=11 // pred_region
          _
        $region40: #{vibased_forward.1} parent=11 // pred_fallthru
          _
        // Predicated region
        $region41: #{vibased_forward.1} parent=11 // pred_check
          %p582 = pneg %p226
        $region42: #{vibased_forward.1} parent=11 // pred_check_branch
          %584 = sbr.rel (%p582) target = $region44
        $region43: #{vibased_forward.1} parent=11 // pred_region
          _
        $region44: #{vibased_forward.1} parent=11 // pred_fallthru
          _
        // Predicated region
        $region45: #{vibased_forward.1} parent=11 // pred_check
          %p585 = pneg %p247
        $region46: #{vibased_forward.1} parent=11 // pred_check_branch
          %587 = sbr.rel (%p585) target = $region48
        $region47: #{vibased_forward.1} parent=11 // pred_region
          _
        $region48: #{vibased_forward.1} parent=11 // pred_fallthru
          _
        // Predicated region
        $region49: #{vibased_forward.1} parent=11 // pred_check
          %p588 = pneg %p268
        $region50: #{vibased_forward.1} parent=11 // pred_check_branch
          %590 = sbr.rel (%p588) target = $region52
        $region51: #{vibased_forward.1} parent=11 // pred_region
          _
        $region52: #{vibased_forward.1} parent=11 // pred_fallthru
          _
        // Predicated region
        $region53: #{vibased_forward.1} parent=11 // pred_check
          %p591 = pneg %p289
        $region54: #{vibased_forward.1} parent=11 // pred_check_branch
          %593 = sbr.rel (%p591) target = $region56
        $region55: #{vibased_forward.1} parent=11 // pred_region
          _
        $region56: #{vibased_forward.1} parent=11 // pred_fallthru
          _
        // Predicated region
        $region57: #{vibased_forward.1} parent=11 // pred_check
          %p594 = pneg %p310
        $region58: #{vibased_forward.1} parent=11 // pred_check_branch
          %596 = sbr.rel (%p594) target = $region60
        $region59: #{vibased_forward.1} parent=11 // pred_region
          _
        $region60: #{vibased_forward.1} parent=11 // pred_fallthru
          _
        // Predicated region
        $region61: #{vibased_forward.1} parent=11 // pred_check
          %p597 = pneg %p331
        $region62: #{vibased_forward.1} parent=11 // pred_check_branch
          %599 = sbr.rel (%p597) target = $region64
        $region63: #{vibased_forward.1} parent=11 // pred_region
          _
        $region64: #{vibased_forward.1} parent=11 // pred_fallthru
          _
        // Predicated region
        $region65: #{vibased_forward.1} parent=11 // pred_check
          %p600 = pneg %p352
        $region66: #{vibased_forward.1} parent=11 // pred_check_branch
          %602 = sbr.rel (%p600) target = $region68
        $region67: #{vibased_forward.1} parent=11 // pred_region
          _
        $region68: #{vibased_forward.1} parent=11 // pred_fallthru
          _
        // Predicated region
        $region69: #{vibased_forward.1} parent=11 // pred_check
          %p603 = pneg %p373
        $region70: #{vibased_forward.1} parent=11 // pred_check_branch
          %605 = sbr.rel (%p603) target = $region72
        $region71: #{vibased_forward.1} parent=11 // pred_region
          _
        $region72: #{vibased_forward.1} parent=11 // pred_fallthru
          _
        // Predicated region
        $region73: #{vibased_forward.1} parent=11 // pred_check
          %p606 = pneg %p394
        $region74: #{vibased_forward.1} parent=11 // pred_check_branch
          %608 = sbr.rel (%p606) target = $region76
        $region75: #{vibased_forward.1} parent=11 // pred_region
          _
        $region76: #{vibased_forward.1} parent=11 // pred_fallthru
          _
        // Predicated region
        $region77: #{vibased_forward.1} parent=11 // pred_check
          %p609 = pneg %p415
        $region78: #{vibased_forward.1} parent=11 // pred_check_branch
          %611 = sbr.rel (%p609) target = $region80
        $region79: #{vibased_forward.1} parent=11 // pred_region
          _
        $region80: #{vibased_forward.1} parent=11 // pred_fallthru
          _
        // Predicated region
        $region81: #{vibased_forward.1} parent=11 // pred_check
          %p612 = pneg %p436
        $region82: #{vibased_forward.1} parent=11 // pred_check_branch
          %614 = sbr.rel (%p612) target = $region84
        $region83: #{vibased_forward.1} parent=11 // pred_region
          _
        $region84: #{vibased_forward.1} parent=11 // pred_fallthru
          _
        // Predicated region
        $region85: #{vibased_forward.1} parent=11 // pred_check
          %p615 = pneg %p457
        $region86: #{vibased_forward.1} parent=11 // pred_check_branch
          %617 = sbr.rel (%p615) target = $region88
        $region87: #{vibased_forward.1} parent=11 // pred_region
          _
        $region88: #{vibased_forward.1} parent=11 // pred_fallthru
          _
        // Predicated region
        $region89: #{vibased_forward.1} parent=11 // pred_check
          %p618 = pneg %p478
        $region90: #{vibased_forward.1} parent=11 // pred_check_branch
          %620 = sbr.rel (%p618) target = $region92
        $region91: #{vibased_forward.1} parent=11 // pred_region
          _
        $region92: #{vibased_forward.1} parent=11 // pred_fallthru
          _
        // Predicated region
        $region93: #{vibased_forward.1} parent=11 // pred_check
          %p621 = pneg %p499
        $region94: #{vibased_forward.1} parent=11 // pred_check_branch
          %623 = sbr.rel (%p621) target = $region96
        $region95: #{vibased_forward.1} parent=11 // pred_region
          _
        $region96: #{vibased_forward.1} parent=11 // pred_fallthru
          _
        // Predicated region
        $region97: #{vibased_forward.1} parent=11 // pred_check
          %p624 = pneg %p520
        $region98: #{vibased_forward.1} parent=11 // pred_check_branch
          %626 = sbr.rel (%p624) target = $region100
        $region99: #{vibased_forward.1} parent=11 // pred_region
          _
        $region100: #{vibased_forward.1} parent=11 // pred_fallthru
          _
      $region12: #{vibased_forward.1} parent=5 // pred_fallthru
        _
      %p627 = scmp.lt.s32.totalorder %s32, 2
      // Predicated region
      $region101: #{vibased_forward.1} parent=5 // pred_check
        %p628 = pneg %p627
      $region102: #{vibased_forward.1} parent=5 // pred_check_branch
        %630 = sbr.rel (%p628) target = $region104
      $region103: #{vibased_forward.1} parent=5 // pred_region
        // Predicated region
        $region105: #{vibased_forward.1} parent=103 // pred_check
          %p631 = pneg %p52
        $region106: #{vibased_forward.1} parent=103 // pred_check_branch
          %633 = sbr.rel (%p631) target = $region108
        $region107: #{vibased_forward.1} parent=103 // pred_region
          %p634 = scmp.lt.s32.totalorder %s32, 1
          %s635 = scalar_select %p634, %s32, 1
          %s636 = smul.addr %s635, 2
          %s637 = smul.addr %s636, 4
          %s638 = scalar_lea.vmem %s0, %s637
        $region108: #{vibased_forward.1} parent=103 // pred_fallthru
          _
      $region104: #{vibased_forward.1} parent=5 // pred_fallthru
        _
      %p639 = scmp.le.s32.totalorder 1, %s32
      %p640 = scmp.lt.s32.totalorder %s32, 3
      %p641 = pnand %p639, %p640
      %p642 = pneg %p641
      // Predicated region
      $region109: #{vibased_forward.1} parent=5 // pred_check
        _
      $region110: #{vibased_forward.1} parent=5 // pred_check_branch
        %644 = sbr.rel (%p641) target = $region112
      $region111: #{vibased_forward.1} parent=5 // pred_region
        %s645 = ssub.s32 %s32, 1
        %p646 = scmp.lt.s32.totalorder %s37, 1
        %s647 = scalar_select %p646, %s37, 1
        %s648 = smul.addr %s647, 2
        %s649 = smul.addr %s648, 4
        %s650 = scalar_lea.vmem %s0, %s649
        %p651 = pneg %p58
        %p652 = pneg %p55
        %p653 = pneg %p79
        %p654 = pneg %p76
        %p655 = pneg %p100
        %p656 = pneg %p97
        %p657 = pneg %p121
        %p658 = pneg %p118
        %p659 = pneg %p142
        %p660 = pneg %p139
        %p661 = pneg %p163
        %p662 = pneg %p160
        %p663 = pneg %p184
        %p664 = pneg %p181
        %p665 = pneg %p205
        %p666 = pneg %p202
        %p667 = pneg %p226
        %p668 = pneg %p223
        %p669 = pneg %p247
        %p670 = pneg %p244
        %p671 = pneg %p268
        %p672 = pneg %p265
        %p673 = pneg %p289
        %p674 = pneg %p286
        %p675 = pneg %p310
        %p676 = pneg %p307
        %p677 = pneg %p331
        %p678 = pneg %p328
        %p679 = pneg %p352
        %p680 = pneg %p349
        %p681 = pneg %p373
        %p682 = pneg %p370
        %p683 = pneg %p394
        %p684 = pneg %p391
        %p685 = pneg %p415
        %p686 = pneg %p412
        %p687 = pneg %p436
        %p688 = pneg %p433
        %p689 = pneg %p457
        %p690 = pneg %p454
        %p691 = pneg %p478
        %p692 = pneg %p475
        %p693 = pneg %p499
        %p694 = pneg %p496
        %p695 = pneg %p520
        %p696 = pneg %p517
        %p697 = pneg %p546
        %p698 = pneg %p543
        %s699 = sand.u32 %s533, 1
        %s700 = scalar_lea.sflag [#allocation3], %s699
        %s701 = sand.u32 %s533, 1
        %s702 = scalar_lea.vmem [#allocation2], %s701
        %p703 = scmp.lt.s32.totalorder %s37, 1
        %s704 = scalar_select %p703, %s37, 1
        %s705 = smul.addr %s704, 2
        %s706 = smul.addr %s705, 4
        %s707 = scalar_lea.vmem %s0, %s706
        %v709 = vld [vmem:[%s707] sm:$0xff]
        %v710 = vld [vmem:[%s1] sm:$0x3]
        %v711 = vld [vmem:[%s2] sm:$0x3]
        %v713 = vcombine.high %v709, %v709
        %vm715 = vcmask 1043456
        %v716 = vsel %vm715, %v709, 0.0
        %vm717 = vcmask 912384
        %v718 = vsel %vm717, %v713, 0.0
        %v719 = vadd.f32 %v716, %v718
        %720 = vadd.xlane.f32.xlu0 %v719
        %v721 = vpop.xlane.xlu0 %720
        %v722 = vrcp.pop 240.0
        %v723 = vmul.f32 %v721, %v722
        %v726 = vunpack.c.l.s4 839922192
        %v727 = vunpack.c.0.s8 %v726
        %v728 = vlaneseq
        %v729 = vshrl.u32 %v728, 7
        %v730 = vsub.s32 %v727, %v729
        %v731 = vrot.slane %v723, %v730
        %v733 = vsub.f32 %v709, %v731
        %v734 = vmul.f32 %v733, %v733
        %v736 = vcombine.high %v734, %v734
        %v738 = vsel %vm715, %v734, 0.0
        %v739 = vsel %vm717, %v736, 0.0
        %v740 = vadd.f32 %v738, %v739
        %741 = vadd.xlane.f32.xlu0 %v740
        %v742 = vpop.xlane.xlu0 %741
        %v743 = vmul.f32 %v742, %v722
        %v744 = vadd.f32 %v743, 1e-05
        %v745 = vrsqrt.pop %v744
        %v748 = vunpack.c.l.s4 839922192
        %v749 = vunpack.c.0.s8 %v748
        %v750 = vlaneseq
        %v751 = vshrl.u32 %v750, 7
        %v752 = vsub.s32 %v749, %v751
        %v753 = vrot.slane %v745, %v752
        %v755 = vmul.f32 %v733, %v753
        %v757 = vlaneseq
        %v758 = vshrl.u32 %v757, 7
        %v759 = vsub.s32 0, %v758
        %v760 = vrot.slane %v710, %v759
        %v761 = vlaneseq
        %v762 = vshrl.u32 %v761, 7
        %v763 = vsub.s32 1, %v762
        %v764 = vrot.slane %v710, %v763
        %v765 = vcombine.low %v760, %v764
        %v767 = vmul.f32 %v755, %v765
        %v769 = vlaneseq
        %v770 = vshrl.u32 %v769, 7
        %v771 = vsub.s32 0, %v770
        %v772 = vrot.slane %v711, %v771
        %v773 = vlaneseq
        %v774 = vshrl.u32 %v773, 7
        %v775 = vsub.s32 1, %v774
        %v776 = vrot.slane %v711, %v775
        %v777 = vcombine.low %v772, %v776
        %v779 = vadd.f32 %v767, %v777
        %v780 = vld [vmem:[%s3] sm:$0xf]
        %v781 = vld [vmem:[%s3 + $0x4] sm:$0xf]
        %v782 = vld [vmem:[%s3 + $0x8] sm:$0xf]
        %v783 = vld [vmem:[%s3 + $0xc] sm:$0xf]
        %v784 = vld [vmem:[%s3 + $0x10] sm:$0xf]
        %v785 = vld [vmem:[%s3 + $0x14] sm:$0xf]
        %v786 = vld [vmem:[%s3 + $0x18] sm:$0xf]
        %v787 = vld [vmem:[%s3 + $0x1c] sm:$0xf]
        %v788 = vld [vmem:[%s3 + $0x20] sm:$0xf]
        %v789 = vld [vmem:[%s3 + $0x24] sm:$0xf]
        %v790 = vld [vmem:[%s3 + $0x28] sm:$0xf]
        %v791 = vld [vmem:[%s3 + $0x2c] sm:$0xf]
        %v792 = vld [vmem:[%s3 + $0x30] sm:$0xf]
        %v793 = vld [vmem:[%s3 + $0x34] sm:$0xf]
        %v794 = vld [vmem:[%s3 + $0x38] sm:$0xf]
        %v795 = vld [vmem:[%s3 + $0x3c] sm:$0xf]
        %v796 = vld [vmem:[%s3 + $0x40] sm:$0xf]
        %v797 = vld [vmem:[%s3 + $0x44] sm:$0xf]
        %v798 = vld [vmem:[%s3 + $0x48] sm:$0xf]
        %v799 = vld [vmem:[%s3 + $0x4c] sm:$0xf]
        %v800 = vld [vmem:[%s3 + $0x50] sm:$0xf]
        %v801 = vld [vmem:[%s3 + $0x54] sm:$0xf]
        %v802 = vld [vmem:[%s3 + $0x58] sm:$0xf]
        %v803 = vld [vmem:[%s3 + $0x5c] sm:$0xf]
        %v804 = vld [vmem:[%s3 + $0x60] sm:$0xf]
        %v805 = vld [vmem:[%s3 + $0x64] sm:$0xf]
        %v806 = vld [vmem:[%s3 + $0x68] sm:$0xf]
        %v807 = vld [vmem:[%s3 + $0x6c] sm:$0xf]
        %v808 = vld [vmem:[%s3 + $0x70] sm:$0xf]
        %v809 = vld [vmem:[%s3 + $0x74] sm:$0xf]
        %v811 = vcombine.high %v779, %v779
        %v813 = vpack.c.bf16 %v779, %v779
        %v814 = vpack.c.bf16 %v811, %v811
        %v815 = vld [vmem:[%s4] sm:$0x1]
        %v817 = vlaneseq
        %v818 = vshrl.u32 %v817, 7
        %v819 = vsub.s32 0, %v818
        %v820 = vrot.slane %v815, %v819
        %v852 = vunpack.c.l.b16 %v780
        %v853 = vunpack.c.l.b16 %v781
        %v854 = vunpack.c.l.b16 %v782
        %v855 = vunpack.c.l.b16 %v783
        %v856 = vunpack.c.l.b16 %v784
        %v857 = vunpack.c.l.b16 %v785
        %v858 = vunpack.c.l.b16 %v786
        %v859 = vunpack.c.l.b16 %v787
        %v860 = vunpack.c.l.b16 %v788
        %v861 = vunpack.c.l.b16 %v789
        %v862 = vunpack.c.l.b16 %v790
        %v863 = vunpack.c.l.b16 %v791
        %v864 = vunpack.c.l.b16 %v792
        %v865 = vunpack.c.l.b16 %v793
        %v866 = vunpack.c.l.b16 %v794
        %v867 = vunpack.c.l.b16 %v795
        %v868 = vunpack.c.l.b16 %v796
        %v869 = vunpack.c.l.b16 %v797
        %v870 = vunpack.c.l.b16 %v798
        %v871 = vunpack.c.l.b16 %v799
        %v872 = vunpack.c.l.b16 %v800
        %v873 = vunpack.c.l.b16 %v801
        %v874 = vunpack.c.l.b16 %v802
        %v875 = vunpack.c.l.b16 %v803
        %v876 = vunpack.c.l.b16 %v804
        %v877 = vunpack.c.l.b16 %v805
        %v878 = vunpack.c.l.b16 %v806
        %v879 = vunpack.c.l.b16 %v807
        %v880 = vunpack.c.l.b16 %v808
        %v881 = vunpack.c.l.b16 %v809
        %v882 = vpack.c.b16 %v853, %v852
        %v883 = vpack.c.b16 %v855, %v854
        %v884 = vpack.c.b16 %v857, %v856
        %v885 = vpack.c.b16 %v859, %v858
        %v886 = vpack.c.b16 %v861, %v860
        %v887 = vpack.c.b16 %v863, %v862
        %v888 = vpack.c.b16 %v865, %v864
        %v889 = vpack.c.b16 %v867, %v866
        %v890 = vpack.c.b16 %v869, %v868
        %v891 = vpack.c.b16 %v871, %v870
        %v892 = vpack.c.b16 %v873, %v872
        %v893 = vpack.c.b16 %v875, %v874
        %v894 = vpack.c.b16 %v877, %v876
        %v895 = vpack.c.b16 %v879, %v878
        %v896 = vpack.c.b16 %v881, %v880
        %vm912 = vcmask 916480
        %v914 = vsel %vm912, %v814, 0
        %916 = vmatprep.subr.bf16.mxu0 0
        %917 = vmatpush1.bf16.msra.mxu0 %v882
        %918 = vmatprep.subr.bf16.mxu0 0
        %919 = vmatpush1.bf16.msra.mxu0 %v883
        %920 = vmatprep.subr.bf16.mxu0 0
        %921 = vmatpush1.bf16.msra.mxu0 %v884
        %922 = vmatprep.subr.bf16.mxu0 0
        %923 = vmatpush1.bf16.msra.mxu0 %v885
        %924 = vmatprep.subr.bf16.mxu0 0
        %925 = vmatpush1.bf16.msra.mxu0 %v886
        %926 = vmatprep.subr.bf16.mxu0 0
        %927 = vmatpush1.bf16.msra.mxu0 %v887
        %928 = vmatprep.subr.bf16.mxu0 0
        %929 = vmatpush1.bf16.msra.mxu0 %v888
        %930 = vmatprep.subr.bf16.mxu0 0
        %931 = vmatpush1.bf16.msra.mxu0 %v889
        %932 = vmatprep.subr.bf16.mxu0 0
        %933 = vmatpush1.bf16.msra.mxu0 %v890
        %934 = vmatprep.subr.bf16.mxu0 0
        %935 = vmatpush1.bf16.msra.mxu0 %v891
        %936 = vmatprep.subr.bf16.mxu0 0
        %937 = vmatpush1.bf16.msra.mxu0 %v892
        %938 = vmatprep.subr.bf16.mxu0 0
        %939 = vmatpush1.bf16.msra.mxu0 %v893
        %940 = vmatprep.subr.bf16.mxu0 0
        %941 = vmatpush1.bf16.msra.mxu0 %v894
        %942 = vmatprep.subr.bf16.mxu0 0
        %943 = vmatpush1.bf16.msra.mxu0 %v895
        %944 = vmatprep.subr.bf16.mxu0 0
        %945 = vmatpush1.bf16.msra.mxu0 %v896
        %946 = vmatprep.subr.bf16.mxu0 0
        %947 = vmatpush1.bf16.msra.mxu0 0
        %948 = vmatprep.mubr.bf16.mxu0 %v914
        %949 = vmatmul.mubr.bf16.gmra.mrb[0].mxu0 %v813
        %v950 = vpop.f32.mrb[0].mxu0
        %v951 = vadd.f32 %v820, %v950
        %v952 = vpop.f32.mrb[0].mxu0
        %v953 = vpop.f32.mrb[0].mxu0
        %v954 = vpop.f32.mrb[0].mxu0
        %955 = vdwg.mxu0
        %v956 = vld [vmem:[%s5] sm:$0x1]
        %v958 = vlaneseq
        %v959 = vshrl.u32 %v958, 7
        %v960 = vsub.s32 0, %v959
        %v961 = vrot.slane %v956, %v960
        %v963 = vsel %vm715, %v951, %v961
        %v964 = vld [vmem:[%s6] sm:$0x1f]
        %v965 = vadd.f32 %v963, %v964
        %v966 = vld [vmem:[%s7] sm:$0x1]
        %v967 = vld [vmem:[%s8] sm:$0x1]
        %vm968 = vcmask 258048
        %v969 = vsel %vm968, %v965, 0.0
        %970 = vadd.xlane.f32.xlu0 %v969
        %v971 = vpop.xlane.xlu0 %970
        %v972 = vrcp.pop 32.0
        %v973 = vmul.f32 %v971, %v972
        %v974 = vsub.f32 %v965, %v973
        %v975 = vmul.f32 %v974, %v974
        %v976 = vsel %vm968, %v975, 0.0
        %977 = vadd.xlane.f32.xlu0 %v976
        %v978 = vpop.xlane.xlu0 %977
        %v979 = vmul.f32 %v978, %v972
        %v980 = vadd.f32 %v979, 1e-05
        %v981 = vrsqrt.pop %v980
        %v982 = vmul.f32 %v974, %v981
        %v984 = vlaneseq
        %v985 = vshrl.u32 %v984, 7
        %v986 = vsub.s32 0, %v985
        %v987 = vrot.slane %v966, %v986
        %v989 = vmul.f32 %v982, %v987
        %v991 = vlaneseq
        %v992 = vshrl.u32 %v991, 7
        %v993 = vsub.s32 0, %v992
        %v994 = vrot.slane %v967, %v993
        %v996 = vadd.f32 %v989, %v994
        %v997 = vld [vmem:[%s9] sm:$0x7]
        %v998 = vld [vmem:[%s10] sm:$0x1]
        %v1000 = vrot.slane %v996, 6
        %vm1002 = vcmask 1041408
        %v1003 = vsel %vm1002, 0.0, %v1000
        %v1004 = vlaneseq
        %v1005 = vshrl.u32 %v1004, 7
        %v1006 = vsub.s32 0, %v1005
        %v1007 = vrot.slane %v997, %v1006
        %v1008 = vmul.f32 %v1003, %v1007
        %v1010 = vlaneseq
        %v1011 = vshrl.u32 %v1010, 7
        %v1012 = vsub.s32 0, %v1011
        %v1013 = vrot.slane %v998, %v1012
        %v1015 = vadd.f32 %v1013, %v1008
        %v1016 = vlaneseq
        %v1017 = vshrl.u32 %v1016, 7
        %v1018 = vsub.s32 1, %v1017
        %v1019 = vrot.slane %v997, %v1018
        %v1020 = vmul.f32 %v1003, %v1019
        %v1022 = vrot.slane %v1020, 1
        %v1024 = vadd.f32 %v1015, %v1022
        %v1025 = vlaneseq
        %v1026 = vshrl.u32 %v1025, 7
        %v1027 = vsub.s32 2, %v1026
        %v1028 = vrot.slane %v997, %v1027
        %v1029 = vmul.f32 %v1003, %v1028
        %v1031 = vrot.slane %v1029, 2
        %v1033 = vadd.f32 %v1024, %v1031
        %v1034 = vld [vmem:[%s11] sm:$0xf]
        %v1035 = vld [vmem:[%s11 + $0x4] sm:$0xf]
        %v1036 = vld [vmem:[%s11 + $0x8] sm:$0xf]
        %v1037 = vld [vmem:[%s11 + $0xc] sm:$0xf]
        %v1038 = vpack.c.bf16 %v996, %v996
        %v1039 = vld [vmem:[%s12] sm:$0x1]
        %v1041 = vlaneseq
        %v1042 = vshrl.u32 %v1041, 7
        %v1043 = vsub.s32 0, %v1042
        %v1044 = vrot.slane %v1039, %v1043
        %v1050 = vunpack.c.l.b16 %v1034
        %v1051 = vunpack.c.l.b16 %v1035
        %v1052 = vunpack.c.l.b16 %v1036
        %v1053 = vunpack.c.l.b16 %v1037
        %v1054 = vpack.c.b16 %v1051, %v1050
        %v1055 = vpack.c.b16 %v1053, %v1052
        %vm1058 = vcmask 261120
        %v1060 = vsel %vm1058, %v1038, 0
        %1062 = vmatprep.subr.bf16.mxu0 0
        %1063 = vmatpush1.bf16.msra.mxu0 %v1054
        %1064 = vmatprep.subr.bf16.mxu0 0
        %1065 = vmatpush1.bf16.msra.mxu0 %v1055
        %1066 = vmatprep.subr.bf16.mxu0 0
        %1067 = vmatpush1.bf16.msra.mxu0 0
        %1068 = vmatprep.subr.bf16.mxu0 0
        %1069 = vmatpush1.bf16.msra.mxu0 0
        %1070 = vmatprep.subr.bf16.mxu0 0
        %1071 = vmatpush1.bf16.msra.mxu0 0
        %1072 = vmatprep.subr.bf16.mxu0 0
        %1073 = vmatpush1.bf16.msra.mxu0 0
        %1074 = vmatprep.subr.bf16.mxu0 0
        %1075 = vmatpush1.bf16.msra.mxu0 0
        %1076 = vmatprep.subr.bf16.mxu0 0
        %1077 = vmatpush1.bf16.msra.mxu0 0
        %1078 = vmatprep.subr.bf16.mxu0 0
        %1079 = vmatpush1.bf16.msra.mxu0 0
        %1080 = vmatprep.subr.bf16.mxu0 0
        %1081 = vmatpush1.bf16.msra.mxu0 0
        %1082 = vmatprep.subr.bf16.mxu0 0
        %1083 = vmatpush1.bf16.msra.mxu0 0
        %1084 = vmatprep.subr.bf16.mxu0 0
        %1085 = vmatpush1.bf16.msra.mxu0 0
        %1086 = vmatprep.subr.bf16.mxu0 0
        %1087 = vmatpush1.bf16.msra.mxu0 0
        %1088 = vmatprep.subr.bf16.mxu0 0
        %1089 = vmatpush1.bf16.msra.mxu0 0
        %1090 = vmatprep.subr.bf16.mxu0 0
        %1091 = vmatpush1.bf16.msra.mxu0 0
        %1092 = vmatprep.subr.bf16.mxu0 0
        %1093 = vmatpush1.bf16.msra.mxu0 0
        %1094 = vmatprep.mubr.bf16.mxu0 0
        %1095 = vmatmul.mubr.bf16.gmra.mrb[0].mxu0 %v1060
        %v1096 = vpop.f32.mrb[0].mxu0
        %v1097 = vadd.f32 %v1044, %v1096
        %v1098 = vpop.f32.mrb[0].mxu0
        %v1099 = vpop.f32.mrb[0].mxu0
        %v1100 = vpop.f32.mrb[0].mxu0
        %1101 = vdwg.mxu0
        %v1102 = vmul.f32 %v1033, %v1097
        %v1103 = vadd.f32 %v1102, %v996
        %v1104 = vld [vmem:[%s13] sm:$0xf]
        %v1105 = vld [vmem:[%s13 + $0x4] sm:$0xf]
        %v1106 = vld [vmem:[%s13 + $0x8] sm:$0xf]
        %v1107 = vld [vmem:[%s13 + $0xc] sm:$0xf]
        %v1108 = vpack.c.bf16 %v1103, %v1103
        %v1113 = vunpack.c.l.b16 %v1104
        %v1114 = vunpack.c.l.b16 %v1105
        %v1115 = vunpack.c.l.b16 %v1106
        %v1116 = vunpack.c.l.b16 %v1107
        %v1117 = vpack.c.b16 %v1114, %v1113
        %v1118 = vpack.c.b16 %v1116, %v1115
        %v1122 = vsel %vm1058, %v1108, 0
        %1124 = vmatprep.subr.bf16.mxu0 0
        %1125 = vmatpush1.bf16.msra.mxu0 %v1117
        %1126 = vmatprep.subr.bf16.mxu0 0
        %1127 = vmatpush1.bf16.msra.mxu0 %v1118
        %1128 = vmatprep.subr.bf16.mxu0 0
        %1129 = vmatpush1.bf16.msra.mxu0 0
        %1130 = vmatprep.subr.bf16.mxu0 0
        %1131 = vmatpush1.bf16.msra.mxu0 0
        %1132 = vmatprep.subr.bf16.mxu0 0
        %1133 = vmatpush1.bf16.msra.mxu0 0
        %1134 = vmatprep.subr.bf16.mxu0 0
        %1135 = vmatpush1.bf16.msra.mxu0 0
        %1136 = vmatprep.subr.bf16.mxu0 0
        %1137 = vmatpush1.bf16.msra.mxu0 0
        %1138 = vmatprep.subr.bf16.mxu0 0
        %1139 = vmatpush1.bf16.msra.mxu0 0
        %1140 = vmatprep.subr.bf16.mxu0 0
        %1141 = vmatpush1.bf16.msra.mxu0 0
        %1142 = vmatprep.subr.bf16.mxu0 0
        %1143 = vmatpush1.bf16.msra.mxu0 0
        %1144 = vmatprep.subr.bf16.mxu0 0
        %1145 = vmatpush1.bf16.msra.mxu0 0
        %1146 = vmatprep.subr.bf16.mxu0 0
        %1147 = vmatpush1.bf16.msra.mxu0 0
        %1148 = vmatprep.subr.bf16.mxu0 0
        %1149 = vmatpush1.bf16.msra.mxu0 0
        %1150 = vmatprep.subr.bf16.mxu0 0
        %1151 = vmatpush1.bf16.msra.mxu0 0
        %1152 = vmatprep.subr.bf16.mxu0 0
        %1153 = vmatpush1.bf16.msra.mxu0 0
        %1154 = vmatprep.subr.bf16.mxu0 0
        %1155 = vmatpush1.bf16.msra.mxu0 0
        %1156 = vmatprep.mubr.bf16.mxu0 0
        %1157 = vmatmul.mubr.bf16.gmra.mrb[0].mxu0 %v1122
        %v1158 = vpop.f32.mrb[0].mxu0
        %v1159 = vadd.f32 0.0, %v1158
        %v1160 = vpop.f32.mrb[0].mxu0
        %v1161 = vpop.f32.mrb[0].mxu0
        %v1162 = vpop.f32.mrb[0].mxu0
        %1163 = vdwg.mxu0
        %v1164 = vld [vmem:[%s14] sm:$0xf]
        %v1165 = vld [vmem:[%s14 + $0x4] sm:$0xf]
        %v1166 = vld [vmem:[%s14 + $0x8] sm:$0xf]
        %v1167 = vld [vmem:[%s14 + $0xc] sm:$0xf]
        %1169 = vrot.lane.b32.xlu0 %v1159, 112
        %v1170 = vpop.permute.xlu0 %1169
        %vm1171 = vcmask 31744
        %v1172 = vsel %vm1171, %v1159, 0
        %v1174 = vsel %vm1171, %v1170, 0
        %1176 = vmatprep.subr.mxu0 0.0
        %1177 = vmatpush1.xpose.msra.mxu0 %v1174
        %1178 = vmatprep.subr.mxu0 0.0
        %1179 = vmatpush1.xpose.msra.mxu0 0.0
        %1180 = vmatprep.subr.mxu0 0.0
        %1181 = vmatpush1.xpose.msra.mxu0 0.0
        %1182 = vmatprep.subr.mxu0 0.0
        %1183 = vmatpush1.xpose.msra.mxu0 0.0
        %1184 = vmatprep.subr.mxu0 0.0
        %1185 = vmatpush1.xpose.msra.mxu0 0.0
        %1186 = vmatprep.subr.mxu0 0.0
        %1187 = vmatpush1.xpose.msra.mxu0 0.0
        %1188 = vmatprep.subr.mxu0 0.0
        %1189 = vmatpush1.xpose.msra.mxu0 0.0
        %1190 = vmatprep.subr.mxu0 0.0
        %1191 = vmatpush1.xpose.msra.mxu0 0.0
        %1192 = vmatprep.subr.mxu0 0.0
        %1193 = vmatpush1.xpose.msra.mxu0 0.0
        %1194 = vmatprep.subr.mxu0 0.0
        %1195 = vmatpush1.xpose.msra.mxu0 0.0
        %1196 = vmatprep.subr.mxu0 0.0
        %1197 = vmatpush1.xpose.msra.mxu0 0.0
        %1198 = vmatprep.subr.mxu0 0.0
        %1199 = vmatpush1.xpose.msra.mxu0 0.0
        %1200 = vmatprep.subr.mxu0 0.0
        %1201 = vmatpush1.xpose.msra.mxu0 0.0
        %1202 = vmatprep.subr.mxu0 0.0
        %1203 = vmatpush1.xpose.msra.mxu0 0.0
        %1204 = vmatprep.subr.mxu0 0.0
        %1205 = vmatpush1.xpose.msra.mxu0 0.0
        %1206 = vmatprep.subr.mxu0 0.0
        %1207 = vmatpush1.xpose.msra.mxu0 0.0
        %1208 = vmatprep.subr.mxu0 0.0
        %1209 = vmatpush1.xpose.msra.mxu0 0.0
        %1210 = vmatprep.subr.mxu0 0.0
        %1211 = vmatpush1.xpose.msra.mxu0 0.0
        %1212 = vmatprep.subr.mxu0 0.0
        %1213 = vmatpush1.xpose.msra.mxu0 0.0
        %1214 = vmatprep.subr.mxu0 0.0
        %1215 = vmatpush1.xpose.msra.mxu0 0.0
        %1216 = vmatprep.subr.mxu0 0.0
        %1217 = vmatpush1.xpose.msra.mxu0 0.0
        %1218 = vmatprep.subr.mxu0 0.0
        %1219 = vmatpush1.xpose.msra.mxu0 0.0
        %1220 = vmatprep.subr.mxu0 0.0
        %1221 = vmatpush1.xpose.msra.mxu0 0.0
        %1222 = vmatprep.subr.mxu0 0.0
        %1223 = vmatpush1.xpose.msra.mxu0 0.0
        %1224 = vmatprep.subr.mxu0 0.0
        %1225 = vmatpush1.xpose.msra.mxu0 0.0
        %1226 = vmatprep.subr.mxu0 0.0
        %1227 = vmatpush1.xpose.msra.mxu0 0.0
        %1228 = vmatprep.subr.mxu0 0.0
        %1229 = vmatpush1.xpose.msra.mxu0 0.0
        %1230 = vmatprep.subr.mxu0 0.0
        %1231 = vmatpush1.xpose.msra.mxu0 0.0
        %1232 = vmatprep.subr.mxu0 0.0
        %1233 = vmatpush1.xpose.msra.mxu0 0.0
        %1234 = vmatprep.subr.mxu0 0.0
        %1235 = vmatpush1.xpose.msra.mxu0 0.0
        %1236 = vmatprep.subr.mxu0 0.0
        %1237 = vmatpush1.xpose.msra.mxu0 0.0
        %1238 = vmatprep.subr.mxu0 0.0
        %1239 = vmatpush1.xpose.msra.mxu0 0.0
        %1240 = vmatprep.mubr.f32.mxu0 0.0
        %1241 = vmatmul.mubr.f32.gmra.mrb[0].mxu0 %v1172
        %v1242 = vpop.f32.mrb[0].mxu0
        %v1243 = vadd.f32 0.0, %v1242
        %v1244 = vpop.f32.mrb[0].mxu0
        %1245 = vdwg.mxu0
        %v1246 = vmul.f32 %v1243, 0.5
        %v1247 = vadd.f32 %v1246, 1.0
        %v1248 = vmul.f32 %v1246, 0.5
        %v1249 = vmul.f32 %v1248, %v1246
        %v1250 = vadd.f32 %v1247, %v1249
        %1251 = vrot.lane.b32.xlu0 %v1159, 96
        %v1252 = vpop.permute.xlu0 %1251
        %vm1253 = vcmask 39936
        %v1255 = vsel %vm1253, %v1250, 0
        %vm1257 = vcmask 1044480
        %v1258 = vsel %vm1257, %v1252, 0
        %1260 = vmatprep.subr.mxu0 0.0
        %1261 = vmatpush1.msra.mxu0 %v1258
        %1262 = vmatprep.subr.mxu0 0.0
        %1263 = vmatpush1.msra.mxu0 0.0
        %1264 = vmatprep.subr.mxu0 0.0
        %1265 = vmatpush1.msra.mxu0 0.0
        %1266 = vmatprep.subr.mxu0 0.0
        %1267 = vmatpush1.msra.mxu0 0.0
        %1268 = vmatprep.subr.mxu0 0.0
        %1269 = vmatpush1.msra.mxu0 0.0
        %1270 = vmatprep.subr.mxu0 0.0
        %1271 = vmatpush1.msra.mxu0 0.0
        %1272 = vmatprep.subr.mxu0 0.0
        %1273 = vmatpush1.msra.mxu0 0.0
        %1274 = vmatprep.subr.mxu0 0.0
        %1275 = vmatpush1.msra.mxu0 0.0
        %1276 = vmatprep.subr.mxu0 0.0
        %1277 = vmatpush1.msra.mxu0 0.0
        %1278 = vmatprep.subr.mxu0 0.0
        %1279 = vmatpush1.msra.mxu0 0.0
        %1280 = vmatprep.subr.mxu0 0.0
        %1281 = vmatpush1.msra.mxu0 0.0
        %1282 = vmatprep.subr.mxu0 0.0
        %1283 = vmatpush1.msra.mxu0 0.0
        %1284 = vmatprep.subr.mxu0 0.0
        %1285 = vmatpush1.msra.mxu0 0.0
        %1286 = vmatprep.subr.mxu0 0.0
        %1287 = vmatpush1.msra.mxu0 0.0
        %1288 = vmatprep.subr.mxu0 0.0
        %1289 = vmatpush1.msra.mxu0 0.0
        %1290 = vmatprep.subr.mxu0 0.0
        %1291 = vmatpush1.msra.mxu0 0.0
        %1292 = vmatprep.subr.mxu0 0.0
        %1293 = vmatpush1.msra.mxu0 0.0
        %1294 = vmatprep.subr.mxu0 0.0
        %1295 = vmatpush1.msra.mxu0 0.0
        %1296 = vmatprep.subr.mxu0 0.0
        %1297 = vmatpush1.msra.mxu0 0.0
        %1298 = vmatprep.subr.mxu0 0.0
        %1299 = vmatpush1.msra.mxu0 0.0
        %1300 = vmatprep.subr.mxu0 0.0
        %1301 = vmatpush1.msra.mxu0 0.0
        %1302 = vmatprep.subr.mxu0 0.0
        %1303 = vmatpush1.msra.mxu0 0.0
        %1304 = vmatprep.subr.mxu0 0.0
        %1305 = vmatpush1.msra.mxu0 0.0
        %1306 = vmatprep.subr.mxu0 0.0
        %1307 = vmatpush1.msra.mxu0 0.0
        %1308 = vmatprep.subr.mxu0 0.0
        %1309 = vmatpush1.msra.mxu0 0.0
        %1310 = vmatprep.subr.mxu0 0.0
        %1311 = vmatpush1.msra.mxu0 0.0
        %1312 = vmatprep.subr.mxu0 0.0
        %1313 = vmatpush1.msra.mxu0 0.0
        %1314 = vmatprep.subr.mxu0 0.0
        %1315 = vmatpush1.msra.mxu0 0.0
        %1316 = vmatprep.subr.mxu0 0.0
        %1317 = vmatpush1.msra.mxu0 0.0
        %1318 = vmatprep.subr.mxu0 0.0
        %1319 = vmatpush1.msra.mxu0 0.0
        %1320 = vmatprep.subr.mxu0 0.0
        %1321 = vmatpush1.msra.mxu0 0.0
        %1322 = vmatprep.subr.mxu0 0.0
        %1323 = vmatpush1.msra.mxu0 0.0
        %1324 = vmatprep.mubr.f32.mxu0 0.0
        %1325 = vmatmul.mubr.f32.gmra.mrb[0].mxu0 %v1255
        %v1326 = vpop.f32.mrb[0].mxu0
        %v1327 = vadd.f32 0.0, %v1326
        %v1328 = vpop.f32.mrb[0].mxu0
        %1329 = vdwg.mxu0
        %vm1330 = vcmask 36864
        %v1331 = vsel %vm1330, %v1250, 0.0
        %1332 = vadd.xlane.f32.xlu0 %v1331
        %v1333 = vpop.xlane.xlu0 %1332
        %v1334 = vadd.f32 %v1333, 1e-12
        %v1335 = vrcp.pop %v1334
        %v1336 = vmul.f32 %v1327, %v1335
        %v1337 = vpack.c.bf16 %v1336, %v1336
        %1338 = vrot.lane.b32.xlu0 %v1159, 124
        %v1339 = vpop.permute.xlu0 %1338
        %1340 = vrot.lane.b32.xlu0 %v1159, 108
        %v1341 = vpop.permute.xlu0 %1340
        %v1342 = vsel %vm1171, %v1339, 0
        %v1344 = vsel %vm1171, %v1341, 0
        %1346 = vmatprep.subr.mxu0 0.0
        %1347 = vmatpush1.xpose.msra.mxu0 %v1344
        %1348 = vmatprep.subr.mxu0 0.0
        %1349 = vmatpush1.xpose.msra.mxu0 0.0
        %1350 = vmatprep.subr.mxu0 0.0
        %1351 = vmatpush1.xpose.msra.mxu0 0.0
        %1352 = vmatprep.subr.mxu0 0.0
        %1353 = vmatpush1.xpose.msra.mxu0 0.0
        %1354 = vmatprep.subr.mxu0 0.0
        %1355 = vmatpush1.xpose.msra.mxu0 0.0
        %1356 = vmatprep.subr.mxu0 0.0
        %1357 = vmatpush1.xpose.msra.mxu0 0.0
        %1358 = vmatprep.subr.mxu0 0.0
        %1359 = vmatpush1.xpose.msra.mxu0 0.0
        %1360 = vmatprep.subr.mxu0 0.0
        %1361 = vmatpush1.xpose.msra.mxu0 0.0
        %1362 = vmatprep.subr.mxu0 0.0
        %1363 = vmatpush1.xpose.msra.mxu0 0.0
        %1364 = vmatprep.subr.mxu0 0.0
        %1365 = vmatpush1.xpose.msra.mxu0 0.0
        %1366 = vmatprep.subr.mxu0 0.0
        %1367 = vmatpush1.xpose.msra.mxu0 0.0
        %1368 = vmatprep.subr.mxu0 0.0
        %1369 = vmatpush1.xpose.msra.mxu0 0.0
        %1370 = vmatprep.subr.mxu0 0.0
        %1371 = vmatpush1.xpose.msra.mxu0 0.0
        %1372 = vmatprep.subr.mxu0 0.0
        %1373 = vmatpush1.xpose.msra.mxu0 0.0
        %1374 = vmatprep.subr.mxu0 0.0
        %1375 = vmatpush1.xpose.msra.mxu0 0.0
        %1376 = vmatprep.subr.mxu0 0.0
        %1377 = vmatpush1.xpose.msra.mxu0 0.0
        %1378 = vmatprep.subr.mxu0 0.0
        %1379 = vmatpush1.xpose.msra.mxu0 0.0
        %1380 = vmatprep.subr.mxu0 0.0
        %1381 = vmatpush1.xpose.msra.mxu0 0.0
        %1382 = vmatprep.subr.mxu0 0.0
        %1383 = vmatpush1.xpose.msra.mxu0 0.0
        %1384 = vmatprep.subr.mxu0 0.0
        %1385 = vmatpush1.xpose.msra.mxu0 0.0
        %1386 = vmatprep.subr.mxu0 0.0
        %1387 = vmatpush1.xpose.msra.mxu0 0.0
        %1388 = vmatprep.subr.mxu0 0.0
        %1389 = vmatpush1.xpose.msra.mxu0 0.0
        %1390 = vmatprep.subr.mxu0 0.0
        %1391 = vmatpush1.xpose.msra.mxu0 0.0
        %1392 = vmatprep.subr.mxu0 0.0
        %1393 = vmatpush1.xpose.msra.mxu0 0.0
        %1394 = vmatprep.subr.mxu0 0.0
        %1395 = vmatpush1.xpose.msra.mxu0 0.0
        %1396 = vmatprep.subr.mxu0 0.0
        %1397 = vmatpush1.xpose.msra.mxu0 0.0
        %1398 = vmatprep.subr.mxu0 0.0
        %1399 = vmatpush1.xpose.msra.mxu0 0.0
        %1400 = vmatprep.subr.mxu0 0.0
        %1401 = vmatpush1.xpose.msra.mxu0 0.0
        %1402 = vmatprep.subr.mxu0 0.0
        %1403 = vmatpush1.xpose.msra.mxu0 0.0
        %1404 = vmatprep.subr.mxu0 0.0
        %1405 = vmatpush1.xpose.msra.mxu0 0.0
        %1406 = vmatprep.subr.mxu0 0.0
        %1407 = vmatpush1.xpose.msra.mxu0 0.0
        %1408 = vmatprep.subr.mxu0 0.0
        %1409 = vmatpush1.xpose.msra.mxu0 0.0
        %1410 = vmatprep.mubr.f32.mxu0 0.0
        %1411 = vmatmul.mubr.f32.gmra.mrb[0].mxu0 %v1342
        %v1412 = vpop.f32.mrb[0].mxu0
        %v1413 = vadd.f32 0.0, %v1412
        %v1414 = vpop.f32.mrb[0].mxu0
        %1415 = vdwg.mxu0
        %v1416 = vmul.f32 %v1413, 0.5
        %v1417 = vadd.f32 %v1416, 1.0
        %v1418 = vmul.f32 %v1416, 0.5
        %v1419 = vmul.f32 %v1418, %v1416
        %v1420 = vadd.f32 %v1417, %v1419
        %1421 = vrot.lane.b32.xlu0 %v1159, 88
        %v1422 = vpop.permute.xlu0 %1421
        %v1424 = vsel %vm1253, %v1420, 0
        %v1426 = vsel %vm1257, %v1422, 0
        %1428 = vmatprep.subr.mxu0 0.0
        %1429 = vmatpush1.msra.mxu0 %v1426
        %1430 = vmatprep.subr.mxu0 0.0
        %1431 = vmatpush1.msra.mxu0 0.0
        %1432 = vmatprep.subr.mxu0 0.0
        %1433 = vmatpush1.msra.mxu0 0.0
        %1434 = vmatprep.subr.mxu0 0.0
        %1435 = vmatpush1.msra.mxu0 0.0
        %1436 = vmatprep.subr.mxu0 0.0
        %1437 = vmatpush1.msra.mxu0 0.0
        %1438 = vmatprep.subr.mxu0 0.0
        %1439 = vmatpush1.msra.mxu0 0.0
        %1440 = vmatprep.subr.mxu0 0.0
        %1441 = vmatpush1.msra.mxu0 0.0
        %1442 = vmatprep.subr.mxu0 0.0
        %1443 = vmatpush1.msra.mxu0 0.0
        %1444 = vmatprep.subr.mxu0 0.0
        %1445 = vmatpush1.msra.mxu0 0.0
        %1446 = vmatprep.subr.mxu0 0.0
        %1447 = vmatpush1.msra.mxu0 0.0
        %1448 = vmatprep.subr.mxu0 0.0
        %1449 = vmatpush1.msra.mxu0 0.0
        %1450 = vmatprep.subr.mxu0 0.0
        %1451 = vmatpush1.msra.mxu0 0.0
        %1452 = vmatprep.subr.mxu0 0.0
        %1453 = vmatpush1.msra.mxu0 0.0
        %1454 = vmatprep.subr.mxu0 0.0
        %1455 = vmatpush1.msra.mxu0 0.0
        %1456 = vmatprep.subr.mxu0 0.0
        %1457 = vmatpush1.msra.mxu0 0.0
        %1458 = vmatprep.subr.mxu0 0.0
        %1459 = vmatpush1.msra.mxu0 0.0
        %1460 = vmatprep.subr.mxu0 0.0
        %1461 = vmatpush1.msra.mxu0 0.0
        %1462 = vmatprep.subr.mxu0 0.0
        %1463 = vmatpush1.msra.mxu0 0.0
        %1464 = vmatprep.subr.mxu0 0.0
        %1465 = vmatpush1.msra.mxu0 0.0
        %1466 = vmatprep.subr.mxu0 0.0
        %1467 = vmatpush1.msra.mxu0 0.0
        %1468 = vmatprep.subr.mxu0 0.0
        %1469 = vmatpush1.msra.mxu0 0.0
        %1470 = vmatprep.subr.mxu0 0.0
        %1471 = vmatpush1.msra.mxu0 0.0
        %1472 = vmatprep.subr.mxu0 0.0
        %1473 = vmatpush1.msra.mxu0 0.0
        %1474 = vmatprep.subr.mxu0 0.0
        %1475 = vmatpush1.msra.mxu0 0.0
        %1476 = vmatprep.subr.mxu0 0.0
        %1477 = vmatpush1.msra.mxu0 0.0
        %1478 = vmatprep.subr.mxu0 0.0
        %1479 = vmatpush1.msra.mxu0 0.0
        %1480 = vmatprep.subr.mxu0 0.0
        %1481 = vmatpush1.msra.mxu0 0.0
        %1482 = vmatprep.subr.mxu0 0.0
        %1483 = vmatpush1.msra.mxu0 0.0
        %1484 = vmatprep.subr.mxu0 0.0
        %1485 = vmatpush1.msra.mxu0 0.0
        %1486 = vmatprep.subr.mxu0 0.0
        %1487 = vmatpush1.msra.mxu0 0.0
        %1488 = vmatprep.subr.mxu0 0.0
        %1489 = vmatpush1.msra.mxu0 0.0
        %1490 = vmatprep.subr.mxu0 0.0
        %1491 = vmatpush1.msra.mxu0 0.0
        %1492 = vmatprep.mubr.f32.mxu0 0.0
        %1493 = vmatmul.mubr.f32.gmra.mrb[0].mxu0 %v1424
        %v1494 = vpop.f32.mrb[0].mxu0
        %v1495 = vadd.f32 0.0, %v1494
        %v1496 = vpop.f32.mrb[0].mxu0
        %1497 = vdwg.mxu0
        %v1498 = vsel %vm1330, %v1420, 0.0
        %1499 = vadd.xlane.f32.xlu0 %v1498
        %v1500 = vpop.xlane.xlu0 %1499
        %v1501 = vadd.f32 %v1500, 1e-12
        %v1502 = vrcp.pop %v1501
        %v1503 = vmul.f32 %v1495, %v1502
        %v1504 = vpack.c.bf16 %v1503, %v1503
        %vm1505 = vcmask 64512
        %v1507 = vsel %vm1505, %v1504, 0
        %v1510 = vsel %vm715, %v1165, 0
        %1512 = vmatprep.subr.bf16.mxu0 0
        %1513 = vmatpush1.bf16.msra.mxu0 %v1510
        %1514 = vmatprep.subr.bf16.mxu0 0
        %1515 = vmatpush1.bf16.msra.mxu0 0
        %1516 = vmatprep.subr.bf16.mxu0 0
        %1517 = vmatpush1.bf16.msra.mxu0 0
        %1518 = vmatprep.subr.bf16.mxu0 0
        %1519 = vmatpush1.bf16.msra.mxu0 0
        %1520 = vmatprep.subr.bf16.mxu0 0
        %1521 = vmatpush1.bf16.msra.mxu0 0
        %1522 = vmatprep.subr.bf16.mxu0 0
        %1523 = vmatpush1.bf16.msra.mxu0 0
        %1524 = vmatprep.subr.bf16.mxu0 0
        %1525 = vmatpush1.bf16.msra.mxu0 0
        %1526 = vmatprep.subr.bf16.mxu0 0
        %1527 = vmatpush1.bf16.msra.mxu0 0
        %1528 = vmatprep.subr.bf16.mxu0 0
        %1529 = vmatpush1.bf16.msra.mxu0 0
        %1530 = vmatprep.subr.bf16.mxu0 0
        %1531 = vmatpush1.bf16.msra.mxu0 0
        %1532 = vmatprep.subr.bf16.mxu0 0
        %1533 = vmatpush1.bf16.msra.mxu0 0
        %1534 = vmatprep.subr.bf16.mxu0 0
        %1535 = vmatpush1.bf16.msra.mxu0 0
        %1536 = vmatprep.subr.bf16.mxu0 0
        %1537 = vmatpush1.bf16.msra.mxu0 0
        %1538 = vmatprep.subr.bf16.mxu0 0
        %1539 = vmatpush1.bf16.msra.mxu0 0
        %1540 = vmatprep.subr.bf16.mxu0 0
        %1541 = vmatpush1.bf16.msra.mxu0 0
        %1542 = vmatprep.subr.bf16.mxu0 0
        %1543 = vmatpush1.bf16.msra.mxu0 0
        %1544 = vmatprep.mubr.bf16.mxu0 0
        %1545 = vmatmul.mubr.bf16.gmra.mrb[0].mxu0 %v1507
        %v1546 = vpop.f32.mrb[0].mxu0
        %v1547 = vadd.f32 0.0, %v1546
        %v1548 = vpop.f32.mrb[0].mxu0
        %v1549 = vpop.f32.mrb[0].mxu0
        %v1550 = vpop.f32.mrb[0].mxu0
        %1551 = vdwg.mxu0
        %v1553 = vsel %vm1505, %v1337, 0
        %v1556 = vsel %vm715, %v1164, 0
        %1558 = vmatprep.subr.bf16.mxu0 0
        %1559 = vmatpush1.bf16.msra.mxu0 %v1556
        %1560 = vmatprep.subr.bf16.mxu0 0
        %1561 = vmatpush1.bf16.msra.mxu0 0
        %1562 = vmatprep.subr.bf16.mxu0 0
        %1563 = vmatpush1.bf16.msra.mxu0 0
        %1564 = vmatprep.subr.bf16.mxu0 0
        %1565 = vmatpush1.bf16.msra.mxu0 0
        %1566 = vmatprep.subr.bf16.mxu0 0
        %1567 = vmatpush1.bf16.msra.mxu0 0
        %1568 = vmatprep.subr.bf16.mxu0 0
        %1569 = vmatpush1.bf16.msra.mxu0 0
        %1570 = vmatprep.subr.bf16.mxu0 0
        %1571 = vmatpush1.bf16.msra.mxu0 0
        %1572 = vmatprep.subr.bf16.mxu0 0
        %1573 = vmatpush1.bf16.msra.mxu0 0
        %1574 = vmatprep.subr.bf16.mxu0 0
        %1575 = vmatpush1.bf16.msra.mxu0 0
        %1576 = vmatprep.subr.bf16.mxu0 0
        %1577 = vmatpush1.bf16.msra.mxu0 0
        %1578 = vmatprep.subr.bf16.mxu0 0
        %1579 = vmatpush1.bf16.msra.mxu0 0
        %1580 = vmatprep.subr.bf16.mxu0 0
        %1581 = vmatpush1.bf16.msra.mxu0 0
        %1582 = vmatprep.subr.bf16.mxu0 0
        %1583 = vmatpush1.bf16.msra.mxu0 0
        %1584 = vmatprep.subr.bf16.mxu0 0
        %1585 = vmatpush1.bf16.msra.mxu0 0
        %1586 = vmatprep.subr.bf16.mxu0 0
        %1587 = vmatpush1.bf16.msra.mxu0 0
        %1588 = vmatprep.subr.bf16.mxu0 0
        %1589 = vmatpush1.bf16.msra.mxu0 0
        %1590 = vmatprep.mubr.bf16.mxu0 0
        %1591 = vmatmul.mubr.bf16.gmra.mrb[0].mxu0 %v1553
        %v1592 = vpop.f32.mrb[0].mxu0
        %v1593 = vadd.f32 %v1547, %v1592
        %v1594 = vpop.f32.mrb[0].mxu0
        %v1595 = vpop.f32.mrb[0].mxu0
        %v1596 = vpop.f32.mrb[0].mxu0
        %1597 = vdwg.mxu0
        %1598 = vrot.lane.b32.xlu0 %v1159, 120
        %v1599 = vpop.permute.xlu0 %1598
        %1600 = vrot.lane.b32.xlu0 %v1159, 104
        %v1601 = vpop.permute.xlu0 %1600
        %v1602 = vsel %vm1171, %v1599, 0
        %v1604 = vsel %vm1171, %v1601, 0
        %1606 = vmatprep.subr.mxu0 0.0
        %1607 = vmatpush1.xpose.msra.mxu0 %v1604
        %1608 = vmatprep.subr.mxu0 0.0
        %1609 = vmatpush1.xpose.msra.mxu0 0.0
        %1610 = vmatprep.subr.mxu0 0.0
        %1611 = vmatpush1.xpose.msra.mxu0 0.0
        %1612 = vmatprep.subr.mxu0 0.0
        %1613 = vmatpush1.xpose.msra.mxu0 0.0
        %1614 = vmatprep.subr.mxu0 0.0
        %1615 = vmatpush1.xpose.msra.mxu0 0.0
        %1616 = vmatprep.subr.mxu0 0.0
        %1617 = vmatpush1.xpose.msra.mxu0 0.0
        %1618 = vmatprep.subr.mxu0 0.0
        %1619 = vmatpush1.xpose.msra.mxu0 0.0
        %1620 = vmatprep.subr.mxu0 0.0
        %1621 = vmatpush1.xpose.msra.mxu0 0.0
        %1622 = vmatprep.subr.mxu0 0.0
        %1623 = vmatpush1.xpose.msra.mxu0 0.0
        %1624 = vmatprep.subr.mxu0 0.0
        %1625 = vmatpush1.xpose.msra.mxu0 0.0
        %1626 = vmatprep.subr.mxu0 0.0
        %1627 = vmatpush1.xpose.msra.mxu0 0.0
        %1628 = vmatprep.subr.mxu0 0.0
        %1629 = vmatpush1.xpose.msra.mxu0 0.0
        %1630 = vmatprep.subr.mxu0 0.0
        %1631 = vmatpush1.xpose.msra.mxu0 0.0
        %1632 = vmatprep.subr.mxu0 0.0
        %1633 = vmatpush1.xpose.msra.mxu0 0.0
        %1634 = vmatprep.subr.mxu0 0.0
        %1635 = vmatpush1.xpose.msra.mxu0 0.0
        %1636 = vmatprep.subr.mxu0 0.0
        %1637 = vmatpush1.xpose.msra.mxu0 0.0
        %1638 = vmatprep.subr.mxu0 0.0
        %1639 = vmatpush1.xpose.msra.mxu0 0.0
        %1640 = vmatprep.subr.mxu0 0.0
        %1641 = vmatpush1.xpose.msra.mxu0 0.0
        %1642 = vmatprep.subr.mxu0 0.0
        %1643 = vmatpush1.xpose.msra.mxu0 0.0
        %1644 = vmatprep.subr.mxu0 0.0
        %1645 = vmatpush1.xpose.msra.mxu0 0.0
        %1646 = vmatprep.subr.mxu0 0.0
        %1647 = vmatpush1.xpose.msra.mxu0 0.0
        %1648 = vmatprep.subr.mxu0 0.0
        %1649 = vmatpush1.xpose.msra.mxu0 0.0
        %1650 = vmatprep.subr.mxu0 0.0
        %1651 = vmatpush1.xpose.msra.mxu0 0.0
        %1652 = vmatprep.subr.mxu0 0.0
        %1653 = vmatpush1.xpose.msra.mxu0 0.0
        %1654 = vmatprep.subr.mxu0 0.0
        %1655 = vmatpush1.xpose.msra.mxu0 0.0
        %1656 = vmatprep.subr.mxu0 0.0
        %1657 = vmatpush1.xpose.msra.mxu0 0.0
        %1658 = vmatprep.subr.mxu0 0.0
        %1659 = vmatpush1.xpose.msra.mxu0 0.0
        %1660 = vmatprep.subr.mxu0 0.0
        %1661 = vmatpush1.xpose.msra.mxu0 0.0
        %1662 = vmatprep.subr.mxu0 0.0
        %1663 = vmatpush1.xpose.msra.mxu0 0.0
        %1664 = vmatprep.subr.mxu0 0.0
        %1665 = vmatpush1.xpose.msra.mxu0 0.0
        %1666 = vmatprep.subr.mxu0 0.0
        %1667 = vmatpush1.xpose.msra.mxu0 0.0
        %1668 = vmatprep.subr.mxu0 0.0
        %1669 = vmatpush1.xpose.msra.mxu0 0.0
        %1670 = vmatprep.mubr.f32.mxu0 0.0
        %1671 = vmatmul.mubr.f32.gmra.mrb[0].mxu0 %v1602
        %v1672 = vpop.f32.mrb[0].mxu0
        %v1673 = vadd.f32 0.0, %v1672
        %v1674 = vpop.f32.mrb[0].mxu0
        %1675 = vdwg.mxu0
        %v1676 = vmul.f32 %v1673, 0.5
        %v1677 = vadd.f32 %v1676, 1.0
        %v1678 = vmul.f32 %v1676, 0.5
        %v1679 = vmul.f32 %v1678, %v1676
        %v1680 = vadd.f32 %v1677, %v1679
        %1681 = vrot.lane.b32.xlu0 %v1159, 80
        %v1682 = vpop.permute.xlu0 %1681
        %v1684 = vsel %vm1253, %v1680, 0
        %v1686 = vsel %vm1257, %v1682, 0
        %1688 = vmatprep.subr.mxu0 0.0
        %1689 = vmatpush1.msra.mxu0 %v1686
        %1690 = vmatprep.subr.mxu0 0.0
        %1691 = vmatpush1.msra.mxu0 0.0
        %1692 = vmatprep.subr.mxu0 0.0
        %1693 = vmatpush1.msra.mxu0 0.0
        %1694 = vmatprep.subr.mxu0 0.0
        %1695 = vmatpush1.msra.mxu0 0.0
        %1696 = vmatprep.subr.mxu0 0.0
        %1697 = vmatpush1.msra.mxu0 0.0
        %1698 = vmatprep.subr.mxu0 0.0
        %1699 = vmatpush1.msra.mxu0 0.0
        %1700 = vmatprep.subr.mxu0 0.0
        %1701 = vmatpush1.msra.mxu0 0.0
        %1702 = vmatprep.subr.mxu0 0.0
        %1703 = vmatpush1.msra.mxu0 0.0
        %1704 = vmatprep.subr.mxu0 0.0
        %1705 = vmatpush1.msra.mxu0 0.0
        %1706 = vmatprep.subr.mxu0 0.0
        %1707 = vmatpush1.msra.mxu0 0.0
        %1708 = vmatprep.subr.mxu0 0.0
        %1709 = vmatpush1.msra.mxu0 0.0
        %1710 = vmatprep.subr.mxu0 0.0
        %1711 = vmatpush1.msra.mxu0 0.0
        %1712 = vmatprep.subr.mxu0 0.0
        %1713 = vmatpush1.msra.mxu0 0.0
        %1714 = vmatprep.subr.mxu0 0.0
        %1715 = vmatpush1.msra.mxu0 0.0
        %1716 = vmatprep.subr.mxu0 0.0
        %1717 = vmatpush1.msra.mxu0 0.0
        %1718 = vmatprep.subr.mxu0 0.0
        %1719 = vmatpush1.msra.mxu0 0.0
        %1720 = vmatprep.subr.mxu0 0.0
        %1721 = vmatpush1.msra.mxu0 0.0
        %1722 = vmatprep.subr.mxu0 0.0
        %1723 = vmatpush1.msra.mxu0 0.0
        %1724 = vmatprep.subr.mxu0 0.0
        %1725 = vmatpush1.msra.mxu0 0.0
        %1726 = vmatprep.subr.mxu0 0.0
        %1727 = vmatpush1.msra.mxu0 0.0
        %1728 = vmatprep.subr.mxu0 0.0
        %1729 = vmatpush1.msra.mxu0 0.0
        %1730 = vmatprep.subr.mxu0 0.0
        %1731 = vmatpush1.msra.mxu0 0.0
        %1732 = vmatprep.subr.mxu0 0.0
        %1733 = vmatpush1.msra.mxu0 0.0
        %1734 = vmatprep.subr.mxu0 0.0
        %1735 = vmatpush1.msra.mxu0 0.0
        %1736 = vmatprep.subr.mxu0 0.0
        %1737 = vmatpush1.msra.mxu0 0.0
        %1738 = vmatprep.subr.mxu0 0.0
        %1739 = vmatpush1.msra.mxu0 0.0
        %1740 = vmatprep.subr.mxu0 0.0
        %1741 = vmatpush1.msra.mxu0 0.0
        %1742 = vmatprep.subr.mxu0 0.0
        %1743 = vmatpush1.msra.mxu0 0.0
        %1744 = vmatprep.subr.mxu0 0.0
        %1745 = vmatpush1.msra.mxu0 0.0
        %1746 = vmatprep.subr.mxu0 0.0
        %1747 = vmatpush1.msra.mxu0 0.0
        %1748 = vmatprep.subr.mxu0 0.0
        %1749 = vmatpush1.msra.mxu0 0.0
        %1750 = vmatprep.subr.mxu0 0.0
        %1751 = vmatpush1.msra.mxu0 0.0
        %1752 = vmatprep.mubr.f32.mxu0 0.0
        %1753 = vmatmul.mubr.f32.gmra.mrb[0].mxu0 %v1684
        %v1754 = vpop.f32.mrb[0].mxu0
        %v1755 = vadd.f32 0.0, %v1754
        %v1756 = vpop.f32.mrb[0].mxu0
        %1757 = vdwg.mxu0
        %v1758 = vsel %vm1330, %v1680, 0.0
        %1759 = vadd.xlane.f32.xlu0 %v1758
        %v1760 = vpop.xlane.xlu0 %1759
        %v1761 = vadd.f32 %v1760, 1e-12
        %v1762 = vrcp.pop %v1761
        %v1763 = vmul.f32 %v1755, %v1762
        %v1764 = vpack.c.bf16 %v1763, %v1763
        %v1766 = vsel %vm1505, %v1764, 0
        %v1769 = vsel %vm715, %v1166, 0
        %1771 = vmatprep.subr.bf16.mxu0 0
        %1772 = vmatpush1.bf16.msra.mxu0 %v1769
        %1773 = vmatprep.subr.bf16.mxu0 0
        %1774 = vmatpush1.bf16.msra.mxu0 0
        %1775 = vmatprep.subr.bf16.mxu0 0
        %1776 = vmatpush1.bf16.msra.mxu0 0
        %1777 = vmatprep.subr.bf16.mxu0 0
        %1778 = vmatpush1.bf16.msra.mxu0 0
        %1779 = vmatprep.subr.bf16.mxu0 0
        %1780 = vmatpush1.bf16.msra.mxu0 0
        %1781 = vmatprep.subr.bf16.mxu0 0
        %1782 = vmatpush1.bf16.msra.mxu0 0
        %1783 = vmatprep.subr.bf16.mxu0 0
        %1784 = vmatpush1.bf16.msra.mxu0 0
        %1785 = vmatprep.subr.bf16.mxu0 0
        %1786 = vmatpush1.bf16.msra.mxu0 0
        %1787 = vmatprep.subr.bf16.mxu0 0
        %1788 = vmatpush1.bf16.msra.mxu0 0
        %1789 = vmatprep.subr.bf16.mxu0 0
        %1790 = vmatpush1.bf16.msra.mxu0 0
        %1791 = vmatprep.subr.bf16.mxu0 0
        %1792 = vmatpush1.bf16.msra.mxu0 0
        %1793 = vmatprep.subr.bf16.mxu0 0
        %1794 = vmatpush1.bf16.msra.mxu0 0
        %1795 = vmatprep.subr.bf16.mxu0 0
        %1796 = vmatpush1.bf16.msra.mxu0 0
        %1797 = vmatprep.subr.bf16.mxu0 0
        %1798 = vmatpush1.bf16.msra.mxu0 0
        %1799 = vmatprep.subr.bf16.mxu0 0
        %1800 = vmatpush1.bf16.msra.mxu0 0
        %1801 = vmatprep.subr.bf16.mxu0 0
        %1802 = vmatpush1.bf16.msra.mxu0 0
        %1803 = vmatprep.mubr.bf16.mxu0 0
        %1804 = vmatmul.mubr.bf16.gmra.mrb[0].mxu0 %v1766
        %v1805 = vpop.f32.mrb[0].mxu0
        %v1806 = vadd.f32 0.0, %v1805
        %v1807 = vpop.f32.mrb[0].mxu0
        %v1808 = vpop.f32.mrb[0].mxu0
        %v1809 = vpop.f32.mrb[0].mxu0
        %1810 = vdwg.mxu0
        %v1811 = vadd.f32 %v1593, %v1806
        %1812 = vrot.lane.b32.xlu0 %v1159, 116
        %v1813 = vpop.permute.xlu0 %1812
        %1814 = vrot.lane.b32.xlu0 %v1159, 100
        %v1815 = vpop.permute.xlu0 %1814
        %v1816 = vsel %vm1171, %v1813, 0
        %v1818 = vsel %vm1171, %v1815, 0
        %1820 = vmatprep.subr.mxu0 0.0
        %1821 = vmatpush1.xpose.msra.mxu0 %v1818
        %1822 = vmatprep.subr.mxu0 0.0
        %1823 = vmatpush1.xpose.msra.mxu0 0.0
        %1824 = vmatprep.subr.mxu0 0.0
        %1825 = vmatpush1.xpose.msra.mxu0 0.0
        %1826 = vmatprep.subr.mxu0 0.0
        %1827 = vmatpush1.xpose.msra.mxu0 0.0
        %1828 = vmatprep.subr.mxu0 0.0
        %1829 = vmatpush1.xpose.msra.mxu0 0.0
        %1830 = vmatprep.subr.mxu0 0.0
        %1831 = vmatpush1.xpose.msra.mxu0 0.0
        %1832 = vmatprep.subr.mxu0 0.0
        %1833 = vmatpush1.xpose.msra.mxu0 0.0
        %1834 = vmatprep.subr.mxu0 0.0
        %1835 = vmatpush1.xpose.msra.mxu0 0.0
        %1836 = vmatprep.subr.mxu0 0.0
        %1837 = vmatpush1.xpose.msra.mxu0 0.0
        %1838 = vmatprep.subr.mxu0 0.0
        %1839 = vmatpush1.xpose.msra.mxu0 0.0
        %1840 = vmatprep.subr.mxu0 0.0
        %1841 = vmatpush1.xpose.msra.mxu0 0.0
        %1842 = vmatprep.subr.mxu0 0.0
        %1843 = vmatpush1.xpose.msra.mxu0 0.0
        %1844 = vmatprep.subr.mxu0 0.0
        %1845 = vmatpush1.xpose.msra.mxu0 0.0
        %1846 = vmatprep.subr.mxu0 0.0
        %1847 = vmatpush1.xpose.msra.mxu0 0.0
        %1848 = vmatprep.subr.mxu0 0.0
        %1849 = vmatpush1.xpose.msra.mxu0 0.0
        %1850 = vmatprep.subr.mxu0 0.0
        %1851 = vmatpush1.xpose.msra.mxu0 0.0
        %1852 = vmatprep.subr.mxu0 0.0
        %1853 = vmatpush1.xpose.msra.mxu0 0.0
        %1854 = vmatprep.subr.mxu0 0.0
        %1855 = vmatpush1.xpose.msra.mxu0 0.0
        %1856 = vmatprep.subr.mxu0 0.0
        %1857 = vmatpush1.xpose.msra.mxu0 0.0
        %1858 = vmatprep.subr.mxu0 0.0
        %1859 = vmatpush1.xpose.msra.mxu0 0.0
        %1860 = vmatprep.subr.mxu0 0.0
        %1861 = vmatpush1.xpose.msra.mxu0 0.0
        %1862 = vmatprep.subr.mxu0 0.0
        %1863 = vmatpush1.xpose.msra.mxu0 0.0
        %1864 = vmatprep.subr.mxu0 0.0
        %1865 = vmatpush1.xpose.msra.mxu0 0.0
        %1866 = vmatprep.subr.mxu0 0.0
        %1867 = vmatpush1.xpose.msra.mxu0 0.0
        %1868 = vmatprep.subr.mxu0 0.0
        %1869 = vmatpush1.xpose.msra.mxu0 0.0
        %1870 = vmatprep.subr.mxu0 0.0
        %1871 = vmatpush1.xpose.msra.mxu0 0.0
        %1872 = vmatprep.subr.mxu0 0.0
        %1873 = vmatpush1.xpose.msra.mxu0 0.0
        %1874 = vmatprep.subr.mxu0 0.0
        %1875 = vmatpush1.xpose.msra.mxu0 0.0
        %1876 = vmatprep.subr.mxu0 0.0
        %1877 = vmatpush1.xpose.msra.mxu0 0.0
        %1878 = vmatprep.subr.mxu0 0.0
        %1879 = vmatpush1.xpose.msra.mxu0 0.0
        %1880 = vmatprep.subr.mxu0 0.0
        %1881 = vmatpush1.xpose.msra.mxu0 0.0
        %1882 = vmatprep.subr.mxu0 0.0
        %1883 = vmatpush1.xpose.msra.mxu0 0.0
        %1884 = vmatprep.mubr.f32.mxu0 0.0
        %1885 = vmatmul.mubr.f32.gmra.mrb[0].mxu0 %v1816
        %v1886 = vpop.f32.mrb[0].mxu0
        %v1887 = vadd.f32 0.0, %v1886
        %v1888 = vpop.f32.mrb[0].mxu0
        %1889 = vdwg.mxu0
        %v1890 = vmul.f32 %v1887, 0.5
        %v1891 = vadd.f32 %v1890, 1.0
        %v1892 = vmul.f32 %v1890, 0.5
        %v1893 = vmul.f32 %v1892, %v1890
        %v1894 = vadd.f32 %v1891, %v1893
        %1895 = vrot.lane.b32.xlu0 %v1159, 72
        %v1896 = vpop.permute.xlu0 %1895
        %v1898 = vsel %vm1253, %v1894, 0
        %v1900 = vsel %vm1257, %v1896, 0
        %1902 = vmatprep.subr.mxu0 0.0
        %1903 = vmatpush1.msra.mxu0 %v1900
        %1904 = vmatprep.subr.mxu0 0.0
        %1905 = vmatpush1.msra.mxu0 0.0
        %1906 = vmatprep.subr.mxu0 0.0
        %1907 = vmatpush1.msra.mxu0 0.0
        %1908 = vmatprep.subr.mxu0 0.0
        %1909 = vmatpush1.msra.mxu0 0.0
        %1910 = vmatprep.subr.mxu0 0.0
        %1911 = vmatpush1.msra.mxu0 0.0
        %1912 = vmatprep.subr.mxu0 0.0
        %1913 = vmatpush1.msra.mxu0 0.0
        %1914 = vmatprep.subr.mxu0 0.0
        %1915 = vmatpush1.msra.mxu0 0.0
        %1916 = vmatprep.subr.mxu0 0.0
        %1917 = vmatpush1.msra.mxu0 0.0
        %1918 = vmatprep.subr.mxu0 0.0
        %1919 = vmatpush1.msra.mxu0 0.0
        %1920 = vmatprep.subr.mxu0 0.0
        %1921 = vmatpush1.msra.mxu0 0.0
        %1922 = vmatprep.subr.mxu0 0.0
        %1923 = vmatpush1.msra.mxu0 0.0
        %1924 = vmatprep.subr.mxu0 0.0
        %1925 = vmatpush1.msra.mxu0 0.0
        %1926 = vmatprep.subr.mxu0 0.0
        %1927 = vmatpush1.msra.mxu0 0.0
        %1928 = vmatprep.subr.mxu0 0.0
        %1929 = vmatpush1.msra.mxu0 0.0
        %1930 = vmatprep.subr.mxu0 0.0
        %1931 = vmatpush1.msra.mxu0 0.0
        %1932 = vmatprep.subr.mxu0 0.0
        %1933 = vmatpush1.msra.mxu0 0.0
        %1934 = vmatprep.subr.mxu0 0.0
        %1935 = vmatpush1.msra.mxu0 0.0
        %1936 = vmatprep.subr.mxu0 0.0
        %1937 = vmatpush1.msra.mxu0 0.0
        %1938 = vmatprep.subr.mxu0 0.0
        %1939 = vmatpush1.msra.mxu0 0.0
        %1940 = vmatprep.subr.mxu0 0.0
        %1941 = vmatpush1.msra.mxu0 0.0
        %1942 = vmatprep.subr.mxu0 0.0
        %1943 = vmatpush1.msra.mxu0 0.0
        %1944 = vmatprep.subr.mxu0 0.0
        %1945 = vmatpush1.msra.mxu0 0.0
        %1946 = vmatprep.subr.mxu0 0.0
        %1947 = vmatpush1.msra.mxu0 0.0
        %1948 = vmatprep.subr.mxu0 0.0
        %1949 = vmatpush1.msra.mxu0 0.0
        %1950 = vmatprep.subr.mxu0 0.0
        %1951 = vmatpush1.msra.mxu0 0.0
        %1952 = vmatprep.subr.mxu0 0.0
        %1953 = vmatpush1.msra.mxu0 0.0
        %1954 = vmatprep.subr.mxu0 0.0
        %1955 = vmatpush1.msra.mxu0 0.0
        %1956 = vmatprep.subr.mxu0 0.0
        %1957 = vmatpush1.msra.mxu0 0.0
        %1958 = vmatprep.subr.mxu0 0.0
        %1959 = vmatpush1.msra.mxu0 0.0
        %1960 = vmatprep.subr.mxu0 0.0
        %1961 = vmatpush1.msra.mxu0 0.0
        %1962 = vmatprep.subr.mxu0 0.0
        %1963 = vmatpush1.msra.mxu0 0.0
        %1964 = vmatprep.subr.mxu0 0.0
        %1965 = vmatpush1.msra.mxu0 0.0
        %1966 = vmatprep.mubr.f32.mxu0 0.0
        %1967 = vmatmul.mubr.f32.gmra.mrb[0].mxu0 %v1898
        %v1968 = vpop.f32.mrb[0].mxu0
        %v1969 = vadd.f32 0.0, %v1968
        %v1970 = vpop.f32.mrb[0].mxu0
        %1971 = vdwg.mxu0
        %v1972 = vsel %vm1330, %v1894, 0.0
        %1973 = vadd.xlane.f32.xlu0 %v1972
        %v1974 = vpop.xlane.xlu0 %1973
        %v1975 = vadd.f32 %v1974, 1e-12
        %v1976 = vrcp.pop %v1975
        %v1977 = vmul.f32 %v1969, %v1976
        %v1978 = vpack.c.bf16 %v1977, %v1977
        %v1980 = vsel %vm1505, %v1978, 0
        %v1983 = vsel %vm715, %v1167, 0
        %1985 = vmatprep.subr.bf16.mxu0 0
        %1986 = vmatpush1.bf16.msra.mxu0 %v1983
        %1987 = vmatprep.subr.bf16.mxu0 0
        %1988 = vmatpush1.bf16.msra.mxu0 0
        %1989 = vmatprep.subr.bf16.mxu0 0
        %1990 = vmatpush1.bf16.msra.mxu0 0
        %1991 = vmatprep.subr.bf16.mxu0 0
        %1992 = vmatpush1.bf16.msra.mxu0 0
        %1993 = vmatprep.subr.bf16.mxu0 0
        %1994 = vmatpush1.bf16.msra.mxu0 0
        %1995 = vmatprep.subr.bf16.mxu0 0
        %1996 = vmatpush1.bf16.msra.mxu0 0
        %1997 = vmatprep.subr.bf16.mxu0 0
        %1998 = vmatpush1.bf16.msra.mxu0 0
        %1999 = vmatprep.subr.bf16.mxu0 0
        %2000 = vmatpush1.bf16.msra.mxu0 0
        %2001 = vmatprep.subr.bf16.mxu0 0
        %2002 = vmatpush1.bf16.msra.mxu0 0
        %2003 = vmatprep.subr.bf16.mxu0 0
        %2004 = vmatpush1.bf16.msra.mxu0 0
        %2005 = vmatprep.subr.bf16.mxu0 0
        %2006 = vmatpush1.bf16.msra.mxu0 0
        %2007 = vmatprep.subr.bf16.mxu0 0
        %2008 = vmatpush1.bf16.msra.mxu0 0
        %2009 = vmatprep.subr.bf16.mxu0 0
        %2010 = vmatpush1.bf16.msra.mxu0 0
        %2011 = vmatprep.subr.bf16.mxu0 0
        %2012 = vmatpush1.bf16.msra.mxu0 0
        %2013 = vmatprep.subr.bf16.mxu0 0
        %2014 = vmatpush1.bf16.msra.mxu0 0
        %2015 = vmatprep.subr.bf16.mxu0 0
        %2016 = vmatpush1.bf16.msra.mxu0 0
        %2017 = vmatprep.mubr.bf16.mxu0 0
        %2018 = vmatmul.mubr.bf16.gmra.mrb[0].mxu0 %v1980
        %v2019 = vpop.f32.mrb[0].mxu0
        %v2020 = vadd.f32 0.0, %v2019
        %v2021 = vpop.f32.mrb[0].mxu0
        %v2022 = vpop.f32.mrb[0].mxu0
        %v2023 = vpop.f32.mrb[0].mxu0
        %2024 = vdwg.mxu0
        %v2025 = vadd.f32 %v1811, %v2020
        %v2026 = vld [vmem:[%s15] sm:$0xf]
        %v2027 = vld [vmem:[%s15 + $0x4] sm:$0xf]
        %v2028 = vld [vmem:[%s15 + $0x8] sm:$0xf]
        %v2029 = vld [vmem:[%s15 + $0xc] sm:$0xf]
        %v2030 = vpack.c.bf16 %v2025, %v2025
        %v2031 = vld [vmem:[%s16] sm:$0x1]
        %v2033 = vlaneseq
        %v2034 = vshrl.u32 %v2033, 7
        %v2035 = vsub.s32 0, %v2034
        %v2036 = vrot.slane %v2031, %v2035
        %v2042 = vunpack.c.l.b16 %v2026
        %v2043 = vunpack.c.l.b16 %v2027
        %v2044 = vunpack.c.l.b16 %v2028
        %v2045 = vunpack.c.l.b16 %v2029
        %v2046 = vpack.c.b16 %v2043, %v2042
        %v2047 = vpack.c.b16 %v2045, %v2044
        %v2051 = vsel %vm1058, %v2030, 0
        %2053 = vmatprep.subr.bf16.mxu0 0
        %2054 = vmatpush1.bf16.msra.mxu0 %v2046
        %2055 = vmatprep.subr.bf16.mxu0 0
        %2056 = vmatpush1.bf16.msra.mxu0 %v2047
        %2057 = vmatprep.subr.bf16.mxu0 0
        %2058 = vmatpush1.bf16.msra.mxu0 0
        %2059 = vmatprep.subr.bf16.mxu0 0
        %2060 = vmatpush1.bf16.msra.mxu0 0
        %2061 = vmatprep.subr.bf16.mxu0 0
        %2062 = vmatpush1.bf16.msra.mxu0 0
        %2063 = vmatprep.subr.bf16.mxu0 0
        %2064 = vmatpush1.bf16.msra.mxu0 0
        %2065 = vmatprep.subr.bf16.mxu0 0
        %2066 = vmatpush1.bf16.msra.mxu0 0
        %2067 = vmatprep.subr.bf16.mxu0 0
        %2068 = vmatpush1.bf16.msra.mxu0 0
        %2069 = vmatprep.subr.bf16.mxu0 0
        %2070 = vmatpush1.bf16.msra.mxu0 0
        %2071 = vmatprep.subr.bf16.mxu0 0
        %2072 = vmatpush1.bf16.msra.mxu0 0
        %2073 = vmatprep.subr.bf16.mxu0 0
        %2074 = vmatpush1.bf16.msra.mxu0 0
        %2075 = vmatprep.subr.bf16.mxu0 0
        %2076 = vmatpush1.bf16.msra.mxu0 0
        %2077 = vmatprep.subr.bf16.mxu0 0
        %2078 = vmatpush1.bf16.msra.mxu0 0
        %2079 = vmatprep.subr.bf16.mxu0 0
        %2080 = vmatpush1.bf16.msra.mxu0 0
        %2081 = vmatprep.subr.bf16.mxu0 0
        %2082 = vmatpush1.bf16.msra.mxu0 0
        %2083 = vmatprep.subr.bf16.mxu0 0
        %2084 = vmatpush1.bf16.msra.mxu0 0
        %2085 = vmatprep.mubr.bf16.mxu0 0
        %2086 = vmatmul.mubr.bf16.gmra.mrb[0].mxu0 %v2051
        %v2087 = vpop.f32.mrb[0].mxu0
        %v2088 = vadd.f32 %v2036, %v2087
        %v2089 = vpop.f32.mrb[0].mxu0
        %v2090 = vpop.f32.mrb[0].mxu0
        %v2091 = vpop.f32.mrb[0].mxu0
        %2092 = vdwg.mxu0
        %v2093 = vmul.f32 %v2088, 0.5
        %v2094 = vmul.f32 %v2088, 0.70710677
        %v2095 = vand.u32 2147483647, %v2094
        %v2096 = vmul.f32 %v2095, 0.3275911
        %v2097 = vadd.f32 %v2096, 1.0
        %v2098 = vrcp.pop %v2097
        %v2099 = vmul.f32 1.0, %v2098
        %v2100 = vmul.f32 %v2099, 1.0614054
        %v2101 = vadd.f32 %v2100, -1.4531521
        %v2102 = vmul.f32 %v2101, %v2099
        %v2103 = vadd.f32 %v2102, 1.4214138
        %v2104 = vmul.f32 %v2103, %v2099
        %v2105 = vadd.f32 %v2104, -0.28449672
        %v2106 = vmul.f32 %v2105, %v2099
        %v2107 = vadd.f32 %v2106, 0.2548296
        %v2108 = vmul.f32 %v2107, %v2099
        %v2109 = vmul.f32 %v2095, %v2095
        %v2110 = vsub.f32 0.0, %v2109
        %v2111 = vmul.f32 %v2110, 1.442695
        %v2112 = vpow.pop %v2111
        %v2113 = vmul.f32 %v2108, %v2112
        %v2114 = vsub.f32 1.0, %v2113
        %vm2115 = vcmp.lt.f32.partialorder %v2094, 0.0
        %v2116 = vsub.f32 0.0, %v2114
        %v2117 = vsel %vm2115, %v2116, %v2114
        %v2118 = vadd.f32 %v2117, 1.0
        %v2119 = vmul.f32 %v2093, %v2118
        %v2120 = vld [vmem:[%s17] sm:$0xf]
        %v2121 = vld [vmem:[%s17 + $0x4] sm:$0xf]
        %v2122 = vld [vmem:[%s17 + $0x8] sm:$0xf]
        %v2123 = vld [vmem:[%s17 + $0xc] sm:$0xf]
        %v2124 = vld [vmem:[%s17 + $0x10] sm:$0xf]
        %v2125 = vld [vmem:[%s17 + $0x14] sm:$0xf]
        %v2126 = vld [vmem:[%s17 + $0x18] sm:$0xf]
        %v2127 = vld [vmem:[%s17 + $0x1c] sm:$0xf]
        %v2128 = vpack.c.bf16 %v2119, %v2119
        %v2129 = vld [vmem:[%s18] sm:$0x1]
        %v2131 = vlaneseq
        %v2132 = vshrl.u32 %v2131, 7
        %v2133 = vsub.s32 0, %v2132
        %v2134 = vrot.slane %v2129, %v2133
        %v2144 = vunpack.c.l.b16 %v2120
        %v2145 = vunpack.c.l.b16 %v2121
        %v2146 = vunpack.c.l.b16 %v2122
        %v2147 = vunpack.c.l.b16 %v2123
        %v2148 = vunpack.c.l.b16 %v2124
        %v2149 = vunpack.c.l.b16 %v2125
        %v2150 = vunpack.c.l.b16 %v2126
        %v2151 = vunpack.c.l.b16 %v2127
        %v2152 = vpack.c.b16 %v2145, %v2144
        %v2153 = vpack.c.b16 %v2147, %v2146
        %v2154 = vpack.c.b16 %v2149, %v2148
        %v2155 = vpack.c.b16 %v2151, %v2150
        %vm2160 = vcmask 523264
        %v2162 = vsel %vm2160, %v2128, 0
        %2164 = vmatprep.subr.bf16.mxu0 0
        %2165 = vmatpush1.bf16.msra.mxu0 %v2152
        %2166 = vmatprep.subr.bf16.mxu0 0
        %2167 = vmatpush1.bf16.msra.mxu0 %v2153
        %2168 = vmatprep.subr.bf16.mxu0 0
        %2169 = vmatpush1.bf16.msra.mxu0 %v2154
        %2170 = vmatprep.subr.bf16.mxu0 0
        %2171 = vmatpush1.bf16.msra.mxu0 %v2155
        %2172 = vmatprep.subr.bf16.mxu0 0
        %2173 = vmatpush1.bf16.msra.mxu0 0
        %2174 = vmatprep.subr.bf16.mxu0 0
        %2175 = vmatpush1.bf16.msra.mxu0 0
        %2176 = vmatprep.subr.bf16.mxu0 0
        %2177 = vmatpush1.bf16.msra.mxu0 0
        %2178 = vmatprep.subr.bf16.mxu0 0
        %2179 = vmatpush1.bf16.msra.mxu0 0
        %2180 = vmatprep.subr.bf16.mxu0 0
        %2181 = vmatpush1.bf16.msra.mxu0 0
        %2182 = vmatprep.subr.bf16.mxu0 0
        %2183 = vmatpush1.bf16.msra.mxu0 0
        %2184 = vmatprep.subr.bf16.mxu0 0
        %2185 = vmatpush1.bf16.msra.mxu0 0
        %2186 = vmatprep.subr.bf16.mxu0 0
        %2187 = vmatpush1.bf16.msra.mxu0 0
        %2188 = vmatprep.subr.bf16.mxu0 0
        %2189 = vmatpush1.bf16.msra.mxu0 0
        %2190 = vmatprep.subr.bf16.mxu0 0
        %2191 = vmatpush1.bf16.msra.mxu0 0
        %2192 = vmatprep.subr.bf16.mxu0 0
        %2193 = vmatpush1.bf16.msra.mxu0 0
        %2194 = vmatprep.subr.bf16.mxu0 0
        %2195 = vmatpush1.bf16.msra.mxu0 0
        %2196 = vmatprep.mubr.bf16.mxu0 0
        %2197 = vmatmul.mubr.bf16.gmra.mrb[0].mxu0 %v2162
        %v2198 = vpop.f32.mrb[0].mxu0
        %v2199 = vadd.f32 %v2134, %v2198
        %v2200 = vpop.f32.mrb[0].mxu0
        %v2201 = vpop.f32.mrb[0].mxu0
        %v2202 = vpop.f32.mrb[0].mxu0
        %2203 = vdwg.mxu0
        %v2204 = vadd.f32 %v965, %v2199
        %s2205 = scalar_lea.vmem %s7, 1
        %v2206 = vld [vmem:[%s2205] sm:$0x1]
        %s2207 = scalar_lea.vmem %s8, 1
        %v2208 = vld [vmem:[%s2207] sm:$0x1]
        %v2209 = vsel %vm968, %v2204, 0.0
        %2210 = vadd.xlane.f32.xlu0 %v2209
        %v2211 = vpop.xlane.xlu0 %2210
        %v2212 = vmul.f32 %v2211, %v972
        %v2213 = vsub.f32 %v2204, %v2212
        %v2214 = vmul.f32 %v2213, %v2213
        %v2215 = vsel %vm968, %v2214, 0.0
        %2216 = vadd.xlane.f32.xlu0 %v2215
        %v2217 = vpop.xlane.xlu0 %2216
        %v2218 = vmul.f32 %v2217, %v972
        %v2219 = vadd.f32 %v2218, 1e-05
        %v2220 = vrsqrt.pop %v2219
        %v2221 = vmul.f32 %v2213, %v2220
        %v2223 = vlaneseq
        %v2224 = vshrl.u32 %v2223, 7
        %v2225 = vsub.s32 0, %v2224
        %v2226 = vrot.slane %v2206, %v2225
        %v2228 = vmul.f32 %v2221, %v2226
        %v2230 = vlaneseq
        %v2231 = vshrl.u32 %v2230, 7
        %v2232 = vsub.s32 0, %v2231
        %v2233 = vrot.slane %v2208, %v2232
        %v2235 = vadd.f32 %v2228, %v2233
        %s2236 = scalar_lea.vmem %s9, 4
        %v2237 = vld [vmem:[%s2236] sm:$0x7]
        %s2238 = scalar_lea.vmem %s10, 1
        %v2239 = vld [vmem:[%s2238] sm:$0x1]
        %v2241 = vrot.slane %v2235, 6
        %v2243 = vsel %vm1002, 0.0, %v2241
        %v2244 = vlaneseq
        %v2245 = vshrl.u32 %v2244, 7
        %v2246 = vsub.s32 0, %v2245
        %v2247 = vrot.slane %v2237, %v2246
        %v2248 = vmul.f32 %v2243, %v2247
        %v2250 = vlaneseq
        %v2251 = vshrl.u32 %v2250, 7
        %v2252 = vsub.s32 0, %v2251
        %v2253 = vrot.slane %v2239, %v2252
        %v2255 = vadd.f32 %v2253, %v2248
        %v2256 = vlaneseq
        %v2257 = vshrl.u32 %v2256, 7
        %v2258 = vsub.s32 1, %v2257
        %v2259 = vrot.slane %v2237, %v2258
        %v2260 = vmul.f32 %v2243, %v2259
        %v2262 = vrot.slane %v2260, 1
        %v2264 = vadd.f32 %v2255, %v2262
        %v2265 = vlaneseq
        %v2266 = vshrl.u32 %v2265, 7
        %v2267 = vsub.s32 2, %v2266
        %v2268 = vrot.slane %v2237, %v2267
        %v2269 = vmul.f32 %v2243, %v2268
        %v2271 = vrot.slane %v2269, 2
        %v2273 = vadd.f32 %v2264, %v2271
        %s2274 = scalar_lea.vmem %s11, 16
        %v2275 = vld [vmem:[%s2274] sm:$0xf]
        %v2276 = vld [vmem:[%s2274 + $0x4] sm:$0xf]
        %v2277 = vld [vmem:[%s2274 + $0x8] sm:$0xf]
        %v2278 = vld [vmem:[%s2274 + $0xc] sm:$0xf]
        %v2279 = vpack.c.bf16 %v2235, %v2235
        %s2280 = scalar_lea.vmem %s12, 1
        %v2281 = vld [vmem:[%s2280] sm:$0x1]
        %v2283 = vlaneseq
        %v2284 = vshrl.u32 %v2283, 7
        %v2285 = vsub.s32 0, %v2284
        %v2286 = vrot.slane %v2281, %v2285
        %v2292 = vunpack.c.l.b16 %v2275
        %v2293 = vunpack.c.l.b16 %v2276
        %v2294 = vunpack.c.l.b16 %v2277
        %v2295 = vunpack.c.l.b16 %v2278
        %v2296 = vpack.c.b16 %v2293, %v2292
        %v2297 = vpack.c.b16 %v2295, %v2294
        %v2301 = vsel %vm1058, %v2279, 0
        %2303 = vmatprep.subr.bf16.mxu0 0
        %2304 = vmatpush1.bf16.msra.mxu0 %v2296
        %2305 = vmatprep.subr.bf16.mxu0 0
        %2306 = vmatpush1.bf16.msra.mxu0 %v2297
        %2307 = vmatprep.subr.bf16.mxu0 0
        %2308 = vmatpush1.bf16.msra.mxu0 0
        %2309 = vmatprep.subr.bf16.mxu0 0
        %2310 = vmatpush1.bf16.msra.mxu0 0
        %2311 = vmatprep.subr.bf16.mxu0 0
        %2312 = vmatpush1.bf16.msra.mxu0 0
        %2313 = vmatprep.subr.bf16.mxu0 0
        %2314 = vmatpush1.bf16.msra.mxu0 0
        %2315 = vmatprep.subr.bf16.mxu0 0
        %2316 = vmatpush1.bf16.msra.mxu0 0
        %2317 = vmatprep.subr.bf16.mxu0 0
        %2318 = vmatpush1.bf16.msra.mxu0 0
        %2319 = vmatprep.subr.bf16.mxu0 0
        %2320 = vmatpush1.bf16.msra.mxu0 0
        %2321 = vmatprep.subr.bf16.mxu0 0
        %2322 = vmatpush1.bf16.msra.mxu0 0
        %2323 = vmatprep.subr.bf16.mxu0 0
        %2324 = vmatpush1.bf16.msra.mxu0 0
        %2325 = vmatprep.subr.bf16.mxu0 0
        %2326 = vmatpush1.bf16.msra.mxu0 0
        %2327 = vmatprep.subr.bf16.mxu0 0
        %2328 = vmatpush1.bf16.msra.mxu0 0
        %2329 = vmatprep.subr.bf16.mxu0 0
        %2330 = vmatpush1.bf16.msra.mxu0 0
        %2331 = vmatprep.subr.bf16.mxu0 0
        %2332 = vmatpush1.bf16.msra.mxu0 0
        %2333 = vmatprep.subr.bf16.mxu0 0
        %2334 = vmatpush1.bf16.msra.mxu0 0
        %2335 = vmatprep.mubr.bf16.mxu0 0
        %2336 = vmatmul.mubr.bf16.gmra.mrb[0].mxu0 %v2301
        %v2337 = vpop.f32.mrb[0].mxu0
        %v2338 = vadd.f32 %v2286, %v2337
        %v2339 = vpop.f32.mrb[0].mxu0
        %v2340 = vpop.f32.mrb[0].mxu0
        %v2341 = vpop.f32.mrb[0].mxu0
        %2342 = vdwg.mxu0
        %v2343 = vmul.f32 %v2273, %v2338
        %v2344 = vadd.f32 %v2343, %v2235
        %s2345 = scalar_lea.vmem %s13, 16
        %v2346 = vld [vmem:[%s2345] sm:$0xf]
        %v2347 = vld [vmem:[%s2345 + $0x4] sm:$0xf]
        %v2348 = vld [vmem:[%s2345 + $0x8] sm:$0xf]
        %v2349 = vld [vmem:[%s2345 + $0xc] sm:$0xf]
        %v2350 = vpack.c.bf16 %v2344, %v2344
        %v2355 = vunpack.c.l.b16 %v2346
        %v2356 = vunpack.c.l.b16 %v2347
        %v2357 = vunpack.c.l.b16 %v2348
        %v2358 = vunpack.c.l.b16 %v2349
        %v2359 = vpack.c.b16 %v2356, %v2355
        %v2360 = vpack.c.b16 %v2358, %v2357
        %v2364 = vsel %vm1058, %v2350, 0
        %2366 = vmatprep.subr.bf16.mxu0 0
        %2367 = vmatpush1.bf16.msra.mxu0 %v2359
        %2368 = vmatprep.subr.bf16.mxu0 0
        %2369 = vmatpush1.bf16.msra.mxu0 %v2360
        %2370 = vmatprep.subr.bf16.mxu0 0
        %2371 = vmatpush1.bf16.msra.mxu0 0
        %2372 = vmatprep.subr.bf16.mxu0 0
        %2373 = vmatpush1.bf16.msra.mxu0 0
        %2374 = vmatprep.subr.bf16.mxu0 0
        %2375 = vmatpush1.bf16.msra.mxu0 0
        %2376 = vmatprep.subr.bf16.mxu0 0
        %2377 = vmatpush1.bf16.msra.mxu0 0
        %2378 = vmatprep.subr.bf16.mxu0 0
        %2379 = vmatpush1.bf16.msra.mxu0 0
        %2380 = vmatprep.subr.bf16.mxu0 0
        %2381 = vmatpush1.bf16.msra.mxu0 0
        %2382 = vmatprep.subr.bf16.mxu0 0
        %2383 = vmatpush1.bf16.msra.mxu0 0
        %2384 = vmatprep.subr.bf16.mxu0 0
        %2385 = vmatpush1.bf16.msra.mxu0 0
        %2386 = vmatprep.subr.bf16.mxu0 0
        %2387 = vmatpush1.bf16.msra.mxu0 0
        %2388 = vmatprep.subr.bf16.mxu0 0
        %2389 = vmatpush1.bf16.msra.mxu0 0
        %2390 = vmatprep.subr.bf16.mxu0 0
        %2391 = vmatpush1.bf16.msra.mxu0 0
        %2392 = vmatprep.subr.bf16.mxu0 0
        %2393 = vmatpush1.bf16.msra.mxu0 0
        %2394 = vmatprep.subr.bf16.mxu0 0
        %2395 = vmatpush1.bf16.msra.mxu0 0
        %2396 = vmatprep.subr.bf16.mxu0 0
        %2397 = vmatpush1.bf16.msra.mxu0 0
        %2398 = vmatprep.mubr.bf16.mxu0 0
        %2399 = vmatmul.mubr.bf16.gmra.mrb[0].mxu0 %v2364
        %v2400 = vpop.f32.mrb[0].mxu0
        %v2401 = vadd.f32 0.0, %v2400
        %v2402 = vpop.f32.mrb[0].mxu0
        %v2403 = vpop.f32.mrb[0].mxu0
        %v2404 = vpop.f32.mrb[0].mxu0
        %2405 = vdwg.mxu0
        %s2406 = scalar_lea.vmem %s14, 16
        %v2407 = vld [vmem:[%s2406] sm:$0xf]
        %v2408 = vld [vmem:[%s2406 + $0x4] sm:$0xf]
        %v2409 = vld [vmem:[%s2406 + $0x8] sm:$0xf]
        %v2410 = vld [vmem:[%s2406 + $0xc] sm:$0xf]
        %2412 = vrot.lane.b32.xlu0 %v2401, 112
        %v2413 = vpop.permute.xlu0 %2412
        %v2414 = vsel %vm1171, %v2401, 0
        %v2416 = vsel %vm1171, %v2413, 0
        %2418 = vmatprep.subr.mxu0 0.0
        %2419 = vmatpush1.xpose.msra.mxu0 %v2416
        %2420 = vmatprep.subr.mxu0 0.0
        %2421 = vmatpush1.xpose.msra.mxu0 0.0
        %2422 = vmatprep.subr.mxu0 0.0
        %2423 = vmatpush1.xpose.msra.mxu0 0.0
        %2424 = vmatprep.subr.mxu0 0.0
        %2425 = vmatpush1.xpose.msra.mxu0 0.0
        %2426 = vmatprep.subr.mxu0 0.0
        %2427 = vmatpush1.xpose.msra.mxu0 0.0
        %2428 = vmatprep.subr.mxu0 0.0
        %2429 = vmatpush1.xpose.msra.mxu0 0.0
        %2430 = vmatprep.subr.mxu0 0.0
        %2431 = vmatpush1.xpose.msra.mxu0 0.0
        %2432 = vmatprep.subr.mxu0 0.0
        %2433 = vmatpush1.xpose.msra.mxu0 0.0
        %2434 = vmatprep.subr.mxu0 0.0
        %2435 = vmatpush1.xpose.msra.mxu0 0.0
        %2436 = vmatprep.subr.mxu0 0.0
        %2437 = vmatpush1.xpose.msra.mxu0 0.0
        %2438 = vmatprep.subr.mxu0 0.0
        %2439 = vmatpush1.xpose.msra.mxu0 0.0
        %2440 = vmatprep.subr.mxu0 0.0
        %2441 = vmatpush1.xpose.msra.mxu0 0.0
        %2442 = vmatprep.subr.mxu0 0.0
        %2443 = vmatpush1.xpose.msra.mxu0 0.0
        %2444 = vmatprep.subr.mxu0 0.0
        %2445 = vmatpush1.xpose.msra.mxu0 0.0
        %2446 = vmatprep.subr.mxu0 0.0
        %2447 = vmatpush1.xpose.msra.mxu0 0.0
        %2448 = vmatprep.subr.mxu0 0.0
        %2449 = vmatpush1.xpose.msra.mxu0 0.0
        %2450 = vmatprep.subr.mxu0 0.0
        %2451 = vmatpush1.xpose.msra.mxu0 0.0
        %2452 = vmatprep.subr.mxu0 0.0
        %2453 = vmatpush1.xpose.msra.mxu0 0.0
        %2454 = vmatprep.subr.mxu0 0.0
        %2455 = vmatpush1.xpose.msra.mxu0 0.0
        %2456 = vmatprep.subr.mxu0 0.0
        %2457 = vmatpush1.xpose.msra.mxu0 0.0
        %2458 = vmatprep.subr.mxu0 0.0
        %2459 = vmatpush1.xpose.msra.mxu0 0.0
        %2460 = vmatprep.subr.mxu0 0.0
        %2461 = vmatpush1.xpose.msra.mxu0 0.0
        %2462 = vmatprep.subr.mxu0 0.0
        %2463 = vmatpush1.xpose.msra.mxu0 0.0
        %2464 = vmatprep.subr.mxu0 0.0
        %2465 = vmatpush1.xpose.msra.mxu0 0.0
        %2466 = vmatprep.subr.mxu0 0.0
        %2467 = vmatpush1.xpose.msra.mxu0 0.0
        %2468 = vmatprep.subr.mxu0 0.0
        %2469 = vmatpush1.xpose.msra.mxu0 0.0
        %2470 = vmatprep.subr.mxu0 0.0
        %2471 = vmatpush1.xpose.msra.mxu0 0.0
        %2472 = vmatprep.subr.mxu0 0.0
        %2473 = vmatpush1.xpose.msra.mxu0 0.0
        %2474 = vmatprep.subr.mxu0 0.0
        %2475 = vmatpush1.xpose.msra.mxu0 0.0
        %2476 = vmatprep.subr.mxu0 0.0
        %2477 = vmatpush1.xpose.msra.mxu0 0.0
        %2478 = vmatprep.subr.mxu0 0.0
        %2479 = vmatpush1.xpose.msra.mxu0 0.0
        %2480 = vmatprep.subr.mxu0 0.0
        %2481 = vmatpush1.xpose.msra.mxu0 0.0
        %2482 = vmatprep.mubr.f32.mxu0 0.0
        %2483 = vmatmul.mubr.f32.gmra.mrb[0].mxu0 %v2414
        %v2484 = vpop.f32.mrb[0].mxu0
        %v2485 = vadd.f32 0.0, %v2484
        %v2486 = vpop.f32.mrb[0].mxu0
        %2487 = vdwg.mxu0
        %v2488 = vmul.f32 %v2485, 0.5
        %v2489 = vadd.f32 %v2488, 1.0
        %v2490 = vmul.f32 %v2488, 0.5
        %v2491 = vmul.f32 %v2490, %v2488
        %v2492 = vadd.f32 %v2489, %v2491
        %2493 = vrot.lane.b32.xlu0 %v2401, 96
        %v2494 = vpop.permute.xlu0 %2493
        %v2496 = vsel %vm1253, %v2492, 0
        %v2498 = vsel %vm1257, %v2494, 0
        %2500 = vmatprep.subr.mxu0 0.0
        %2501 = vmatpush1.msra.mxu0 %v2498
        %2502 = vmatprep.subr.mxu0 0.0
        %2503 = vmatpush1.msra.mxu0 0.0
        %2504 = vmatprep.subr.mxu0 0.0
        %2505 = vmatpush1.msra.mxu0 0.0
        %2506 = vmatprep.subr.mxu0 0.0
        %2507 = vmatpush1.msra.mxu0 0.0
        %2508 = vmatprep.subr.mxu0 0.0
        %2509 = vmatpush1.msra.mxu0 0.0
        %2510 = vmatprep.subr.mxu0 0.0
        %2511 = vmatpush1.msra.mxu0 0.0
        %2512 = vmatprep.subr.mxu0 0.0
        %2513 = vmatpush1.msra.mxu0 0.0
        %2514 = vmatprep.subr.mxu0 0.0
        %2515 = vmatpush1.msra.mxu0 0.0
        %2516 = vmatprep.subr.mxu0 0.0
        %2517 = vmatpush1.msra.mxu0 0.0
        %2518 = vmatprep.subr.mxu0 0.0
        %2519 = vmatpush1.msra.mxu0 0.0
        %2520 = vmatprep.subr.mxu0 0.0
        %2521 = vmatpush1.msra.mxu0 0.0
        %2522 = vmatprep.subr.mxu0 0.0
        %2523 = vmatpush1.msra.mxu0 0.0
        %2524 = vmatprep.subr.mxu0 0.0
        %2525 = vmatpush1.msra.mxu0 0.0
        %2526 = vmatprep.subr.mxu0 0.0
        %2527 = vmatpush1.msra.mxu0 0.0
        %2528 = vmatprep.subr.mxu0 0.0
        %2529 = vmatpush1.msra.mxu0 0.0
        %2530 = vmatprep.subr.mxu0 0.0
        %2531 = vmatpush1.msra.mxu0 0.0
        %2532 = vmatprep.subr.mxu0 0.0
        %2533 = vmatpush1.msra.mxu0 0.0
        %2534 = vmatprep.subr.mxu0 0.0
        %2535 = vmatpush1.msra.mxu0 0.0
        %2536 = vmatprep.subr.mxu0 0.0
        %2537 = vmatpush1.msra.mxu0 0.0
        %2538 = vmatprep.subr.mxu0 0.0
        %2539 = vmatpush1.msra.mxu0 0.0
        %2540 = vmatprep.subr.mxu0 0.0
        %2541 = vmatpush1.msra.mxu0 0.0
        %2542 = vmatprep.subr.mxu0 0.0
        %2543 = vmatpush1.msra.mxu0 0.0
        %2544 = vmatprep.subr.mxu0 0.0
        %2545 = vmatpush1.msra.mxu0 0.0
        %2546 = vmatprep.subr.mxu0 0.0
        %2547 = vmatpush1.msra.mxu0 0.0
        %2548 = vmatprep.subr.mxu0 0.0
        %2549 = vmatpush1.msra.mxu0 0.0
        %2550 = vmatprep.subr.mxu0 0.0
        %2551 = vmatpush1.msra.mxu0 0.0
        %2552 = vmatprep.subr.mxu0 0.0
        %2553 = vmatpush1.msra.mxu0 0.0
        %2554 = vmatprep.subr.mxu0 0.0
        %2555 = vmatpush1.msra.mxu0 0.0
        %2556 = vmatprep.subr.mxu0 0.0
        %2557 = vmatpush1.msra.mxu0 0.0
        %2558 = vmatprep.subr.mxu0 0.0
        %2559 = vmatpush1.msra.mxu0 0.0
        %2560 = vmatprep.subr.mxu0 0.0
        %2561 = vmatpush1.msra.mxu0 0.0
        %2562 = vmatprep.subr.mxu0 0.0
        %2563 = vmatpush1.msra.mxu0 0.0
        %2564 = vmatprep.mubr.f32.mxu0 0.0
        %2565 = vmatmul.mubr.f32.gmra.mrb[0].mxu0 %v2496
        %v2566 = vpop.f32.mrb[0].mxu0
        %v2567 = vadd.f32 0.0, %v2566
        %v2568 = vpop.f32.mrb[0].mxu0
        %2569 = vdwg.mxu0
        %v2570 = vsel %vm1330, %v2492, 0.0
        %2571 = vadd.xlane.f32.xlu0 %v2570
        %v2572 = vpop.xlane.xlu0 %2571
        %v2573 = vadd.f32 %v2572, 1e-12
        %v2574 = vrcp.pop %v2573
        %v2575 = vmul.f32 %v2567, %v2574
        %v2576 = vpack.c.bf16 %v2575, %v2575
        %2577 = vrot.lane.b32.xlu0 %v2401, 124
        %v2578 = vpop.permute.xlu0 %2577
        %2579 = vrot.lane.b32.xlu0 %v2401, 108
        %v2580 = vpop.permute.xlu0 %2579
        %v2581 = vsel %vm1171, %v2578, 0
        %v2583 = vsel %vm1171, %v2580, 0
        %2585 = vmatprep.subr.mxu0 0.0
        %2586 = vmatpush1.xpose.msra.mxu0 %v2583
        %2587 = vmatprep.subr.mxu0 0.0
        %2588 = vmatpush1.xpose.msra.mxu0 0.0
        %2589 = vmatprep.subr.mxu0 0.0
        %2590 = vmatpush1.xpose.msra.mxu0 0.0
        %2591 = vmatprep.subr.mxu0 0.0
        %2592 = vmatpush1.xpose.msra.mxu0 0.0
        %2593 = vmatprep.subr.mxu0 0.0
        %2594 = vmatpush1.xpose.msra.mxu0 0.0
        %2595 = vmatprep.subr.mxu0 0.0
        %2596 = vmatpush1.xpose.msra.mxu0 0.0
        %2597 = vmatprep.subr.mxu0 0.0
        %2598 = vmatpush1.xpose.msra.mxu0 0.0
        %2599 = vmatprep.subr.mxu0 0.0
        %2600 = vmatpush1.xpose.msra.mxu0 0.0
        %2601 = vmatprep.subr.mxu0 0.0
        %2602 = vmatpush1.xpose.msra.mxu0 0.0
        %2603 = vmatprep.subr.mxu0 0.0
        %2604 = vmatpush1.xpose.msra.mxu0 0.0
        %2605 = vmatprep.subr.mxu0 0.0
        %2606 = vmatpush1.xpose.msra.mxu0 0.0
        %2607 = vmatprep.subr.mxu0 0.0
        %2608 = vmatpush1.xpose.msra.mxu0 0.0
        %2609 = vmatprep.subr.mxu0 0.0
        %2610 = vmatpush1.xpose.msra.mxu0 0.0
        %2611 = vmatprep.subr.mxu0 0.0
        %2612 = vmatpush1.xpose.msra.mxu0 0.0
        %2613 = vmatprep.subr.mxu0 0.0
        %2614 = vmatpush1.xpose.msra.mxu0 0.0
        %2615 = vmatprep.subr.mxu0 0.0
        %2616 = vmatpush1.xpose.msra.mxu0 0.0
        %2617 = vmatprep.subr.mxu0 0.0
        %2618 = vmatpush1.xpose.msra.mxu0 0.0
        %2619 = vmatprep.subr.mxu0 0.0
        %2620 = vmatpush1.xpose.msra.mxu0 0.0
        %2621 = vmatprep.subr.mxu0 0.0
        %2622 = vmatpush1.xpose.msra.mxu0 0.0
        %2623 = vmatprep.subr.mxu0 0.0
        %2624 = vmatpush1.xpose.msra.mxu0 0.0
        %2625 = vmatprep.subr.mxu0 0.0
        %2626 = vmatpush1.xpose.msra.mxu0 0.0
        %2627 = vmatprep.subr.mxu0 0.0
        %2628 = vmatpush1.xpose.msra.mxu0 0.0
        %2629 = vmatprep.subr.mxu0 0.0
        %2630 = vmatpush1.xpose.msra.mxu0 0.0
        %2631 = vmatprep.subr.mxu0 0.0
        %2632 = vmatpush1.xpose.msra.mxu0 0.0
        %2633 = vmatprep.subr.mxu0 0.0
        %2634 = vmatpush1.xpose.msra.mxu0 0.0
        %2635 = vmatprep.subr.mxu0 0.0
        %2636 = vmatpush1.xpose.msra.mxu0 0.0
        %2637 = vmatprep.subr.mxu0 0.0
        %2638 = vmatpush1.xpose.msra.mxu0 0.0
        %2639 = vmatprep.subr.mxu0 0.0
        %2640 = vmatpush1.xpose.msra.mxu0 0.0
        %2641 = vmatprep.subr.mxu0 0.0
        %2642 = vmatpush1.xpose.msra.mxu0 0.0
        %2643 = vmatprep.subr.mxu0 0.0
        %2644 = vmatpush1.xpose.msra.mxu0 0.0
        %2645 = vmatprep.subr.mxu0 0.0
        %2646 = vmatpush1.xpose.msra.mxu0 0.0
        %2647 = vmatprep.subr.mxu0 0.0
        %2648 = vmatpush1.xpose.msra.mxu0 0.0
        %2649 = vmatprep.mubr.f32.mxu0 0.0
        %2650 = vmatmul.mubr.f32.gmra.mrb[0].mxu0 %v2581
        %v2651 = vpop.f32.mrb[0].mxu0
        %v2652 = vadd.f32 0.0, %v2651
        %v2653 = vpop.f32.mrb[0].mxu0
        %2654 = vdwg.mxu0
        %v2655 = vmul.f32 %v2652, 0.5
        %v2656 = vadd.f32 %v2655, 1.0
        %v2657 = vmul.f32 %v2655, 0.5
        %v2658 = vmul.f32 %v2657, %v2655
        %v2659 = vadd.f32 %v2656, %v2658
        %2660 = vrot.lane.b32.xlu0 %v2401, 88
        %v2661 = vpop.permute.xlu0 %2660
        %v2663 = vsel %vm1253, %v2659, 0
        %v2665 = vsel %vm1257, %v2661, 0
        %2667 = vmatprep.subr.mxu0 0.0
        %2668 = vmatpush1.msra.mxu0 %v2665
        %2669 = vmatprep.subr.mxu0 0.0
        %2670 = vmatpush1.msra.mxu0 0.0
        %2671 = vmatprep.subr.mxu0 0.0
        %2672 = vmatpush1.msra.mxu0 0.0
        %2673 = vmatprep.subr.mxu0 0.0
        %2674 = vmatpush1.msra.mxu0 0.0
        %2675 = vmatprep.subr.mxu0 0.0
        %2676 = vmatpush1.msra.mxu0 0.0
        %2677 = vmatprep.subr.mxu0 0.0
        %2678 = vmatpush1.msra.mxu0 0.0
        %2679 = vmatprep.subr.mxu0 0.0
        %2680 = vmatpush1.msra.mxu0 0.0
        %2681 = vmatprep.subr.mxu0 0.0
        %2682 = vmatpush1.msra.mxu0 0.0
        %2683 = vmatprep.subr.mxu0 0.0
        %2684 = vmatpush1.msra.mxu0 0.0
        %2685 = vmatprep.subr.mxu0 0.0
        %2686 = vmatpush1.msra.mxu0 0.0
        %2687 = vmatprep.subr.mxu0 0.0
        %2688 = vmatpush1.msra.mxu0 0.0
        %2689 = vmatprep.subr.mxu0 0.0
        %2690 = vmatpush1.msra.mxu0 0.0
        %2691 = vmatprep.subr.mxu0 0.0
        %2692 = vmatpush1.msra.mxu0 0.0
        %2693 = vmatprep.subr.mxu0 0.0
        %2694 = vmatpush1.msra.mxu0 0.0
        %2695 = vmatprep.subr.mxu0 0.0
        %2696 = vmatpush1.msra.mxu0 0.0
        %2697 = vmatprep.subr.mxu0 0.0
        %2698 = vmatpush1.msra.mxu0 0.0
        %2699 = vmatprep.subr.mxu0 0.0
        %2700 = vmatpush1.msra.mxu0 0.0
        %2701 = vmatprep.subr.mxu0 0.0
        %2702 = vmatpush1.msra.mxu0 0.0
        %2703 = vmatprep.subr.mxu0 0.0
        %2704 = vmatpush1.msra.mxu0 0.0
        %2705 = vmatprep.subr.mxu0 0.0
        %2706 = vmatpush1.msra.mxu0 0.0
        %2707 = vmatprep.subr.mxu0 0.0
        %2708 = vmatpush1.msra.mxu0 0.0
        %2709 = vmatprep.subr.mxu0 0.0
        %2710 = vmatpush1.msra.mxu0 0.0
        %2711 = vmatprep.subr.mxu0 0.0
        %2712 = vmatpush1.msra.mxu0 0.0
        %2713 = vmatprep.subr.mxu0 0.0
        %2714 = vmatpush1.msra.mxu0 0.0
        %2715 = vmatprep.subr.mxu0 0.0
        %2716 = vmatpush1.msra.mxu0 0.0
        %2717 = vmatprep.subr.mxu0 0.0
        %2718 = vmatpush1.msra.mxu0 0.0
        %2719 = vmatprep.subr.mxu0 0.0
        %2720 = vmatpush1.msra.mxu0 0.0
        %2721 = vmatprep.subr.mxu0 0.0
        %2722 = vmatpush1.msra.mxu0 0.0
        %2723 = vmatprep.subr.mxu0 0.0
        %2724 = vmatpush1.msra.mxu0 0.0
        %2725 = vmatprep.subr.mxu0 0.0
        %2726 = vmatpush1.msra.mxu0 0.0
        %2727 = vmatprep.subr.mxu0 0.0
        %2728 = vmatpush1.msra.mxu0 0.0
        %2729 = vmatprep.subr.mxu0 0.0
        %2730 = vmatpush1.msra.mxu0 0.0
        %2731 = vmatprep.mubr.f32.mxu0 0.0
        %2732 = vmatmul.mubr.f32.gmra.mrb[0].mxu0 %v2663
        %v2733 = vpop.f32.mrb[0].mxu0
        %v2734 = vadd.f32 0.0, %v2733
        %v2735 = vpop.f32.mrb[0].mxu0
        %2736 = vdwg.mxu0
        %v2737 = vsel %vm1330, %v2659, 0.0
        %2738 = vadd.xlane.f32.xlu0 %v2737
        %v2739 = vpop.xlane.xlu0 %2738
        %v2740 = vadd.f32 %v2739, 1e-12
        %v2741 = vrcp.pop %v2740
        %v2742 = vmul.f32 %v2734, %v2741
        %v2743 = vpack.c.bf16 %v2742, %v2742
        %v2745 = vsel %vm1505, %v2743, 0
        %v2748 = vsel %vm715, %v2408, 0
        %2750 = vmatprep.subr.bf16.mxu0 0
        %2751 = vmatpush1.bf16.msra.mxu0 %v2748
        %2752 = vmatprep.subr.bf16.mxu0 0
        %2753 = vmatpush1.bf16.msra.mxu0 0
        %2754 = vmatprep.subr.bf16.mxu0 0
        %2755 = vmatpush1.bf16.msra.mxu0 0
        %2756 = vmatprep.subr.bf16.mxu0 0
        %2757 = vmatpush1.bf16.msra.mxu0 0
        %2758 = vmatprep.subr.bf16.mxu0 0
        %2759 = vmatpush1.bf16.msra.mxu0 0
        %2760 = vmatprep.subr.bf16.mxu0 0
        %2761 = vmatpush1.bf16.msra.mxu0 0
        %2762 = vmatprep.subr.bf16.mxu0 0
        %2763 = vmatpush1.bf16.msra.mxu0 0
        %2764 = vmatprep.subr.bf16.mxu0 0
        %2765 = vmatpush1.bf16.msra.mxu0 0
        %2766 = vmatprep.subr.bf16.mxu0 0
        %2767 = vmatpush1.bf16.msra.mxu0 0
        %2768 = vmatprep.subr.bf16.mxu0 0
        %2769 = vmatpush1.bf16.msra.mxu0 0
        %2770 = vmatprep.subr.bf16.mxu0 0
        %2771 = vmatpush1.bf16.msra.mxu0 0
        %2772 = vmatprep.subr.bf16.mxu0 0
        %2773 = vmatpush1.bf16.msra.mxu0 0
        %2774 = vmatprep.subr.bf16.mxu0 0
        %2775 = vmatpush1.bf16.msra.mxu0 0
        %2776 = vmatprep.subr.bf16.mxu0 0
        %2777 = vmatpush1.bf16.msra.mxu0 0
        %2778 = vmatprep.subr.bf16.mxu0 0
        %2779 = vmatpush1.bf16.msra.mxu0 0
        %2780 = vmatprep.subr.bf16.mxu0 0
        %2781 = vmatpush1.bf16.msra.mxu0 0
        %2782 = vmatprep.mubr.bf16.mxu0 0
        %2783 = vmatmul.mubr.bf16.gmra.mrb[0].mxu0 %v2745
        %v2784 = vpop.f32.mrb[0].mxu0
        %v2785 = vadd.f32 0.0, %v2784
        %v2786 = vpop.f32.mrb[0].mxu0
        %v2787 = vpop.f32.mrb[0].mxu0
        %v2788 = vpop.f32.mrb[0].mxu0
        %2789 = vdwg.mxu0
        %v2791 = vsel %vm1505, %v2576, 0
        %v2794 = vsel %vm715, %v2407, 0
        %2796 = vmatprep.subr.bf16.mxu0 0
        %2797 = vmatpush1.bf16.msra.mxu0 %v2794
        %2798 = vmatprep.subr.bf16.mxu0 0
        %2799 = vmatpush1.bf16.msra.mxu0 0
        %2800 = vmatprep.subr.bf16.mxu0 0
        %2801 = vmatpush1.bf16.msra.mxu0 0
        %2802 = vmatprep.subr.bf16.mxu0 0
        %2803 = vmatpush1.bf16.msra.mxu0 0
        %2804 = vmatprep.subr.bf16.mxu0 0
        %2805 = vmatpush1.bf16.msra.mxu0 0
        %2806 = vmatprep.subr.bf16.mxu0 0
        %2807 = vmatpush1.bf16.msra.mxu0 0
        %2808 = vmatprep.subr.bf16.mxu0 0
        %2809 = vmatpush1.bf16.msra.mxu0 0
        %2810 = vmatprep.subr.bf16.mxu0 0
        %2811 = vmatpush1.bf16.msra.mxu0 0
        %2812 = vmatprep.subr.bf16.mxu0 0
        %2813 = vmatpush1.bf16.msra.mxu0 0
        %2814 = vmatprep.subr.bf16.mxu0 0
        %2815 = vmatpush1.bf16.msra.mxu0 0
        %2816 = vmatprep.subr.bf16.mxu0 0
        %2817 = vmatpush1.bf16.msra.mxu0 0
        %2818 = vmatprep.subr.bf16.mxu0 0
        %2819 = vmatpush1.bf16.msra.mxu0 0
        %2820 = vmatprep.subr.bf16.mxu0 0
        %2821 = vmatpush1.bf16.msra.mxu0 0
        %2822 = vmatprep.subr.bf16.mxu0 0
        %2823 = vmatpush1.bf16.msra.mxu0 0
        %2824 = vmatprep.subr.bf16.mxu0 0
        %2825 = vmatpush1.bf16.msra.mxu0 0
        %2826 = vmatprep.subr.bf16.mxu0 0
        %2827 = vmatpush1.bf16.msra.mxu0 0
        %2828 = vmatprep.mubr.bf16.mxu0 0
        %2829 = vmatmul.mubr.bf16.gmra.mrb[0].mxu0 %v2791
        %v2830 = vpop.f32.mrb[0].mxu0
        %v2831 = vadd.f32 %v2785, %v2830
        %v2832 = vpop.f32.mrb[0].mxu0
        %v2833 = vpop.f32.mrb[0].mxu0
        %v2834 = vpop.f32.mrb[0].mxu0
        %2835 = vdwg.mxu0
        %2836 = vrot.lane.b32.xlu0 %v2401, 120
        %v2837 = vpop.permute.xlu0 %2836
        %2838 = vrot.lane.b32.xlu0 %v2401, 104
        %v2839 = vpop.permute.xlu0 %2838
        %v2840 = vsel %vm1171, %v2837, 0
        %v2842 = vsel %vm1171, %v2839, 0
        %2844 = vmatprep.subr.mxu0 0.0
        %2845 = vmatpush1.xpose.msra.mxu0 %v2842
        %2846 = vmatprep.subr.mxu0 0.0
        %2847 = vmatpush1.xpose.msra.mxu0 0.0
        %2848 = vmatprep.subr.mxu0 0.0
        %2849 = vmatpush1.xpose.msra.mxu0 0.0
        %2850 = vmatprep.subr.mxu0 0.0
        %2851 = vmatpush1.xpose.msra.mxu0 0.0
        %2852 = vmatprep.subr.mxu0 0.0
        %2853 = vmatpush1.xpose.msra.mxu0 0.0
        %2854 = vmatprep.subr.mxu0 0.0
        %2855 = vmatpush1.xpose.msra.mxu0 0.0
        %2856 = vmatprep.subr.mxu0 0.0
        %2857 = vmatpush1.xpose.msra.mxu0 0.0
        %2858 = vmatprep.subr.mxu0 0.0
        %2859 = vmatpush1.xpose.msra.mxu0 0.0
        %2860 = vmatprep.subr.mxu0 0.0
        %2861 = vmatpush1.xpose.msra.mxu0 0.0
        %2862 = vmatprep.subr.mxu0 0.0
        %2863 = vmatpush1.xpose.msra.mxu0 0.0
        %2864 = vmatprep.subr.mxu0 0.0
        %2865 = vmatpush1.xpose.msra.mxu0 0.0
        %2866 = vmatprep.subr.mxu0 0.0
        %2867 = vmatpush1.xpose.msra.mxu0 0.0
        %2868 = vmatprep.subr.mxu0 0.0
        %2869 = vmatpush1.xpose.msra.mxu0 0.0
        %2870 = vmatprep.subr.mxu0 0.0
        %2871 = vmatpush1.xpose.msra.mxu0 0.0
        %2872 = vmatprep.subr.mxu0 0.0
        %2873 = vmatpush1.xpose.msra.mxu0 0.0
        %2874 = vmatprep.subr.mxu0 0.0
        %2875 = vmatpush1.xpose.msra.mxu0 0.0
        %2876 = vmatprep.subr.mxu0 0.0
        %2877 = vmatpush1.xpose.msra.mxu0 0.0
        %2878 = vmatprep.subr.mxu0 0.0
        %2879 = vmatpush1.xpose.msra.mxu0 0.0
        %2880 = vmatprep.subr.mxu0 0.0
        %2881 = vmatpush1.xpose.msra.mxu0 0.0
        %2882 = vmatprep.subr.mxu0 0.0
        %2883 = vmatpush1.xpose.msra.mxu0 0.0
        %2884 = vmatprep.subr.mxu0 0.0
        %2885 = vmatpush1.xpose.msra.mxu0 0.0
        %2886 = vmatprep.subr.mxu0 0.0
        %2887 = vmatpush1.xpose.msra.mxu0 0.0
        %2888 = vmatprep.subr.mxu0 0.0
        %2889 = vmatpush1.xpose.msra.mxu0 0.0
        %2890 = vmatprep.subr.mxu0 0.0
        %2891 = vmatpush1.xpose.msra.mxu0 0.0
        %2892 = vmatprep.subr.mxu0 0.0
        %2893 = vmatpush1.xpose.msra.mxu0 0.0
        %2894 = vmatprep.subr.mxu0 0.0
        %2895 = vmatpush1.xpose.msra.mxu0 0.0
        %2896 = vmatprep.subr.mxu0 0.0
        %2897 = vmatpush1.xpose.msra.mxu0 0.0
        %2898 = vmatprep.subr.mxu0 0.0
        %2899 = vmatpush1.xpose.msra.mxu0 0.0
        %2900 = vmatprep.subr.mxu0 0.0
        %2901 = vmatpush1.xpose.msra.mxu0 0.0
        %2902 = vmatprep.subr.mxu0 0.0
        %2903 = vmatpush1.xpose.msra.mxu0 0.0
        %2904 = vmatprep.subr.mxu0 0.0
        %2905 = vmatpush1.xpose.msra.mxu0 0.0
        %2906 = vmatprep.subr.mxu0 0.0
        %2907 = vmatpush1.xpose.msra.mxu0 0.0
        %2908 = vmatprep.mubr.f32.mxu0 0.0
        %2909 = vmatmul.mubr.f32.gmra.mrb[0].mxu0 %v2840
        %v2910 = vpop.f32.mrb[0].mxu0
        %v2911 = vadd.f32 0.0, %v2910
        %v2912 = vpop.f32.mrb[0].mxu0
        %2913 = vdwg.mxu0
        %v2914 = vmul.f32 %v2911, 0.5
        %v2915 = vadd.f32 %v2914, 1.0
        %v2916 = vmul.f32 %v2914, 0.5
        %v2917 = vmul.f32 %v2916, %v2914
        %v2918 = vadd.f32 %v2915, %v2917
        %2919 = vrot.lane.b32.xlu0 %v2401, 80
        %v2920 = vpop.permute.xlu0 %2919
        %v2922 = vsel %vm1253, %v2918, 0
        %v2924 = vsel %vm1257, %v2920, 0
        %2926 = vmatprep.subr.mxu0 0.0
        %2927 = vmatpush1.msra.mxu0 %v2924
        %2928 = vmatprep.subr.mxu0 0.0
        %2929 = vmatpush1.msra.mxu0 0.0
        %2930 = vmatprep.subr.mxu0 0.0
        %2931 = vmatpush1.msra.mxu0 0.0
        %2932 = vmatprep.subr.mxu0 0.0
        %2933 = vmatpush1.msra.mxu0 0.0
        %2934 = vmatprep.subr.mxu0 0.0
        %2935 = vmatpush1.msra.mxu0 0.0
        %2936 = vmatprep.subr.mxu0 0.0
        %2937 = vmatpush1.msra.mxu0 0.0
        %2938 = vmatprep.subr.mxu0 0.0
        %2939 = vmatpush1.msra.mxu0 0.0
        %2940 = vmatprep.subr.mxu0 0.0
        %2941 = vmatpush1.msra.mxu0 0.0
        %2942 = vmatprep.subr.mxu0 0.0
        %2943 = vmatpush1.msra.mxu0 0.0
        %2944 = vmatprep.subr.mxu0 0.0
        %2945 = vmatpush1.msra.mxu0 0.0
        %2946 = vmatprep.subr.mxu0 0.0
        %2947 = vmatpush1.msra.mxu0 0.0
        %2948 = vmatprep.subr.mxu0 0.0
        %2949 = vmatpush1.msra.mxu0 0.0
        %2950 = vmatprep.subr.mxu0 0.0
        %2951 = vmatpush1.msra.mxu0 0.0
        %2952 = vmatprep.subr.mxu0 0.0
        %2953 = vmatpush1.msra.mxu0 0.0
        %2954 = vmatprep.subr.mxu0 0.0
        %2955 = vmatpush1.msra.mxu0 0.0
        %2956 = vmatprep.subr.mxu0 0.0
        %2957 = vmatpush1.msra.mxu0 0.0
        %2958 = vmatprep.subr.mxu0 0.0
        %2959 = vmatpush1.msra.mxu0 0.0
        %2960 = vmatprep.subr.mxu0 0.0
        %2961 = vmatpush1.msra.mxu0 0.0
        %2962 = vmatprep.subr.mxu0 0.0
        %2963 = vmatpush1.msra.mxu0 0.0
        %2964 = vmatprep.subr.mxu0 0.0
        %2965 = vmatpush1.msra.mxu0 0.0
        %2966 = vmatprep.subr.mxu0 0.0
        %2967 = vmatpush1.msra.mxu0 0.0
        %2968 = vmatprep.subr.mxu0 0.0
        %2969 = vmatpush1.msra.mxu0 0.0
        %2970 = vmatprep.subr.mxu0 0.0
        %2971 = vmatpush1.msra.mxu0 0.0
        %2972 = vmatprep.subr.mxu0 0.0
        %2973 = vmatpush1.msra.mxu0 0.0
        %2974 = vmatprep.subr.mxu0 0.0
        %2975 = vmatpush1.msra.mxu0 0.0
        %2976 = vmatprep.subr.mxu0 0.0
        %2977 = vmatpush1.msra.mxu0 0.0
        %2978 = vmatprep.subr.mxu0 0.0
        %2979 = vmatpush1.msra.mxu0 0.0
        %2980 = vmatprep.subr.mxu0 0.0
        %2981 = vmatpush1.msra.mxu0 0.0
        %2982 = vmatprep.subr.mxu0 0.0
        %2983 = vmatpush1.msra.mxu0 0.0
        %2984 = vmatprep.subr.mxu0 0.0
        %2985 = vmatpush1.msra.mxu0 0.0
        %2986 = vmatprep.subr.mxu0 0.0
        %2987 = vmatpush1.msra.mxu0 0.0
        %2988 = vmatprep.subr.mxu0 0.0
        %2989 = vmatpush1.msra.mxu0 0.0
        %2990 = vmatprep.mubr.f32.mxu0 0.0
        %2991 = vmatmul.mubr.f32.gmra.mrb[0].mxu0 %v2922
        %v2992 = vpop.f32.mrb[0].mxu0
        %v2993 = vadd.f32 0.0, %v2992
        %v2994 = vpop.f32.mrb[0].mxu0
        %2995 = vdwg.mxu0
        %v2996 = vsel %vm1330, %v2918, 0.0
        %2997 = vadd.xlane.f32.xlu0 %v2996
        %v2998 = vpop.xlane.xlu0 %2997
        %v2999 = vadd.f32 %v2998, 1e-12
        %v3000 = vrcp.pop %v2999
        %v3001 = vmul.f32 %v2993, %v3000
        %v3002 = vpack.c.bf16 %v3001, %v3001
        %v3004 = vsel %vm1505, %v3002, 0
        %v3007 = vsel %vm715, %v2409, 0
        %3009 = vmatprep.subr.bf16.mxu0 0
        %3010 = vmatpush1.bf16.msra.mxu0 %v3007
        %3011 = vmatprep.subr.bf16.mxu0 0
        %3012 = vmatpush1.bf16.msra.mxu0 0
        %3013 = vmatprep.subr.bf16.mxu0 0
        %3014 = vmatpush1.bf16.msra.mxu0 0
        %3015 = vmatprep.subr.bf16.mxu0 0
        %3016 = vmatpush1.bf16.msra.mxu0 0
        %3017 = vmatprep.subr.bf16.mxu0 0
        %3018 = vmatpush1.bf16.msra.mxu0 0
        %3019 = vmatprep.subr.bf16.mxu0 0
        %3020 = vmatpush1.bf16.msra.mxu0 0
        %3021 = vmatprep.subr.bf16.mxu0 0
        %3022 = vmatpush1.bf16.msra.mxu0 0
        %3023 = vmatprep.subr.bf16.mxu0 0
        %3024 = vmatpush1.bf16.msra.mxu0 0
        %3025 = vmatprep.subr.bf16.mxu0 0
        %3026 = vmatpush1.bf16.msra.mxu0 0
        %3027 = vmatprep.subr.bf16.mxu0 0
        %3028 = vmatpush1.bf16.msra.mxu0 0
        %3029 = vmatprep.subr.bf16.mxu0 0
        %3030 = vmatpush1.bf16.msra.mxu0 0
        %3031 = vmatprep.subr.bf16.mxu0 0
        %3032 = vmatpush1.bf16.msra.mxu0 0
        %3033 = vmatprep.subr.bf16.mxu0 0
        %3034 = vmatpush1.bf16.msra.mxu0 0
        %3035 = vmatprep.subr.bf16.mxu0 0
        %3036 = vmatpush1.bf16.msra.mxu0 0
        %3037 = vmatprep.subr.bf16.mxu0 0
        %3038 = vmatpush1.bf16.msra.mxu0 0
        %3039 = vmatprep.subr.bf16.mxu0 0
        %3040 = vmatpush1.bf16.msra.mxu0 0
        %3041 = vmatprep.mubr.bf16.mxu0 0
        %3042 = vmatmul.mubr.bf16.gmra.mrb[0].mxu0 %v3004
        %v3043 = vpop.f32.mrb[0].mxu0
        %v3044 = vadd.f32 0.0, %v3043
        %v3045 = vpop.f32.mrb[0].mxu0
        %v3046 = vpop.f32.mrb[0].mxu0
        %v3047 = vpop.f32.mrb[0].mxu0
        %3048 = vdwg.mxu0
        %v3049 = vadd.f32 %v2831, %v3044
        %3050 = vrot.lane.b32.xlu0 %v2401, 116
        %v3051 = vpop.permute.xlu0 %3050
        %3052 = vrot.lane.b32.xlu0 %v2401, 100
        %v3053 = vpop.permute.xlu0 %3052
        %v3054 = vsel %vm1171, %v3051, 0
        %v3056 = vsel %vm1171, %v3053, 0
        %3058 = vmatprep.subr.mxu0 0.0
        %3059 = vmatpush1.xpose.msra.mxu0 %v3056
        %3060 = vmatprep.subr.mxu0 0.0
        %3061 = vmatpush1.xpose.msra.mxu0 0.0
        %3062 = vmatprep.subr.mxu0 0.0
        %3063 = vmatpush1.xpose.msra.mxu0 0.0
        %3064 = vmatprep.subr.mxu0 0.0
        %3065 = vmatpush1.xpose.msra.mxu0 0.0
        %3066 = vmatprep.subr.mxu0 0.0
        %3067 = vmatpush1.xpose.msra.mxu0 0.0
        %3068 = vmatprep.subr.mxu0 0.0
        %3069 = vmatpush1.xpose.msra.mxu0 0.0
        %3070 = vmatprep.subr.mxu0 0.0
        %3071 = vmatpush1.xpose.msra.mxu0 0.0
        %3072 = vmatprep.subr.mxu0 0.0
        %3073 = vmatpush1.xpose.msra.mxu0 0.0
        %3074 = vmatprep.subr.mxu0 0.0
        %3075 = vmatpush1.xpose.msra.mxu0 0.0
        %3076 = vmatprep.subr.mxu0 0.0
        %3077 = vmatpush1.xpose.msra.mxu0 0.0
        %3078 = vmatprep.subr.mxu0 0.0
        %3079 = vmatpush1.xpose.msra.mxu0 0.0
        %3080 = vmatprep.subr.mxu0 0.0
        %3081 = vmatpush1.xpose.msra.mxu0 0.0
        %3082 = vmatprep.subr.mxu0 0.0
        %3083 = vmatpush1.xpose.msra.mxu0 0.0
        %3084 = vmatprep.subr.mxu0 0.0
        %3085 = vmatpush1.xpose.msra.mxu0 0.0
        %3086 = vmatprep.subr.mxu0 0.0
        %3087 = vmatpush1.xpose.msra.mxu0 0.0
        %3088 = vmatprep.subr.mxu0 0.0
        %3089 = vmatpush1.xpose.msra.mxu0 0.0
        %3090 = vmatprep.subr.mxu0 0.0
        %3091 = vmatpush1.xpose.msra.mxu0 0.0
        %3092 = vmatprep.subr.mxu0 0.0
        %3093 = vmatpush1.xpose.msra.mxu0 0.0
        %3094 = vmatprep.subr.mxu0 0.0
        %3095 = vmatpush1.xpose.msra.mxu0 0.0
        %3096 = vmatprep.subr.mxu0 0.0
        %3097 = vmatpush1.xpose.msra.mxu0 0.0
        %3098 = vmatprep.subr.mxu0 0.0
        %3099 = vmatpush1.xpose.msra.mxu0 0.0
        %3100 = vmatprep.subr.mxu0 0.0
        %3101 = vmatpush1.xpose.msra.mxu0 0.0
        %3102 = vmatprep.subr.mxu0 0.0
        %3103 = vmatpush1.xpose.msra.mxu0 0.0
        %3104 = vmatprep.subr.mxu0 0.0
        %3105 = vmatpush1.xpose.msra.mxu0 0.0
        %3106 = vmatprep.subr.mxu0 0.0
        %3107 = vmatpush1.xpose.msra.mxu0 0.0
        %3108 = vmatprep.subr.mxu0 0.0
        %3109 = vmatpush1.xpose.msra.mxu0 0.0
        %3110 = vmatprep.subr.mxu0 0.0
        %3111 = vmatpush1.xpose.msra.mxu0 0.0
        %3112 = vmatprep.subr.mxu0 0.0
        %3113 = vmatpush1.xpose.msra.mxu0 0.0
        %3114 = vmatprep.subr.mxu0 0.0
        %3115 = vmatpush1.xpose.msra.mxu0 0.0
        %3116 = vmatprep.subr.mxu0 0.0
        %3117 = vmatpush1.xpose.msra.mxu0 0.0
        %3118 = vmatprep.subr.mxu0 0.0
        %3119 = vmatpush1.xpose.msra.mxu0 0.0
        %3120 = vmatprep.subr.mxu0 0.0
        %3121 = vmatpush1.xpose.msra.mxu0 0.0
        %3122 = vmatprep.mubr.f32.mxu0 0.0
        %3123 = vmatmul.mubr.f32.gmra.mrb[0].mxu0 %v3054
        %v3124 = vpop.f32.mrb[0].mxu0
        %v3125 = vadd.f32 0.0, %v3124
        %v3126 = vpop.f32.mrb[0].mxu0
        %3127 = vdwg.mxu0
        %v3128 = vmul.f32 %v3125, 0.5
        %v3129 = vadd.f32 %v3128, 1.0
        %v3130 = vmul.f32 %v3128, 0.5
        %v3131 = vmul.f32 %v3130, %v3128
        %v3132 = vadd.f32 %v3129, %v3131
        %3133 = vrot.lane.b32.xlu0 %v2401, 72
        %v3134 = vpop.permute.xlu0 %3133
        %v3136 = vsel %vm1253, %v3132, 0
        %v3138 = vsel %vm1257, %v3134, 0
        %3140 = vmatprep.subr.mxu0 0.0
        %3141 = vmatpush1.msra.mxu0 %v3138
        %3142 = vmatprep.subr.mxu0 0.0
        %3143 = vmatpush1.msra.mxu0 0.0
        %3144 = vmatprep.subr.mxu0 0.0
        %3145 = vmatpush1.msra.mxu0 0.0
        %3146 = vmatprep.subr.mxu0 0.0
        %3147 = vmatpush1.msra.mxu0 0.0
        %3148 = vmatprep.subr.mxu0 0.0
        %3149 = vmatpush1.msra.mxu0 0.0
        %3150 = vmatprep.subr.mxu0 0.0
        %3151 = vmatpush1.msra.mxu0 0.0
        %3152 = vmatprep.subr.mxu0 0.0
        %3153 = vmatpush1.msra.mxu0 0.0
        %3154 = vmatprep.subr.mxu0 0.0
        %3155 = vmatpush1.msra.mxu0 0.0
        %3156 = vmatprep.subr.mxu0 0.0
        %3157 = vmatpush1.msra.mxu0 0.0
        %3158 = vmatprep.subr.mxu0 0.0
        %3159 = vmatpush1.msra.mxu0 0.0
        %3160 = vmatprep.subr.mxu0 0.0
        %3161 = vmatpush1.msra.mxu0 0.0
        %3162 = vmatprep.subr.mxu0 0.0
        %3163 = vmatpush1.msra.mxu0 0.0
        %3164 = vmatprep.subr.mxu0 0.0
        %3165 = vmatpush1.msra.mxu0 0.0
        %3166 = vmatprep.subr.mxu0 0.0
        %3167 = vmatpush1.msra.mxu0 0.0
        %3168 = vmatprep.subr.mxu0 0.0
        %3169 = vmatpush1.msra.mxu0 0.0
        %3170 = vmatprep.subr.mxu0 0.0
        %3171 = vmatpush1.msra.mxu0 0.0
        %3172 = vmatprep.subr.mxu0 0.0
        %3173 = vmatpush1.msra.mxu0 0.0
        %3174 = vmatprep.subr.mxu0 0.0
        %3175 = vmatpush1.msra.mxu0 0.0
        %3176 = vmatprep.subr.mxu0 0.0
        %3177 = vmatpush1.msra.mxu0 0.0
        %3178 = vmatprep.subr.mxu0 0.0
        %3179 = vmatpush1.msra.mxu0 0.0
        %3180 = vmatprep.subr.mxu0 0.0
        %3181 = vmatpush1.msra.mxu0 0.0
        %3182 = vmatprep.subr.mxu0 0.0
        %3183 = vmatpush1.msra.mxu0 0.0
        %3184 = vmatprep.subr.mxu0 0.0
        %3185 = vmatpush1.msra.mxu0 0.0
        %3186 = vmatprep.subr.mxu0 0.0
        %3187 = vmatpush1.msra.mxu0 0.0
        %3188 = vmatprep.subr.mxu0 0.0
        %3189 = vmatpush1.msra.mxu0 0.0
        %3190 = vmatprep.subr.mxu0 0.0
        %3191 = vmatpush1.msra.mxu0 0.0
        %3192 = vmatprep.subr.mxu0 0.0
        %3193 = vmatpush1.msra.mxu0 0.0
        %3194 = vmatprep.subr.mxu0 0.0
        %3195 = vmatpush1.msra.mxu0 0.0
        %3196 = vmatprep.subr.mxu0 0.0
        %3197 = vmatpush1.msra.mxu0 0.0
        %3198 = vmatprep.subr.mxu0 0.0
        %3199 = vmatpush1.msra.mxu0 0.0
        %3200 = vmatprep.subr.mxu0 0.0
        %3201 = vmatpush1.msra.mxu0 0.0
        %3202 = vmatprep.subr.mxu0 0.0
        %3203 = vmatpush1.msra.mxu0 0.0
        %3204 = vmatprep.mubr.f32.mxu0 0.0
        %3205 = vmatmul.mubr.f32.gmra.mrb[0].mxu0 %v3136
        %v3206 = vpop.f32.mrb[0].mxu0
        %v3207 = vadd.f32 0.0, %v3206
        %v3208 = vpop.f32.mrb[0].mxu0
        %3209 = vdwg.mxu0
        %v3210 = vsel %vm1330, %v3132, 0.0
        %3211 = vadd.xlane.f32.xlu0 %v3210
        %v3212 = vpop.xlane.xlu0 %3211
        %v3213 = vadd.f32 %v3212, 1e-12
        %v3214 = vrcp.pop %v3213
        %v3215 = vmul.f32 %v3207, %v3214
        %v3216 = vpack.c.bf16 %v3215, %v3215
        %v3218 = vsel %vm1505, %v3216, 0
        %v3221 = vsel %vm715, %v2410, 0
        %3223 = vmatprep.subr.bf16.mxu0 0
        %3224 = vmatpush1.bf16.msra.mxu0 %v3221
        %3225 = vmatprep.subr.bf16.mxu0 0
        %3226 = vmatpush1.bf16.msra.mxu0 0
        %3227 = vmatprep.subr.bf16.mxu0 0
        %3228 = vmatpush1.bf16.msra.mxu0 0
        %3229 = vmatprep.subr.bf16.mxu0 0
        %3230 = vmatpush1.bf16.msra.mxu0 0
        %3231 = vmatprep.subr.bf16.mxu0 0
        %3232 = vmatpush1.bf16.msra.mxu0 0
        %3233 = vmatprep.subr.bf16.mxu0 0
        %3234 = vmatpush1.bf16.msra.mxu0 0
        %3235 = vmatprep.subr.bf16.mxu0 0
        %3236 = vmatpush1.bf16.msra.mxu0 0
        %3237 = vmatprep.subr.bf16.mxu0 0
        %3238 = vmatpush1.bf16.msra.mxu0 0
        %3239 = vmatprep.subr.bf16.mxu0 0
        %3240 = vmatpush1.bf16.msra.mxu0 0
        %3241 = vmatprep.subr.bf16.mxu0 0
        %3242 = vmatpush1.bf16.msra.mxu0 0
        %3243 = vmatprep.subr.bf16.mxu0 0
        %3244 = vmatpush1.bf16.msra.mxu0 0
        %3245 = vmatprep.subr.bf16.mxu0 0
        %3246 = vmatpush1.bf16.msra.mxu0 0
        %3247 = vmatprep.subr.bf16.mxu0 0
        %3248 = vmatpush1.bf16.msra.mxu0 0
        %3249 = vmatprep.subr.bf16.mxu0 0
        %3250 = vmatpush1.bf16.msra.mxu0 0
        %3251 = vmatprep.subr.bf16.mxu0 0
        %3252 = vmatpush1.bf16.msra.mxu0 0
        %3253 = vmatprep.subr.bf16.mxu0 0
        %3254 = vmatpush1.bf16.msra.mxu0 0
        %3255 = vmatprep.mubr.bf16.mxu0 0
        %3256 = vmatmul.mubr.bf16.gmra.mrb[0].mxu0 %v3218
        %v3257 = vpop.f32.mrb[0].mxu0
        %v3258 = vadd.f32 0.0, %v3257
        %v3259 = vpop.f32.mrb[0].mxu0
        %v3260 = vpop.f32.mrb[0].mxu0
        %v3261 = vpop.f32.mrb[0].mxu0
        %3262 = vdwg.mxu0
        %v3263 = vadd.f32 %v3049, %v3258
        %s3264 = scalar_lea.vmem %s15, 16
        %v3265 = vld [vmem:[%s3264] sm:$0xf]
        %v3266 = vld [vmem:[%s3264 + $0x4] sm:$0xf]
        %v3267 = vld [vmem:[%s3264 + $0x8] sm:$0xf]
        %v3268 = vld [vmem:[%s3264 + $0xc] sm:$0xf]
        %v3269 = vpack.c.bf16 %v3263, %v3263
        %s3270 = scalar_lea.vmem %s16, 1
        %v3271 = vld [vmem:[%s3270] sm:$0x1]
        %v3273 = vlaneseq
        %v3274 = vshrl.u32 %v3273, 7
        %v3275 = vsub.s32 0, %v3274
        %v3276 = vrot.slane %v3271, %v3275
        %v3282 = vunpack.c.l.b16 %v3265
        %v3283 = vunpack.c.l.b16 %v3266
        %v3284 = vunpack.c.l.b16 %v3267
        %v3285 = vunpack.c.l.b16 %v3268
        %v3286 = vpack.c.b16 %v3283, %v3282
        %v3287 = vpack.c.b16 %v3285, %v3284
        %v3291 = vsel %vm1058, %v3269, 0
        %3293 = vmatprep.subr.bf16.mxu0 0
        %3294 = vmatpush1.bf16.msra.mxu0 %v3286
        %3295 = vmatprep.subr.bf16.mxu0 0
        %3296 = vmatpush1.bf16.msra.mxu0 %v3287
        %3297 = vmatprep.subr.bf16.mxu0 0
        %3298 = vmatpush1.bf16.msra.mxu0 0
        %3299 = vmatprep.subr.bf16.mxu0 0
        %3300 = vmatpush1.bf16.msra.mxu0 0
        %3301 = vmatprep.subr.bf16.mxu0 0
        %3302 = vmatpush1.bf16.msra.mxu0 0
        %3303 = vmatprep.subr.bf16.mxu0 0
        %3304 = vmatpush1.bf16.msra.mxu0 0
        %3305 = vmatprep.subr.bf16.mxu0 0
        %3306 = vmatpush1.bf16.msra.mxu0 0
        %3307 = vmatprep.subr.bf16.mxu0 0
        %3308 = vmatpush1.bf16.msra.mxu0 0
        %3309 = vmatprep.subr.bf16.mxu0 0
        %3310 = vmatpush1.bf16.msra.mxu0 0
        %3311 = vmatprep.subr.bf16.mxu0 0
        %3312 = vmatpush1.bf16.msra.mxu0 0
        %3313 = vmatprep.subr.bf16.mxu0 0
        %3314 = vmatpush1.bf16.msra.mxu0 0
        %3315 = vmatprep.subr.bf16.mxu0 0
        %3316 = vmatpush1.bf16.msra.mxu0 0
        %3317 = vmatprep.subr.bf16.mxu0 0
        %3318 = vmatpush1.bf16.msra.mxu0 0
        %3319 = vmatprep.subr.bf16.mxu0 0
        %3320 = vmatpush1.bf16.msra.mxu0 0
        %3321 = vmatprep.subr.bf16.mxu0 0
        %3322 = vmatpush1.bf16.msra.mxu0 0
        %3323 = vmatprep.subr.bf16.mxu0 0
        %3324 = vmatpush1.bf16.msra.mxu0 0
        %3325 = vmatprep.mubr.bf16.mxu0 0
        %3326 = vmatmul.mubr.bf16.gmra.mrb[0].mxu0 %v3291
        %v3327 = vpop.f32.mrb[0].mxu0
        %v3328 = vadd.f32 %v3276, %v3327
        %v3329 = vpop.f32.mrb[0].mxu0
        %v3330 = vpop.f32.mrb[0].mxu0
        %v3331 = vpop.f32.mrb[0].mxu0
        %3332 = vdwg.mxu0
        %v3333 = vmul.f32 %v3328, 0.5
        %v3334 = vmul.f32 %v3328, 0.70710677
        %v3335 = vand.u32 2147483647, %v3334
        %v3336 = vmul.f32 %v3335, 0.3275911
        %v3337 = vadd.f32 %v3336, 1.0
        %v3338 = vrcp.pop %v3337
        %v3339 = vmul.f32 1.0, %v3338
        %v3340 = vmul.f32 %v3339, 1.0614054
        %v3341 = vadd.f32 %v3340, -1.4531521
        %v3342 = vmul.f32 %v3341, %v3339
        %v3343 = vadd.f32 %v3342, 1.4214138
        %v3344 = vmul.f32 %v3343, %v3339
        %v3345 = vadd.f32 %v3344, -0.28449672
        %v3346 = vmul.f32 %v3345, %v3339
        %v3347 = vadd.f32 %v3346, 0.2548296
        %v3348 = vmul.f32 %v3347, %v3339
        %v3349 = vmul.f32 %v3335, %v3335
        %v3350 = vsub.f32 0.0, %v3349
        %v3351 = vmul.f32 %v3350, 1.442695
        %v3352 = vpow.pop %v3351
        %v3353 = vmul.f32 %v3348, %v3352
        %v3354 = vsub.f32 1.0, %v3353
        %vm3355 = vcmp.lt.f32.partialorder %v3334, 0.0
        %v3356 = vsub.f32 0.0, %v3354
        %v3357 = vsel %vm3355, %v3356, %v3354
        %v3358 = vadd.f32 %v3357, 1.0
        %v3359 = vmul.f32 %v3333, %v3358
        %s3360 = scalar_lea.vmem %s17, 32
        %v3361 = vld [vmem:[%s3360] sm:$0xf]
        %v3362 = vld [vmem:[%s3360 + $0x4] sm:$0xf]
        %v3363 = vld [vmem:[%s3360 + $0x8] sm:$0xf]
        %v3364 = vld [vmem:[%s3360 + $0xc] sm:$0xf]
        %v3365 = vld [vmem:[%s3360 + $0x10] sm:$0xf]
        %v3366 = vld [vmem:[%s3360 + $0x14] sm:$0xf]
        %v3367 = vld [vmem:[%s3360 + $0x18] sm:$0xf]
        %v3368 = vld [vmem:[%s3360 + $0x1c] sm:$0xf]
        %v3369 = vpack.c.bf16 %v3359, %v3359
        %s3370 = scalar_lea.vmem %s18, 1
        %v3371 = vld [vmem:[%s3370] sm:$0x1]
        %v3373 = vlaneseq
        %v3374 = vshrl.u32 %v3373, 7
        %v3375 = vsub.s32 0, %v3374
        %v3376 = vrot.slane %v3371, %v3375
        %v3386 = vunpack.c.l.b16 %v3361
        %v3387 = vunpack.c.l.b16 %v3362
        %v3388 = vunpack.c.l.b16 %v3363
        %v3389 = vunpack.c.l.b16 %v3364
        %v3390 = vunpack.c.l.b16 %v3365
        %v3391 = vunpack.c.l.b16 %v3366
        %v3392 = vunpack.c.l.b16 %v3367
        %v3393 = vunpack.c.l.b16 %v3368
        %v3394 = vpack.c.b16 %v3387, %v3386
        %v3395 = vpack.c.b16 %v3389, %v3388
        %v3396 = vpack.c.b16 %v3391, %v3390
        %v3397 = vpack.c.b16 %v3393, %v3392
        %v3403 = vsel %vm2160, %v3369, 0
        %3405 = vmatprep.subr.bf16.mxu0 0
        %3406 = vmatpush1.bf16.msra.mxu0 %v3394
        %3407 = vmatprep.subr.bf16.mxu0 0
        %3408 = vmatpush1.bf16.msra.mxu0 %v3395
        %3409 = vmatprep.subr.bf16.mxu0 0
        %3410 = vmatpush1.bf16.msra.mxu0 %v3396
        %3411 = vmatprep.subr.bf16.mxu0 0
        %3412 = vmatpush1.bf16.msra.mxu0 %v3397
        %3413 = vmatprep.subr.bf16.mxu0 0
        %3414 = vmatpush1.bf16.msra.mxu0 0
        %3415 = vmatprep.subr.bf16.mxu0 0
        %3416 = vmatpush1.bf16.msra.mxu0 0
        %3417 = vmatprep.subr.bf16.mxu0 0
        %3418 = vmatpush1.bf16.msra.mxu0 0
        %3419 = vmatprep.subr.bf16.mxu0 0
        %3420 = vmatpush1.bf16.msra.mxu0 0
        %3421 = vmatprep.subr.bf16.mxu0 0
        %3422 = vmatpush1.bf16.msra.mxu0 0
        %3423 = vmatprep.subr.bf16.mxu0 0
        %3424 = vmatpush1.bf16.msra.mxu0 0
        %3425 = vmatprep.subr.bf16.mxu0 0
        %3426 = vmatpush1.bf16.msra.mxu0 0
        %3427 = vmatprep.subr.bf16.mxu0 0
        %3428 = vmatpush1.bf16.msra.mxu0 0
        %3429 = vmatprep.subr.bf16.mxu0 0
        %3430 = vmatpush1.bf16.msra.mxu0 0
        %3431 = vmatprep.subr.bf16.mxu0 0
        %3432 = vmatpush1.bf16.msra.mxu0 0
        %3433 = vmatprep.subr.bf16.mxu0 0
        %3434 = vmatpush1.bf16.msra.mxu0 0
        %3435 = vmatprep.subr.bf16.mxu0 0
        %3436 = vmatpush1.bf16.msra.mxu0 0
        %3437 = vmatprep.mubr.bf16.mxu0 0
        %3438 = vmatmul.mubr.bf16.gmra.mrb[0].mxu0 %v3403
        %v3439 = vpop.f32.mrb[0].mxu0
        %v3440 = vadd.f32 %v3376, %v3439
        %v3441 = vpop.f32.mrb[0].mxu0
        %v3442 = vpop.f32.mrb[0].mxu0
        %v3443 = vpop.f32.mrb[0].mxu0
        %3444 = vdwg.mxu0
        %v3445 = vadd.f32 %v2204, %v3440
        %v3446 = vld [vmem:[%s19] sm:$0x1]
        %v3447 = vld [vmem:[%s20] sm:$0x1]
        %vm3448 = vcmask 258052
        %v3449 = vsel %vm3448, %v3445, 0.0
        %3450 = vadd.xlane.f32.xlu0 %v3449
        %v3451 = vpop.xlane.xlu0 %3450
        %v3452 = vmul.f32 %v3451, %v972
        %v3453 = vsub.f32 %v3445, %v3452
        %v3454 = vmul.f32 %v3453, %v3453
        %v3455 = vsel %vm3448, %v3454, 0.0
        %3456 = vadd.xlane.f32.xlu0 %v3455
        %v3457 = vpop.xlane.xlu0 %3456
        %v3458 = vmul.f32 %v3457, %v972
        %v3459 = vadd.f32 %v3458, 1e-05
        %v3460 = vrsqrt.pop %v3459
        %v3461 = vmul.f32 %v3453, %v3460
        %v3463 = vlaneseq
        %v3464 = vshrl.u32 %v3463, 7
        %v3465 = vsub.s32 0, %v3464
        %v3466 = vrot.slane %v3446, %v3465
        %v3468 = vmul.f32 %v3461, %v3466
        %v3470 = vlaneseq
        %v3471 = vshrl.u32 %v3470, 7
        %v3472 = vsub.s32 0, %v3471
        %v3473 = vrot.slane %v3447, %v3472
        %v3475 = vadd.f32 %v3468, %v3473
        %v3476 = vld [vmem:[%s21] sm:$0xf]
        %v3477 = vld [vmem:[%s21 + $0x4] sm:$0xf]
        %v3478 = vld [vmem:[%s21 + $0x8] sm:$0xf]
        %v3479 = vld [vmem:[%s21 + $0xc] sm:$0xf]
        %v3480 = vpack.c.bf16 %v3475, %v3475
        %v3481 = vld [vmem:[%s22] sm:$0x1]
        %v3483 = vrot.slane %v3480, 2
        %v3488 = vunpack.c.l.b16 %v3476
        %v3489 = vunpack.c.l.b16 %v3477
        %v3490 = vunpack.c.l.b16 %v3478
        %v3491 = vunpack.c.l.b16 %v3479
        %v3492 = vpack.c.b16 %v3489, %v3488
        %v3493 = vpack.c.b16 %v3491, %v3490
        %v3497 = vsel %vm1058, %v3483, 0
        %3499 = vmatprep.subr.bf16.mxu0 0
        %3500 = vmatpush1.bf16.msra.mxu0 %v3492
        %3501 = vmatprep.subr.bf16.mxu0 0
        %3502 = vmatpush1.bf16.msra.mxu0 %v3493
        %3503 = vmatprep.subr.bf16.mxu0 0
        %3504 = vmatpush1.bf16.msra.mxu0 0
        %3505 = vmatprep.subr.bf16.mxu0 0
        %3506 = vmatpush1.bf16.msra.mxu0 0
        %3507 = vmatprep.subr.bf16.mxu0 0
        %3508 = vmatpush1.bf16.msra.mxu0 0
        %3509 = vmatprep.subr.bf16.mxu0 0
        %3510 = vmatpush1.bf16.msra.mxu0 0
        %3511 = vmatprep.subr.bf16.mxu0 0
        %3512 = vmatpush1.bf16.msra.mxu0 0
        %3513 = vmatprep.subr.bf16.mxu0 0
        %3514 = vmatpush1.bf16.msra.mxu0 0
        %3515 = vmatprep.subr.bf16.mxu0 0
        %3516 = vmatpush1.bf16.msra.mxu0 0
        %3517 = vmatprep.subr.bf16.mxu0 0
        %3518 = vmatpush1.bf16.msra.mxu0 0
        %3519 = vmatprep.subr.bf16.mxu0 0
        %3520 = vmatpush1.bf16.msra.mxu0 0
        %3521 = vmatprep.subr.bf16.mxu0 0
        %3522 = vmatpush1.bf16.msra.mxu0 0
        %3523 = vmatprep.subr.bf16.mxu0 0
        %3524 = vmatpush1.bf16.msra.mxu0 0
        %3525 = vmatprep.subr.bf16.mxu0 0
        %3526 = vmatpush1.bf16.msra.mxu0 0
        %3527 = vmatprep.subr.bf16.mxu0 0
        %3528 = vmatpush1.bf16.msra.mxu0 0
        %3529 = vmatprep.subr.bf16.mxu0 0
        %3530 = vmatpush1.bf16.msra.mxu0 0
        %3531 = vmatprep.mubr.bf16.mxu0 0
        %3532 = vmatmul.mubr.bf16.gmra.mrb[0].mxu0 %v3497
        %v3533 = vpop.f32.mrb[0].mxu0
        %v3534 = vadd.f32 %v3481, %v3533
        %v3535 = vpop.f32.mrb[0].mxu0
        %v3536 = vpop.f32.mrb[0].mxu0
        %v3537 = vpop.f32.mrb[0].mxu0
        %3538 = vdwg.mxu0
        %vm3539 = vcmask 73728
        %3540 = vst.msk [vmem:[%s702] sm:$0x1] %vm3539, %v3534
        %s3541 = sand.u32 %s533, 1
        %s3542 = scalar_lea.sflag [#allocation3], %s3541
        %s3543 = sand.u32 %s533, 1
        %s3544 = scalar_lea.vmem [#allocation2], %s3543
        // Predicated region
        $region113: #{vibased_forward.1} parent=111 // pred_check
          %p3545 = pneg %p543
        $region114: #{vibased_forward.1} parent=111 // pred_check_branch
          %3547 = sbr.rel (%p3545) target = $region116
        $region115: #{vibased_forward.1} parent=111 // pred_region
          %s3549 = ssub.s32 16, 16
          %3550 = vsyncadd %s3542, %s3549
          %s3551 = smul.addr %s37, 16
          %s3552 = scalar_lea.hbm %s23, %s3551
          %s3554 = sshll.u32 %s3544, 4
          %s3555 = int_to_ptr.vmem [resolvable:$true] %s3554
          %3557 = dma.vmem_to_hbm [thread:$0]  %s3555, 16, %s3552, %s3542
        $region116: #{vibased_forward.1} parent=111 // pred_fallthru
          _
      $region112: #{vibased_forward.1} parent=5 // pred_fallthru
        _
      %p3558 = scmp.le.s32.totalorder 2, %s32
      // Predicated region
      $region117: #{vibased_forward.1} parent=5 // pred_check
        %p3559 = pneg %p3558
      $region118: #{vibased_forward.1} parent=5 // pred_check_branch
        %3561 = sbr.rel (%p3559) target = $region120
      $region119: #{vibased_forward.1} parent=5 // pred_region
        %s3562 = ssub.s32 %s32, 2
        // Predicated region
        $region121: #{vibased_forward.1} parent=119 // pred_check
          %p3563 = pneg %p549
        $region122: #{vibased_forward.1} parent=119 // pred_check_branch
          %3565 = sbr.rel (%p3563) target = $region124
        $region123: #{vibased_forward.1} parent=119 // pred_region
          %s3566 = sand.u32 %s534, 1
          %s3567 = scalar_lea.sflag [#allocation3], %s3566
          %s3568 = sand.u32 %s534, 1
          %s3569 = scalar_lea.vmem [#allocation2], %s3568
          %3570 = dma.done %s3567, 16
        $region124: #{vibased_forward.1} parent=119 // pred_fallthru
          _
      $region120: #{vibased_forward.1} parent=5 // pred_fallthru
        _
    $region6: #{vibased_forward.1} parent=1 // loop_footer
      %s36 = sadd.s32 1, %s32
    $region7: #{vibased_forward.1} parent=1 // loop_footer_branch
      %31 = sbr.rel target = $region3
    $region8: #{vibased_forward.1} parent=1 // loop_exit
      _
    %3571 = vsyncpa [#allocation3], 1
    %s3572 = scalar_lea.sflag [#allocation3], 1
    %3573 = vsyncpa %s3572, 1

</llo_original>
